<compile_context>
chip_gen: v7x
topology: tpu7x:2x2x1
jax: 0.10.0
libtpu: 0.0.40
codegen_flags: <defaults>
</compile_context>

<pallas_src>
import functools

import jax
import jax.numpy as jnp
import numpy as np
from jax import lax
from jax.experimental import pallas as pl
from jax.experimental.pallas import tpu as pltpu


def _full_spec(a):
    """Full-array BlockSpec for a grid=(1,) pallas_call."""
    nd = a.ndim
    return pl.BlockSpec(a.shape, lambda *_: (0,) * nd)


def _tap_weights(w):
    # PyTorch conv weight (Co, Cin, K, 1) -> per-tap matrices (K, Cin, Co)
    return jnp.transpose(w[:, :, :, 0], (2, 1, 0))


def _pack_taps(w):
    # (Co, Cin, K, 1) -> (K*Cin, Co); row blocks [W_0; W_1; ...] match the
    # im2col lane-concat order [shift0 | shift1 | ...].
    Co, Cin, K, _ = w.shape
    return _tap_weights(w).reshape(K * Cin, Co)


# ----------------------------------------------------------------------------
# Fused bidirectional LSTM layer: single kernel, whole sequence in VMEM.
# x layout: (T*B, Din), rows ordered time-major (row = t*B + b).
# ----------------------------------------------------------------------------
def _bilstm_layer_kernel(x_ref, wif_ref, whf_ref, bf_ref,
                         wib_ref, whb_ref, bb_ref, out_ref,
                         gf_sc, gb_sc, hf_sc, hb_sc, *, T, B, H):
    # Hoisted input projections: one big matmul per direction instead of T
    # tiny per-step matmuls.  Gates are stored in VMEM scratch.
    x2 = x_ref[...]                                              # (T*B, Din)
    gf_sc[...] = (jnp.dot(x2, wif_ref[...],
                          preferred_element_type=jnp.float32) + bf_ref[...])
    gb_sc[...] = (jnp.dot(x2, wib_ref[...],
                          preferred_element_type=jnp.float32) + bb_ref[...])

    whf = whf_ref[...]                                           # (H, 4H)
    whb = whb_ref[...]

    def cell(gates, c_prev):
        i = jax.nn.sigmoid(gates[:, 0 * H:1 * H])
        f = jax.nn.sigmoid(gates[:, 1 * H:2 * H])
        g = jnp.tanh(gates[:, 2 * H:3 * H])
        o = jax.nn.sigmoid(gates[:, 3 * H:4 * H])
        c = f * c_prev + i * g
        h = o * jnp.tanh(c)
        return h, c

    def step(s, carry):
        h_f, c_f, h_b, c_b = carry
        # Forward direction: time index s.
        rf = s * B
        gates_f = gf_sc[pl.ds(rf, B), :] + jnp.dot(
            h_f, whf, preferred_element_type=jnp.float32)
        h_f, c_f = cell(gates_f, c_f)
        hf_sc[pl.ds(rf, B), :] = h_f
        # Backward direction: time index T-1-s (reversed in-kernel, no flips).
        rb = (T - 1 - s) * B
        gates_b = gb_sc[pl.ds(rb, B), :] + jnp.dot(
            h_b, whb, preferred_element_type=jnp.float32)
        h_b, c_b = cell(gates_b, c_b)
        hb_sc[pl.ds(rb, B), :] = h_b
        return h_f, c_f, h_b, c_b

    zero = jnp.zeros((B, H), jnp.float32)
    lax.fori_loop(0, T, step, (zero, zero, zero, zero), unroll=True)

    # Single lane-concat + single HBM writeback for the whole sequence.
    out_ref[...] = jnp.concatenate([hf_sc[...], hb_sc[...]], axis=-1)


def bilstm_layer(x2, layer_params, T, B):
    """x2: (T*B, Din) time-major-flat -> (T*B, 2H). Gate order i,f,g,o."""
    (wif, whf, bif, bhf), (wib, whb, bib, bhb) = layer_params
    H = whf.shape[1]
    inputs = [x2,
              wif.T, whf.T, (bif + bhf).reshape(1, 4 * H),
              wib.T, whb.T, (bib + bhb).reshape(1, 4 * H)]
    kernel = functools.partial(_bilstm_layer_kernel, T=T, B=B, H=H)
    return pl.pallas_call(
        kernel,
        out_shape=jax.ShapeDtypeStruct((T * B, 2 * H), jnp.float32),
        grid=(1,),
        in_specs=[_full_spec(a) for a in inputs],
        out_specs=pl.BlockSpec((T * B, 2 * H), lambda *_: (0, 0)),
        scratch_shapes=[
            pltpu.VMEM((T * B, 4 * H), jnp.float32),   # fwd gates (whole seq)
            pltpu.VMEM((T * B, 4 * H), jnp.float32),   # bwd gates (whole seq)
            pltpu.VMEM((T * B, H), jnp.float32),       # fwd hidden states
            pltpu.VMEM((T * B, H), jnp.float32),       # bwd hidden states
        ],
        compiler_params=pltpu.CompilerParams(
            dimension_semantics=("arbitrary",)),
    )(*inputs)


# ----------------------------------------------------------------------------
# Fused post-LSTM path: conv1_D + all inception branches + max-pool + fc1
# in ONE kernel.  Input rows are time-major (row = t*B + b), so every (K,1)
# time conv is a lane-concat of K contiguous row blocks followed by one matmul.
# ----------------------------------------------------------------------------
def _cnn_pool_fc_kernel(x_ref, w1_ref, b1_ref, *refs, Ks, Co, T, B):
    nb = len(Ks)
    branch_refs = refs[:2 * nb]
    (w3_ref, b3_ref, w4_ref, b4_ref, fcw_ref, fcb_ref,
     logits_ref, pool_ref) = refs[2 * nb:]

    # conv1_D: per-(t, b) projection onto Co channels (no activation here,
    # matching the reference module).
    y = (jnp.dot(x_ref[...], w1_ref[...],
                 preferred_element_type=jnp.float32) + b1_ref[...])  # (T*B, Co)

    def conv_relu(z, n_time, w_ref, b_ref, K):
        # Valid (K,1) conv over time as ONE im2col matmul.
        L = n_time - K + 1
        cat = jnp.concatenate([z[k * B:(k + L) * B, :] for k in range(K)],
                              axis=-1)                               # (L*B, K*Co)
        out = (jnp.dot(cat, w_ref[...],
                       preferred_element_type=jnp.float32) + b_ref[...])
        return jnp.maximum(out, 0.0), L                              # (L*B, Co)

    pooled = []
    for bi, K in enumerate(Ks):
        wk_ref = branch_refs[2 * bi]
        bk_ref = branch_refs[2 * bi + 1]
        a, L1 = conv_relu(y, T, wk_ref, bk_ref, K)         # relu(convK_1)
        x3, L2 = conv_relu(a, L1, w3_ref, b3_ref, 3)       # relu(conv3)
        zpad = jnp.zeros((B, Co), jnp.float32)
        x3p = jnp.concatenate([zpad, x3, zpad], axis=0)    # time pad (1,1)
        x4, _ = conv_relu(x3p, L2 + 2, w4_ref, b4_ref, 3)  # relu(conv4)
        inc = x3 + x4                                       # (L2*B, Co)
        # Max-pool over the full time extent (rows are t-major).
        m = inc[0:B, :]
        for t in range(1, L2):
            m = jnp.maximum(m, inc[t * B:(t + 1) * B, :])
        pooled.append(m)                                    # (B, Co)

    pool = jnp.concatenate(pooled, axis=-1)                 # (B, nb*Co)
    pool_ref[...] = pool
    # CNN_dropout: identity at inference.
    logits_ref[...] = (jnp.dot(pool, fcw_ref[...],
                               preferred_element_type=jnp.float32)
                       + fcb_ref[...])


def cnn_pool_fc(x2, p, T, B):
    Co = p["conv1_D_w"].shape[0]
    C = p["fc1_w"].shape[0]
    Ks = tuple(int(K) for (K, _, _) in p["convK"])
    F = x2.shape[1]

    inputs = [x2,
              p["conv1_D_w"].reshape(Co, F).T, p["conv1_D_b"].reshape(1, Co)]
    for (_, wk, bk) in p["convK"]:
        inputs += [_pack_taps(wk), bk.reshape(1, Co)]
    inputs += [_pack_taps(p["conv3_w"]), p["conv3_b"].reshape(1, Co),
               _pack_taps(p["conv4_w"]), p["conv4_b"].reshape(1, Co),
               p["fc1_w"].T, p["fc1_b"].reshape(1, C)]

    kernel = functools.partial(_cnn_pool_fc_kernel, Ks=Ks, Co=Co, T=T, B=B)
    logits, pooled = pl.pallas_call(
        kernel,
        out_shape=(jax.ShapeDtypeStruct((B, C), jnp.float32),
                   jax.ShapeDtypeStruct((B, len(Ks) * Co), jnp.float32)),
        grid=(1,),
        in_specs=[_full_spec(a) for a in inputs],
        out_specs=(pl.BlockSpec((B, C), lambda *_: (0, 0)),
                   pl.BlockSpec((B, len(Ks) * Co), lambda *_: (0, 0))),
        compiler_params=pltpu.CompilerParams(
            dimension_semantics=("arbitrary",)),
    )(*inputs)
    return logits, pooled


# ----------------------------------------------------------------------------
# Full TC_base forward
# ----------------------------------------------------------------------------
def tc_base_forward(features, p):
    B, T, _ = features.shape
    # Single tiny layout change up front; thereafter everything stays in a
    # time-major flattened (T*B, channels) layout between kernels, so no
    # per-layer transposes, flips, or reshapes are needed.
    x2 = jnp.transpose(features, (1, 0, 2)).reshape(T * B, features.shape[2])
    for layer_params in p["lstm"]:
        x2 = bilstm_layer(x2, layer_params, T, B)        # (T*B, 2H)
    logits, pooled = cnn_pool_fc(x2, p, T, B)
    return logits, pooled


# ----------------------------------------------------------------------------
# Pure-JAX reference (same math, no Pallas) for a correctness check
# ----------------------------------------------------------------------------
def _ref_lstm_dir(x_btd, wi, wh, bi, bh):
    B = x_btd.shape[0]
    H = wh.shape[1]

    def step(carry, xt):
        h, c = carry
        g = xt @ wi.T + h @ wh.T + bi + bh
        i = jax.nn.sigmoid(g[:, :H])
        f = jax.nn.sigmoid(g[:, H:2 * H])
        gg = jnp.tanh(g[:, 2 * H:3 * H])
        o = jax.nn.sigmoid(g[:, 3 * H:])
        c = f * c + i * gg
        h = o * jnp.tanh(c)
        return (h, c), h

    init = (jnp.zeros((B, H), jnp.float32), jnp.zeros((B, H), jnp.float32))
    _, hs = jax.lax.scan(step, init, jnp.transpose(x_btd, (1, 0, 2)))
    return jnp.transpose(hs, (1, 0, 2))


def _ref_conv1d(z, w, b):
    # z: (B, L, Cin); w: (Co, Cin, K, 1); valid conv over time
    K = w.shape[2]
    L_out = z.shape[1] - K + 1
    wt = _tap_weights(w)
    acc = jnp.zeros((z.shape[0], L_out, w.shape[0]), jnp.float32) + b
    for k in range(K):
        acc = acc + jnp.einsum("blc,cd->bld", z[:, k:k + L_out, :], wt[k])
    return acc


def ref_forward(features, p):
    x = features
    for (wif, whf, bif, bhf), (wib, whb, bib, bhb) in p["lstm"]:
        hf = _ref_lstm_dir(x, wif, whf, bif, bhf)
        hb = jnp.flip(_ref_lstm_dir(jnp.flip(x, axis=1), wib, whb, bib, bhb),
                      axis=1)
        x = jnp.concatenate([hf, hb], axis=-1)
    lstm_out = x
    Co = p["conv1_D_w"].shape[0]
    F = p["conv1_D_w"].shape[-1]
    y = jnp.einsum("btf,cf->btc", lstm_out,
                   p["conv1_D_w"].reshape(Co, F)) + p["conv1_D_b"]
    pooled = []
    for (K, wk, bk) in p["convK"]:
        a = jax.nn.relu(_ref_conv1d(y, wk, bk))
        x3 = jax.nn.relu(_ref_conv1d(a, p["conv3_w"], p["conv3_b"]))
        x3p = jnp.pad(x3, ((0, 0), (1, 1), (0, 0)))
        x4 = jax.nn.relu(_ref_conv1d(x3p, p["conv4_w"], p["conv4_b"]))
        pooled.append(jnp.max(x3 + x4, axis=1))
    xcat = jnp.concatenate(pooled, axis=1)
    logits = xcat @ p["fc1_w"].T + p["fc1_b"]
    return logits, xcat


# ----------------------------------------------------------------------------
# Deterministic parameter init (shapes follow TC_base.__init__)
# ----------------------------------------------------------------------------
def init_params(key, D, C, N, H, Co, Ks):
    keys = iter(jax.random.split(key, 64))

    def u(shape, scale):
        return jax.random.uniform(next(keys), shape, jnp.float32,
                                  -scale, scale)

    k_h = 1.0 / float(np.sqrt(H))
    lstm = []
    d_in = D
    for _ in range(N):
        dirs = []
        for _ in range(2):  # forward, backward
            dirs.append((u((4 * H, d_in), k_h), u((4 * H, H), k_h),
                         u((4 * H,), k_h), u((4 * H,), k_h)))
        lstm.append(tuple(dirs))
        d_in = 2 * H

    p = {"lstm": lstm}
    p["conv1_D_w"] = u((Co, 1, 1, 2 * H), 0.1)
    p["conv1_D_b"] = u((Co,), 0.1)
    p["convK"] = [(K, u((Co, Co, K, 1), 0.2), u((Co,), 0.2)) for K in Ks]
    p["conv3_w"] = u((Co, Co, 3, 1), 0.2)
    p["conv3_b"] = u((Co,), 0.2)
    p["conv4_w"] = u((Co, Co, 3, 1), 0.2)
    p["conv4_b"] = u((Co,), 0.2)
    p["fc1_w"] = u((C, len(Ks) * Co), 0.3)
    p["fc1_b"] = u((C,), 0.3)
    return p


if __name__ == "__main__":
    # Hyperparameters (small, consistent with the module's __init__)
    B, T = 2, 16
    D = 16           # in_features
    C = 4            # class_num
    N = 1            # num_layers
    H = 32           # hidden_size
    Ci = 1
    Co = 8           # kernel_num
    Ks = (2, 3)      # kernel_sizes

    key = jax.random.PRNGKey(0)
    kp, kx = jax.random.split(key)
    params = init_params(kp, D, C, N, H, Co, Ks)
    features = jax.random.normal(kx, (B, T, D), jnp.float32)

    logits, pooled = tc_base_forward(features, params)
    jax.block_until_ready((logits, pooled))

    ref_logits, ref_pooled = ref_forward(features, params)
    jax.block_until_ready((ref_logits, ref_pooled))

    assert logits.shape == (B, C)
    assert pooled.shape == (B, len(Ks) * Co)
    np.testing.assert_allclose(np.asarray(pooled), np.asarray(ref_pooled),
                               rtol=2e-2, atol=2e-2)
    np.testing.assert_allclose(np.asarray(logits), np.asarray(ref_logits),
                               rtol=2e-2, atol=2e-2)
    print("KERNEL_OK")
</pallas_src>

<mosaic_0001>
module attributes {stable_mosaic.version = 11 : i64} {
  func.func @_bilstm_layer_kernel(%arg0: i32, %arg1: memref<32x16xf32, #tpu.memory_space<vmem>>, %arg2: memref<16x128xf32, #tpu.memory_space<vmem>>, %arg3: memref<32x128xf32, #tpu.memory_space<vmem>>, %arg4: memref<1x128xf32, #tpu.memory_space<vmem>>, %arg5: memref<16x128xf32, #tpu.memory_space<vmem>>, %arg6: memref<32x128xf32, #tpu.memory_space<vmem>>, %arg7: memref<1x128xf32, #tpu.memory_space<vmem>>, %arg8: memref<32x64xf32, #tpu.memory_space<vmem>>, %arg9: memref<32x128xf32, #tpu.memory_space<vmem>>, %arg10: memref<32x128xf32, #tpu.memory_space<vmem>>, %arg11: memref<32x32xf32, #tpu.memory_space<vmem>>, %arg12: memref<32x32xf32, #tpu.memory_space<vmem>>) attributes {dimension_semantics = [#tpu.dimension_semantics<arbitrary>], iteration_bounds = array<i64: 1>, scalar_prefetch = 0 : i64, scratch_operands = 4 : i64, tpu.core_type = #tpu.core_type<tc>, window_params = [{pipeline_mode = #tpu.pipeline_mode<synchronous>, transform_indices = @transform_0, window_bounds = array<i64: 32, 16>}, {pipeline_mode = #tpu.pipeline_mode<synchronous>, transform_indices = @transform_1, window_bounds = array<i64: 16, 128>}, {pipeline_mode = #tpu.pipeline_mode<synchronous>, transform_indices = @transform_2, window_bounds = array<i64: 32, 128>}, {pipeline_mode = #tpu.pipeline_mode<synchronous>, transform_indices = @transform_3, window_bounds = array<i64: 1, 128>}, {pipeline_mode = #tpu.pipeline_mode<synchronous>, transform_indices = @transform_4, window_bounds = array<i64: 16, 128>}, {pipeline_mode = #tpu.pipeline_mode<synchronous>, transform_indices = @transform_5, window_bounds = array<i64: 32, 128>}, {pipeline_mode = #tpu.pipeline_mode<synchronous>, transform_indices = @transform_6, window_bounds = array<i64: 1, 128>}, {pipeline_mode = #tpu.pipeline_mode<synchronous>, transform_indices = @transform_7, window_bounds = array<i64: 32, 64>}]} {
    %c0 = arith.constant 0 : index
    %c0_0 = arith.constant 0 : index
    %0 = vector.load %arg1[%c0, %c0_0] : memref<32x16xf32, #tpu.memory_space<vmem>>, vector<32x16xf32>
    %c0_1 = arith.constant 0 : index
    %c0_2 = arith.constant 0 : index
    %1 = vector.load %arg2[%c0_1, %c0_2] : memref<16x128xf32, #tpu.memory_space<vmem>>, vector<16x128xf32>
    %cst = arith.constant dense<0.000000e+00> : vector<32x128xf32>
    %2 = tpu.matmul %0, %1, %cst {dimension_numbers = #tpu.dot_dimension_numbers<[1], [0], [0], [1], [0, 0, 1, 1], [], []>} : vector<32x16xf32>, vector<16x128xf32>, vector<32x128xf32> -> vector<32x128xf32>
    %c0_3 = arith.constant 0 : index
    %c0_4 = arith.constant 0 : index
    %3 = vector.load %arg4[%c0_3, %c0_4] : memref<1x128xf32, #tpu.memory_space<vmem>>, vector<1x128xf32>
    %4 = vector.broadcast %3 : vector<1x128xf32> to vector<32x128xf32>
    %5 = arith.addf %2, %4 : vector<32x128xf32>
    %c0_5 = arith.constant 0 : index
    %c0_6 = arith.constant 0 : index
    %6 = vector.load %arg9[%c0_5, %c0_6] : memref<32x128xf32, #tpu.memory_space<vmem>>, vector<32x128xf32>
    tpu.vector_store %arg9[%c0_5, %c0_6], %5 {strides = array<i32>} : memref<32x128xf32, #tpu.memory_space<vmem>>, vector<32x128xf32>,
    %c0_7 = arith.constant 0 : index
    %c0_8 = arith.constant 0 : index
    %7 = vector.load %arg5[%c0_7, %c0_8] : memref<16x128xf32, #tpu.memory_space<vmem>>, vector<16x128xf32>
    %cst_9 = arith.constant dense<0.000000e+00> : vector<32x128xf32>
    %8 = tpu.matmul %0, %7, %cst_9 {dimension_numbers = #tpu.dot_dimension_numbers<[1], [0], [0], [1], [0, 0, 1, 1], [], []>} : vector<32x16xf32>, vector<16x128xf32>, vector<32x128xf32> -> vector<32x128xf32>
    %c0_10 = arith.constant 0 : index
    %c0_11 = arith.constant 0 : index
    %9 = vector.load %arg7[%c0_10, %c0_11] : memref<1x128xf32, #tpu.memory_space<vmem>>, vector<1x128xf32>
    %10 = vector.broadcast %9 : vector<1x128xf32> to vector<32x128xf32>
    %11 = arith.addf %8, %10 : vector<32x128xf32>
    %c0_12 = arith.constant 0 : index
    %c0_13 = arith.constant 0 : index
    %12 = vector.load %arg10[%c0_12, %c0_13] : memref<32x128xf32, #tpu.memory_space<vmem>>, vector<32x128xf32>
    tpu.vector_store %arg10[%c0_12, %c0_13], %11 {strides = array<i32>} : memref<32x128xf32, #tpu.memory_space<vmem>>, vector<32x128xf32>,
    %c0_14 = arith.constant 0 : index
    %c0_15 = arith.constant 0 : index
    %13 = vector.load %arg3[%c0_14, %c0_15] : memref<32x128xf32, #tpu.memory_space<vmem>>, vector<32x128xf32>
    %c0_16 = arith.constant 0 : index
    %c0_17 = arith.constant 0 : index
    %14 = vector.load %arg6[%c0_16, %c0_17] : memref<32x128xf32, #tpu.memory_space<vmem>>, vector<32x128xf32>
    %cst_18 = arith.constant 0.000000e+00 : f32
    %15 = vector.broadcast %cst_18 : f32 to vector<2x32xf32>
    %c0_i32 = arith.constant 0 : i32
    %c2_i32 = arith.constant 2 : i32
    %16 = arith.muli %c0_i32, %c2_i32 : i32
    %17 = arith.index_cast %16 : i32 to index
    %c0_19 = arith.constant 0 : index
    %18 = vector.load %arg9[%17, %c0_19] : memref<32x128xf32, #tpu.memory_space<vmem>>, vector<2x128xf32>
    %cst_20 = arith.constant dense<0.000000e+00> : vector<2x128xf32>
    %19 = tpu.matmul %15, %13, %cst_20 {dimension_numbers = #tpu.dot_dimension_numbers<[1], [0], [0], [1], [0, 0, 1, 1], [], []>} : vector<2x32xf32>, vector<32x128xf32>, vector<2x128xf32> -> vector<2x128xf32>
    %20 = arith.addf %18, %19 : vector<2x128xf32>
    %21 = vector.extract_strided_slice %20 {offsets = [0, 0], sizes = [2, 32], strides = [1, 1]} : vector<2x128xf32> to vector<2x32xf32>
    %22 = arith.negf %21 : vector<2x32xf32>
    %23 = math.exp %22 : vector<2x32xf32>
    %cst_21 = arith.constant 1.000000e+00 : f32
    %24 = vector.broadcast %cst_21 : f32 to vector<2x32xf32>
    %25 = arith.addf %24, %23 : vector<2x32xf32>
    %26 = arith.divf %24, %25 : vector<2x32xf32>
    %27 = vector.extract_strided_slice %20 {offsets = [0, 32], sizes = [2, 32], strides = [1, 1]} : vector<2x128xf32> to vector<2x32xf32>
    %28 = arith.negf %27 : vector<2x32xf32>
    %29 = math.exp %28 : vector<2x32xf32>
    %cst_22 = arith.constant 1.000000e+00 : f32
    %30 = vector.broadcast %cst_22 : f32 to vector<2x32xf32>
    %31 = arith.addf %30, %29 : vector<2x32xf32>
    %32 = arith.divf %30, %31 : vector<2x32xf32>
    %33 = vector.extract_strided_slice %20 {offsets = [0, 64], sizes = [2, 32], strides = [1, 1]} : vector<2x128xf32> to vector<2x32xf32>
    %34 = math.tanh %33 : vector<2x32xf32>
    %35 = vector.extract_strided_slice %20 {offsets = [0, 96], sizes = [2, 32], strides = [1, 1]} : vector<2x128xf32> to vector<2x32xf32>
    %36 = arith.negf %35 : vector<2x32xf32>
    %37 = math.exp %36 : vector<2x32xf32>
    %cst_23 = arith.constant 1.000000e+00 : f32
    %38 = vector.broadcast %cst_23 : f32 to vector<2x32xf32>
    %39 = arith.addf %38, %37 : vector<2x32xf32>
    %40 = arith.divf %38, %39 : vector<2x32xf32>
    %41 = arith.mulf %32, %15 : vector<2x32xf32>
    %42 = arith.mulf %26, %34 : vector<2x32xf32>
    %43 = arith.addf %41, %42 : vector<2x32xf32>
    %44 = math.tanh %43 : vector<2x32xf32>
    %45 = arith.mulf %40, %44 : vector<2x32xf32>
    %46 = arith.index_cast %16 : i32 to index
    %c0_24 = arith.constant 0 : index
    %47 = vector.load %arg11[%46, %c0_24] : memref<32x32xf32, #tpu.memory_space<vmem>>, vector<2x32xf32>
    tpu.vector_store %arg11[%46, %c0_24], %45 {strides = array<i32>} : memref<32x32xf32, #tpu.memory_space<vmem>>, vector<2x32xf32>,
    %c15_i32 = arith.constant 15 : i32
    %48 = arith.subi %c15_i32, %c0_i32 : i32
    %c2_i32_25 = arith.constant 2 : i32
    %49 = arith.muli %48, %c2_i32_25 : i32
    %50 = arith.index_cast %49 : i32 to index
    %c0_26 = arith.constant 0 : index
    %51 = vector.load %arg10[%50, %c0_26] : memref<32x128xf32, #tpu.memory_space<vmem>>, vector<2x128xf32>
    %cst_27 = arith.constant dense<0.000000e+00> : vector<2x128xf32>
    %52 = tpu.matmul %15, %14, %cst_27 {dimension_numbers = #tpu.dot_dimension_numbers<[1], [0], [0], [1], [0, 0, 1, 1], [], []>} : vector<2x32xf32>, vector<32x128xf32>, vector<2x128xf32> -> vector<2x128xf32>
    %53 = arith.addf %51, %52 : vector<2x128xf32>
    %54 = vector.extract_strided_slice %53 {offsets = [0, 0], sizes = [2, 32], strides = [1, 1]} : vector<2x128xf32> to vector<2x32xf32>
    %55 = arith.negf %54 : vector<2x32xf32>
    %56 = math.exp %55 : vector<2x32xf32>
    %cst_28 = arith.constant 1.000000e+00 : f32
    %57 = vector.broadcast %cst_28 : f32 to vector<2x32xf32>
    %58 = arith.addf %57, %56 : vector<2x32xf32>
    %59 = arith.divf %57, %58 : vector<2x32xf32>
    %60 = vector.extract_strided_slice %53 {offsets = [0, 32], sizes = [2, 32], strides = [1, 1]} : vector<2x128xf32> to vector<2x32xf32>
    %61 = arith.negf %60 : vector<2x32xf32>
    %62 = math.exp %61 : vector<2x32xf32>
    %cst_29 = arith.constant 1.000000e+00 : f32
    %63 = vector.broadcast %cst_29 : f32 to vector<2x32xf32>
    %64 = arith.addf %63, %62 : vector<2x32xf32>
    %65 = arith.divf %63, %64 : vector<2x32xf32>
    %66 = vector.extract_strided_slice %53 {offsets = [0, 64], sizes = [2, 32], strides = [1, 1]} : vector<2x128xf32> to vector<2x32xf32>
    %67 = math.tanh %66 : vector<2x32xf32>
    %68 = vector.extract_strided_slice %53 {offsets = [0, 96], sizes = [2, 32], strides = [1, 1]} : vector<2x128xf32> to vector<2x32xf32>
    %69 = arith.negf %68 : vector<2x32xf32>
    %70 = math.exp %69 : vector<2x32xf32>
    %cst_30 = arith.constant 1.000000e+00 : f32
    %71 = vector.broadcast %cst_30 : f32 to vector<2x32xf32>
    %72 = arith.addf %71, %70 : vector<2x32xf32>
    %73 = arith.divf %71, %72 : vector<2x32xf32>
    %74 = arith.mulf %65, %15 : vector<2x32xf32>
    %75 = arith.mulf %59, %67 : vector<2x32xf32>
    %76 = arith.addf %74, %75 : vector<2x32xf32>
    %77 = math.tanh %76 : vector<2x32xf32>
    %78 = arith.mulf %73, %77 : vector<2x32xf32>
    %79 = arith.index_cast %49 : i32 to index
    %c0_31 = arith.constant 0 : index
    %80 = vector.load %arg12[%79, %c0_31] : memref<32x32xf32, #tpu.memory_space<vmem>>, vector<2x32xf32>
    tpu.vector_store %arg12[%79, %c0_31], %78 {strides = array<i32>} : memref<32x32xf32, #tpu.memory_space<vmem>>, vector<2x32xf32>,
    %c1_i32 = arith.constant 1 : i32
    %c2_i32_32 = arith.constant 2 : i32
    %81 = arith.muli %c1_i32, %c2_i32_32 : i32
    %82 = arith.index_cast %81 : i32 to index
    %c0_33 = arith.constant 0 : index
    %83 = vector.load %arg9[%82, %c0_33] : memref<32x128xf32, #tpu.memory_space<vmem>>, vector<2x128xf32>
    %cst_34 = arith.constant dense<0.000000e+00> : vector<2x128xf32>
    %84 = tpu.matmul %45, %13, %cst_34 {dimension_numbers = #tpu.dot_dimension_numbers<[1], [0], [0], [1], [0, 0, 1, 1], [], []>} : vector<2x32xf32>, vector<32x128xf32>, vector<2x128xf32> -> vector<2x128xf32>
    %85 = arith.addf %83, %84 : vector<2x128xf32>
    %86 = vector.extract_strided_slice %85 {offsets = [0, 0], sizes = [2, 32], strides = [1, 1]} : vector<2x128xf32> to vector<2x32xf32>
    %87 = arith.negf %86 : vector<2x32xf32>
    %88 = math.exp %87 : vector<2x32xf32>
    %cst_35 = arith.constant 1.000000e+00 : f32
    %89 = vector.broadcast %cst_35 : f32 to vector<2x32xf32>
    %90 = arith.addf %89, %88 : vector<2x32xf32>
    %91 = arith.divf %89, %90 : vector<2x32xf32>
    %92 = vector.extract_strided_slice %85 {offsets = [0, 32], sizes = [2, 32], strides = [1, 1]} : vector<2x128xf32> to vector<2x32xf32>
    %93 = arith.negf %92 : vector<2x32xf32>
    %94 = math.exp %93 : vector<2x32xf32>
    %cst_36 = arith.constant 1.000000e+00 : f32
    %95 = vector.broadcast %cst_36 : f32 to vector<2x32xf32>
    %96 = arith.addf %95, %94 : vector<2x32xf32>
    %97 = arith.divf %95, %96 : vector<2x32xf32>
    %98 = vector.extract_strided_slice %85 {offsets = [0, 64], sizes = [2, 32], strides = [1, 1]} : vector<2x128xf32> to vector<2x32xf32>
    %99 = math.tanh %98 : vector<2x32xf32>
    %100 = vector.extract_strided_slice %85 {offsets = [0, 96], sizes = [2, 32], strides = [1, 1]} : vector<2x128xf32> to vector<2x32xf32>
    %101 = arith.negf %100 : vector<2x32xf32>
    %102 = math.exp %101 : vector<2x32xf32>
    %cst_37 = arith.constant 1.000000e+00 : f32
    %103 = vector.broadcast %cst_37 : f32 to vector<2x32xf32>
    %104 = arith.addf %103, %102 : vector<2x32xf32>
    %105 = arith.divf %103, %104 : vector<2x32xf32>
    %106 = arith.mulf %97, %43 : vector<2x32xf32>
    %107 = arith.mulf %91, %99 : vector<2x32xf32>
    %108 = arith.addf %106, %107 : vector<2x32xf32>
    %109 = math.tanh %108 : vector<2x32xf32>
    %110 = arith.mulf %105, %109 : vector<2x32xf32>
    %111 = arith.index_cast %81 : i32 to index
    %c0_38 = arith.constant 0 : index
    %112 = vector.load %arg11[%111, %c0_38] : memref<32x32xf32, #tpu.memory_space<vmem>>, vector<2x32xf32>
    tpu.vector_store %arg11[%111, %c0_38], %110 {strides = array<i32>} : memref<32x32xf32, #tpu.memory_space<vmem>>, vector<2x32xf32>,
    %c15_i32_39 = arith.constant 15 : i32
    %113 = arith.subi %c15_i32_39, %c1_i32 : i32
    %c2_i32_40 = arith.constant 2 : i32
    %114 = arith.muli %113, %c2_i32_40 : i32
    %115 = arith.index_cast %114 : i32 to index
    %c0_41 = arith.constant 0 : index
    %116 = vector.load %arg10[%115, %c0_41] : memref<32x128xf32, #tpu.memory_space<vmem>>, vector<2x128xf32>
    %cst_42 = arith.constant dense<0.000000e+00> : vector<2x128xf32>
    %117 = tpu.matmul %78, %14, %cst_42 {dimension_numbers = #tpu.dot_dimension_numbers<[1], [0], [0], [1], [0, 0, 1, 1], [], []>} : vector<2x32xf32>, vector<32x128xf32>, vector<2x128xf32> -> vector<2x128xf32>
    %118 = arith.addf %116, %117 : vector<2x128xf32>
    %119 = vector.extract_strided_slice %118 {offsets = [0, 0], sizes = [2, 32], strides = [1, 1]} : vector<2x128xf32> to vector<2x32xf32>
    %120 = arith.negf %119 : vector<2x32xf32>
    %121 = math.exp %120 : vector<2x32xf32>
    %cst_43 = arith.constant 1.000000e+00 : f32
    %122 = vector.broadcast %cst_43 : f32 to vector<2x32xf32>
    %123 = arith.addf %122, %121 : vector<2x32xf32>
    %124 = arith.divf %122, %123 : vector<2x32xf32>
    %125 = vector.extract_strided_slice %118 {offsets = [0, 32], sizes = [2, 32], strides = [1, 1]} : vector<2x128xf32> to vector<2x32xf32>
    %126 = arith.negf %125 : vector<2x32xf32>
    %127 = math.exp %126 : vector<2x32xf32>
    %cst_44 = arith.constant 1.000000e+00 : f32
    %128 = vector.broadcast %cst_44 : f32 to vector<2x32xf32>
    %129 = arith.addf %128, %127 : vector<2x32xf32>
    %130 = arith.divf %128, %129 : vector<2x32xf32>
    %131 = vector.extract_strided_slice %118 {offsets = [0, 64], sizes = [2, 32], strides = [1, 1]} : vector<2x128xf32> to vector<2x32xf32>
    %132 = math.tanh %131 : vector<2x32xf32>
    %133 = vector.extract_strided_slice %118 {offsets = [0, 96], sizes = [2, 32], strides = [1, 1]} : vector<2x128xf32> to vector<2x32xf32>
    %134 = arith.negf %133 : vector<2x32xf32>
    %135 = math.exp %134 : vector<2x32xf32>
    %cst_45 = arith.constant 1.000000e+00 : f32
    %136 = vector.broadcast %cst_45 : f32 to vector<2x32xf32>
    %137 = arith.addf %136, %135 : vector<2x32xf32>
    %138 = arith.divf %136, %137 : vector<2x32xf32>
    %139 = arith.mulf %130, %76 : vector<2x32xf32>
    %140 = arith.mulf %124, %132 : vector<2x32xf32>
    %141 = arith.addf %139, %140 : vector<2x32xf32>
    %142 = math.tanh %141 : vector<2x32xf32>
    %143 = arith.mulf %138, %142 : vector<2x32xf32>
    %144 = arith.index_cast %114 : i32 to index
    %c0_46 = arith.constant 0 : index
    %145 = vector.load %arg12[%144, %c0_46] : memref<32x32xf32, #tpu.memory_space<vmem>>, vector<2x32xf32>
    tpu.vector_store %arg12[%144, %c0_46], %143 {strides = array<i32>} : memref<32x32xf32, #tpu.memory_space<vmem>>, vector<2x32xf32>,
    %c2_i32_47 = arith.constant 2 : i32
    %c2_i32_48 = arith.constant 2 : i32
    %146 = arith.muli %c2_i32_47, %c2_i32_48 : i32
    %147 = arith.index_cast %146 : i32 to index
    %c0_49 = arith.constant 0 : index
    %148 = vector.load %arg9[%147, %c0_49] : memref<32x128xf32, #tpu.memory_space<vmem>>, vector<2x128xf32>
    %cst_50 = arith.constant dense<0.000000e+00> : vector<2x128xf32>
    %149 = tpu.matmul %110, %13, %cst_50 {dimension_numbers = #tpu.dot_dimension_numbers<[1], [0], [0], [1], [0, 0, 1, 1], [], []>} : vector<2x32xf32>, vector<32x128xf32>, vector<2x128xf32> -> vector<2x128xf32>
    %150 = arith.addf %148, %149 : vector<2x128xf32>
    %151 = vector.extract_strided_slice %150 {offsets = [0, 0], sizes = [2, 32], strides = [1, 1]} : vector<2x128xf32> to vector<2x32xf32>
    %152 = arith.negf %151 : vector<2x32xf32>
    %153 = math.exp %152 : vector<2x32xf32>
    %cst_51 = arith.constant 1.000000e+00 : f32
    %154 = vector.broadcast %cst_51 : f32 to vector<2x32xf32>
    %155 = arith.addf %154, %153 : vector<2x32xf32>
    %156 = arith.divf %154, %155 : vector<2x32xf32>
    %157 = vector.extract_strided_slice %150 {offsets = [0, 32], sizes = [2, 32], strides = [1, 1]} : vector<2x128xf32> to vector<2x32xf32>
    %158 = arith.negf %157 : vector<2x32xf32>
    %159 = math.exp %158 : vector<2x32xf32>
    %cst_52 = arith.constant 1.000000e+00 : f32
    %160 = vector.broadcast %cst_52 : f32 to vector<2x32xf32>
    %161 = arith.addf %160, %159 : vector<2x32xf32>
    %162 = arith.divf %160, %161 : vector<2x32xf32>
    %163 = vector.extract_strided_slice %150 {offsets = [0, 64], sizes = [2, 32], strides = [1, 1]} : vector<2x128xf32> to vector<2x32xf32>
    %164 = math.tanh %163 : vector<2x32xf32>
    %165 = vector.extract_strided_slice %150 {offsets = [0, 96], sizes = [2, 32], strides = [1, 1]} : vector<2x128xf32> to vector<2x32xf32>
    %166 = arith.negf %165 : vector<2x32xf32>
    %167 = math.exp %166 : vector<2x32xf32>
    %cst_53 = arith.constant 1.000000e+00 : f32
    %168 = vector.broadcast %cst_53 : f32 to vector<2x32xf32>
    %169 = arith.addf %168, %167 : vector<2x32xf32>
    %170 = arith.divf %168, %169 : vector<2x32xf32>
    %171 = arith.mulf %162, %108 : vector<2x32xf32>
    %172 = arith.mulf %156, %164 : vector<2x32xf32>
    %173 = arith.addf %171, %172 : vector<2x32xf32>
    %174 = math.tanh %173 : vector<2x32xf32>
    %175 = arith.mulf %170, %174 : vector<2x32xf32>
    %176 = arith.index_cast %146 : i32 to index
    %c0_54 = arith.constant 0 : index
    %177 = vector.load %arg11[%176, %c0_54] : memref<32x32xf32, #tpu.memory_space<vmem>>, vector<2x32xf32>
    tpu.vector_store %arg11[%176, %c0_54], %175 {strides = array<i32>} : memref<32x32xf32, #tpu.memory_space<vmem>>, vector<2x32xf32>,
    %c15_i32_55 = arith.constant 15 : i32
    %178 = arith.subi %c15_i32_55, %c2_i32_47 : i32
    %c2_i32_56 = arith.constant 2 : i32
    %179 = arith.muli %178, %c2_i32_56 : i32
    %180 = arith.index_cast %179 : i32 to index
    %c0_57 = arith.constant 0 : index
    %181 = vector.load %arg10[%180, %c0_57] : memref<32x128xf32, #tpu.memory_space<vmem>>, vector<2x128xf32>
    %cst_58 = arith.constant dense<0.000000e+00> : vector<2x128xf32>
    %182 = tpu.matmul %143, %14, %cst_58 {dimension_numbers = #tpu.dot_dimension_numbers<[1], [0], [0], [1], [0, 0, 1, 1], [], []>} : vector<2x32xf32>, vector<32x128xf32>, vector<2x128xf32> -> vector<2x128xf32>
    %183 = arith.addf %181, %182 : vector<2x128xf32>
    %184 = vector.extract_strided_slice %183 {offsets = [0, 0], sizes = [2, 32], strides = [1, 1]} : vector<2x128xf32> to vector<2x32xf32>
    %185 = arith.negf %184 : vector<2x32xf32>
    %186 = math.exp %185 : vector<2x32xf32>
    %cst_59 = arith.constant 1.000000e+00 : f32
    %187 = vector.broadcast %cst_59 : f32 to vector<2x32xf32>
    %188 = arith.addf %187, %186 : vector<2x32xf32>
    %189 = arith.divf %187, %188 : vector<2x32xf32>
    %190 = vector.extract_strided_slice %183 {offsets = [0, 32], sizes = [2, 32], strides = [1, 1]} : vector<2x128xf32> to vector<2x32xf32>
    %191 = arith.negf %190 : vector<2x32xf32>
    %192 = math.exp %191 : vector<2x32xf32>
    %cst_60 = arith.constant 1.000000e+00 : f32
    %193 = vector.broadcast %cst_60 : f32 to vector<2x32xf32>
    %194 = arith.addf %193, %192 : vector<2x32xf32>
    %195 = arith.divf %193, %194 : vector<2x32xf32>
    %196 = vector.extract_strided_slice %183 {offsets = [0, 64], sizes = [2, 32], strides = [1, 1]} : vector<2x128xf32> to vector<2x32xf32>
    %197 = math.tanh %196 : vector<2x32xf32>
    %198 = vector.extract_strided_slice %183 {offsets = [0, 96], sizes = [2, 32], strides = [1, 1]} : vector<2x128xf32> to vector<2x32xf32>
    %199 = arith.negf %198 : vector<2x32xf32>
    %200 = math.exp %199 : vector<2x32xf32>
    %cst_61 = arith.constant 1.000000e+00 : f32
    %201 = vector.broadcast %cst_61 : f32 to vector<2x32xf32>
    %202 = arith.addf %201, %200 : vector<2x32xf32>
    %203 = arith.divf %201, %202 : vector<2x32xf32>
    %204 = arith.mulf %195, %141 : vector<2x32xf32>
    %205 = arith.mulf %189, %197 : vector<2x32xf32>
    %206 = arith.addf %204, %205 : vector<2x32xf32>
    %207 = math.tanh %206 : vector<2x32xf32>
    %208 = arith.mulf %203, %207 : vector<2x32xf32>
    %209 = arith.index_cast %179 : i32 to index
    %c0_62 = arith.constant 0 : index
    %210 = vector.load %arg12[%209, %c0_62] : memref<32x32xf32, #tpu.memory_space<vmem>>, vector<2x32xf32>
    tpu.vector_store %arg12[%209, %c0_62], %208 {strides = array<i32>} : memref<32x32xf32, #tpu.memory_space<vmem>>, vector<2x32xf32>,
    %c3_i32 = arith.constant 3 : i32
    %c2_i32_63 = arith.constant 2 : i32
    %211 = arith.muli %c3_i32, %c2_i32_63 : i32
    %212 = arith.index_cast %211 : i32 to index
    %c0_64 = arith.constant 0 : index
    %213 = vector.load %arg9[%212, %c0_64] : memref<32x128xf32, #tpu.memory_space<vmem>>, vector<2x128xf32>
    %cst_65 = arith.constant dense<0.000000e+00> : vector<2x128xf32>
    %214 = tpu.matmul %175, %13, %cst_65 {dimension_numbers = #tpu.dot_dimension_numbers<[1], [0], [0], [1], [0, 0, 1, 1], [], []>} : vector<2x32xf32>, vector<32x128xf32>, vector<2x128xf32> -> vector<2x128xf32>
    %215 = arith.addf %213, %214 : vector<2x128xf32>
    %216 = vector.extract_strided_slice %215 {offsets = [0, 0], sizes = [2, 32], strides = [1, 1]} : vector<2x128xf32> to vector<2x32xf32>
    %217 = arith.negf %216 : vector<2x32xf32>
    %218 = math.exp %217 : vector<2x32xf32>
    %cst_66 = arith.constant 1.000000e+00 : f32
    %219 = vector.broadcast %cst_66 : f32 to vector<2x32xf32>
    %220 = arith.addf %219, %218 : vector<2x32xf32>
    %221 = arith.divf %219, %220 : vector<2x32xf32>
    %222 = vector.extract_strided_slice %215 {offsets = [0, 32], sizes = [2, 32], strides = [1, 1]} : vector<2x128xf32> to vector<2x32xf32>
    %223 = arith.negf %222 : vector<2x32xf32>
    %224 = math.exp %223 : vector<2x32xf32>
    %cst_67 = arith.constant 1.000000e+00 : f32
    %225 = vector.broadcast %cst_67 : f32 to vector<2x32xf32>
    %226 = arith.addf %225, %224 : vector<2x32xf32>
    %227 = arith.divf %225, %226 : vector<2x32xf32>
    %228 = vector.extract_strided_slice %215 {offsets = [0, 64], sizes = [2, 32], strides = [1, 1]} : vector<2x128xf32> to vector<2x32xf32>
    %229 = math.tanh %228 : vector<2x32xf32>
    %230 = vector.extract_strided_slice %215 {offsets = [0, 96], sizes = [2, 32], strides = [1, 1]} : vector<2x128xf32> to vector<2x32xf32>
    %231 = arith.negf %230 : vector<2x32xf32>
    %232 = math.exp %231 : vector<2x32xf32>
    %cst_68 = arith.constant 1.000000e+00 : f32
    %233 = vector.broadcast %cst_68 : f32 to vector<2x32xf32>
    %234 = arith.addf %233, %232 : vector<2x32xf32>
    %235 = arith.divf %233, %234 : vector<2x32xf32>
    %236 = arith.mulf %227, %173 : vector<2x32xf32>
    %237 = arith.mulf %221, %229 : vector<2x32xf32>
    %238 = arith.addf %236, %237 : vector<2x32xf32>
    %239 = math.tanh %238 : vector<2x32xf32>
    %240 = arith.mulf %235, %239 : vector<2x32xf32>
    %241 = arith.index_cast %211 : i32 to index
    %c0_69 = arith.constant 0 : index
    %242 = vector.load %arg11[%241, %c0_69] : memref<32x32xf32, #tpu.memory_space<vmem>>, vector<2x32xf32>
    tpu.vector_store %arg11[%241, %c0_69], %240 {strides = array<i32>} : memref<32x32xf32, #tpu.memory_space<vmem>>, vector<2x32xf32>,
    %c15_i32_70 = arith.constant 15 : i32
    %243 = arith.subi %c15_i32_70, %c3_i32 : i32
    %c2_i32_71 = arith.constant 2 : i32
    %244 = arith.muli %243, %c2_i32_71 : i32
    %245 = arith.index_cast %244 : i32 to index
    %c0_72 = arith.constant 0 : index
    %246 = vector.load %arg10[%245, %c0_72] : memref<32x128xf32, #tpu.memory_space<vmem>>, vector<2x128xf32>
    %cst_73 = arith.constant dense<0.000000e+00> : vector<2x128xf32>
    %247 = tpu.matmul %208, %14, %cst_73 {dimension_numbers = #tpu.dot_dimension_numbers<[1], [0], [0], [1], [0, 0, 1, 1], [], []>} : vector<2x32xf32>, vector<32x128xf32>, vector<2x128xf32> -> vector<2x128xf32>
    %248 = arith.addf %246, %247 : vector<2x128xf32>
    %249 = vector.extract_strided_slice %248 {offsets = [0, 0], sizes = [2, 32], strides = [1, 1]} : vector<2x128xf32> to vector<2x32xf32>
    %250 = arith.negf %249 : vector<2x32xf32>
    %251 = math.exp %250 : vector<2x32xf32>
    %cst_74 = arith.constant 1.000000e+00 : f32
    %252 = vector.broadcast %cst_74 : f32 to vector<2x32xf32>
    %253 = arith.addf %252, %251 : vector<2x32xf32>
    %254 = arith.divf %252, %253 : vector<2x32xf32>
    %255 = vector.extract_strided_slice %248 {offsets = [0, 32], sizes = [2, 32], strides = [1, 1]} : vector<2x128xf32> to vector<2x32xf32>
    %256 = arith.negf %255 : vector<2x32xf32>
    %257 = math.exp %256 : vector<2x32xf32>
    %cst_75 = arith.constant 1.000000e+00 : f32
    %258 = vector.broadcast %cst_75 : f32 to vector<2x32xf32>
    %259 = arith.addf %258, %257 : vector<2x32xf32>
    %260 = arith.divf %258, %259 : vector<2x32xf32>
    %261 = vector.extract_strided_slice %248 {offsets = [0, 64], sizes = [2, 32], strides = [1, 1]} : vector<2x128xf32> to vector<2x32xf32>
    %262 = math.tanh %261 : vector<2x32xf32>
    %263 = vector.extract_strided_slice %248 {offsets = [0, 96], sizes = [2, 32], strides = [1, 1]} : vector<2x128xf32> to vector<2x32xf32>
    %264 = arith.negf %263 : vector<2x32xf32>
    %265 = math.exp %264 : vector<2x32xf32>
    %cst_76 = arith.constant 1.000000e+00 : f32
    %266 = vector.broadcast %cst_76 : f32 to vector<2x32xf32>
    %267 = arith.addf %266, %265 : vector<2x32xf32>
    %268 = arith.divf %266, %267 : vector<2x32xf32>
    %269 = arith.mulf %260, %206 : vector<2x32xf32>
    %270 = arith.mulf %254, %262 : vector<2x32xf32>
    %271 = arith.addf %269, %270 : vector<2x32xf32>
    %272 = math.tanh %271 : vector<2x32xf32>
    %273 = arith.mulf %268, %272 : vector<2x32xf32>
    %274 = arith.index_cast %244 : i32 to index
    %c0_77 = arith.constant 0 : index
    %275 = vector.load %arg12[%274, %c0_77] : memref<32x32xf32, #tpu.memory_space<vmem>>, vector<2x32xf32>
    tpu.vector_store %arg12[%274, %c0_77], %273 {strides = array<i32>} : memref<32x32xf32, #tpu.memory_space<vmem>>, vector<2x32xf32>,
    %c4_i32 = arith.constant 4 : i32
    %c2_i32_78 = arith.constant 2 : i32
    %276 = arith.muli %c4_i32, %c2_i32_78 : i32
    %277 = arith.index_cast %276 : i32 to index
    %c0_79 = arith.constant 0 : index
    %278 = vector.load %arg9[%277, %c0_79] : memref<32x128xf32, #tpu.memory_space<vmem>>, vector<2x128xf32>
    %cst_80 = arith.constant dense<0.000000e+00> : vector<2x128xf32>
    %279 = tpu.matmul %240, %13, %cst_80 {dimension_numbers = #tpu.dot_dimension_numbers<[1], [0], [0], [1], [0, 0, 1, 1], [], []>} : vector<2x32xf32>, vector<32x128xf32>, vector<2x128xf32> -> vector<2x128xf32>
    %280 = arith.addf %278, %279 : vector<2x128xf32>
    %281 = vector.extract_strided_slice %280 {offsets = [0, 0], sizes = [2, 32], strides = [1, 1]} : vector<2x128xf32> to vector<2x32xf32>
    %282 = arith.negf %281 : vector<2x32xf32>
    %283 = math.exp %282 : vector<2x32xf32>
    %cst_81 = arith.constant 1.000000e+00 : f32
    %284 = vector.broadcast %cst_81 : f32 to vector<2x32xf32>
    %285 = arith.addf %284, %283 : vector<2x32xf32>
    %286 = arith.divf %284, %285 : vector<2x32xf32>
    %287 = vector.extract_strided_slice %280 {offsets = [0, 32], sizes = [2, 32], strides = [1, 1]} : vector<2x128xf32> to vector<2x32xf32>
    %288 = arith.negf %287 : vector<2x32xf32>
    %289 = math.exp %288 : vector<2x32xf32>
    %cst_82 = arith.constant 1.000000e+00 : f32
    %290 = vector.broadcast %cst_82 : f32 to vector<2x32xf32>
    %291 = arith.addf %290, %289 : vector<2x32xf32>
    %292 = arith.divf %290, %291 : vector<2x32xf32>
    %293 = vector.extract_strided_slice %280 {offsets = [0, 64], sizes = [2, 32], strides = [1, 1]} : vector<2x128xf32> to vector<2x32xf32>
    %294 = math.tanh %293 : vector<2x32xf32>
    %295 = vector.extract_strided_slice %280 {offsets = [0, 96], sizes = [2, 32], strides = [1, 1]} : vector<2x128xf32> to vector<2x32xf32>
    %296 = arith.negf %295 : vector<2x32xf32>
    %297 = math.exp %296 : vector<2x32xf32>
    %cst_83 = arith.constant 1.000000e+00 : f32
    %298 = vector.broadcast %cst_83 : f32 to vector<2x32xf32>
    %299 = arith.addf %298, %297 : vector<2x32xf32>
    %300 = arith.divf %298, %299 : vector<2x32xf32>
    %301 = arith.mulf %292, %238 : vector<2x32xf32>
    %302 = arith.mulf %286, %294 : vector<2x32xf32>
    %303 = arith.addf %301, %302 : vector<2x32xf32>
    %304 = math.tanh %303 : vector<2x32xf32>
    %305 = arith.mulf %300, %304 : vector<2x32xf32>
    %306 = arith.index_cast %276 : i32 to index
    %c0_84 = arith.constant 0 : index
    %307 = vector.load %arg11[%306, %c0_84] : memref<32x32xf32, #tpu.memory_space<vmem>>, vector<2x32xf32>
    tpu.vector_store %arg11[%306, %c0_84], %305 {strides = array<i32>} : memref<32x32xf32, #tpu.memory_space<vmem>>, vector<2x32xf32>,
    %c15_i32_85 = arith.constant 15 : i32
    %308 = arith.subi %c15_i32_85, %c4_i32 : i32
    %c2_i32_86 = arith.constant 2 : i32
    %309 = arith.muli %308, %c2_i32_86 : i32
    %310 = arith.index_cast %309 : i32 to index
    %c0_87 = arith.constant 0 : index
    %311 = vector.load %arg10[%310, %c0_87] : memref<32x128xf32, #tpu.memory_space<vmem>>, vector<2x128xf32>
    %cst_88 = arith.constant dense<0.000000e+00> : vector<2x128xf32>
    %312 = tpu.matmul %273, %14, %cst_88 {dimension_numbers = #tpu.dot_dimension_numbers<[1], [0], [0], [1], [0, 0, 1, 1], [], []>} : vector<2x32xf32>, vector<32x128xf32>, vector<2x128xf32> -> vector<2x128xf32>
    %313 = arith.addf %311, %312 : vector<2x128xf32>
    %314 = vector.extract_strided_slice %313 {offsets = [0, 0], sizes = [2, 32], strides = [1, 1]} : vector<2x128xf32> to vector<2x32xf32>
    %315 = arith.negf %314 : vector<2x32xf32>
    %316 = math.exp %315 : vector<2x32xf32>
    %cst_89 = arith.constant 1.000000e+00 : f32
    %317 = vector.broadcast %cst_89 : f32 to vector<2x32xf32>
    %318 = arith.addf %317, %316 : vector<2x32xf32>
    %319 = arith.divf %317, %318 : vector<2x32xf32>
    %320 = vector.extract_strided_slice %313 {offsets = [0, 32], sizes = [2, 32], strides = [1, 1]} : vector<2x128xf32> to vector<2x32xf32>
    %321 = arith.negf %320 : vector<2x32xf32>
    %322 = math.exp %321 : vector<2x32xf32>
    %cst_90 = arith.constant 1.000000e+00 : f32
    %323 = vector.broadcast %cst_90 : f32 to vector<2x32xf32>
    %324 = arith.addf %323, %322 : vector<2x32xf32>
    %325 = arith.divf %323, %324 : vector<2x32xf32>
    %326 = vector.extract_strided_slice %313 {offsets = [0, 64], sizes = [2, 32], strides = [1, 1]} : vector<2x128xf32> to vector<2x32xf32>
    %327 = math.tanh %326 : vector<2x32xf32>
    %328 = vector.extract_strided_slice %313 {offsets = [0, 96], sizes = [2, 32], strides = [1, 1]} : vector<2x128xf32> to vector<2x32xf32>
    %329 = arith.negf %328 : vector<2x32xf32>
    %330 = math.exp %329 : vector<2x32xf32>
    %cst_91 = arith.constant 1.000000e+00 : f32
    %331 = vector.broadcast %cst_91 : f32 to vector<2x32xf32>
    %332 = arith.addf %331, %330 : vector<2x32xf32>
    %333 = arith.divf %331, %332 : vector<2x32xf32>
    %334 = arith.mulf %325, %271 : vector<2x32xf32>
    %335 = arith.mulf %319, %327 : vector<2x32xf32>
    %336 = arith.addf %334, %335 : vector<2x32xf32>
    %337 = math.tanh %336 : vector<2x32xf32>
    %338 = arith.mulf %333, %337 : vector<2x32xf32>
    %339 = arith.index_cast %309 : i32 to index
    %c0_92 = arith.constant 0 : index
    %340 = vector.load %arg12[%339, %c0_92] : memref<32x32xf32, #tpu.memory_space<vmem>>, vector<2x32xf32>
    tpu.vector_store %arg12[%339, %c0_92], %338 {strides = array<i32>} : memref<32x32xf32, #tpu.memory_space<vmem>>, vector<2x32xf32>,
    %c5_i32 = arith.constant 5 : i32
    %c2_i32_93 = arith.constant 2 : i32
    %341 = arith.muli %c5_i32, %c2_i32_93 : i32
    %342 = arith.index_cast %341 : i32 to index
    %c0_94 = arith.constant 0 : index
    %343 = vector.load %arg9[%342, %c0_94] : memref<32x128xf32, #tpu.memory_space<vmem>>, vector<2x128xf32>
    %cst_95 = arith.constant dense<0.000000e+00> : vector<2x128xf32>
    %344 = tpu.matmul %305, %13, %cst_95 {dimension_numbers = #tpu.dot_dimension_numbers<[1], [0], [0], [1], [0, 0, 1, 1], [], []>} : vector<2x32xf32>, vector<32x128xf32>, vector<2x128xf32> -> vector<2x128xf32>
    %345 = arith.addf %343, %344 : vector<2x128xf32>
    %346 = vector.extract_strided_slice %345 {offsets = [0, 0], sizes = [2, 32], strides = [1, 1]} : vector<2x128xf32> to vector<2x32xf32>
    %347 = arith.negf %346 : vector<2x32xf32>
    %348 = math.exp %347 : vector<2x32xf32>
    %cst_96 = arith.constant 1.000000e+00 : f32
    %349 = vector.broadcast %cst_96 : f32 to vector<2x32xf32>
    %350 = arith.addf %349, %348 : vector<2x32xf32>
    %351 = arith.divf %349, %350 : vector<2x32xf32>
    %352 = vector.extract_strided_slice %345 {offsets = [0, 32], sizes = [2, 32], strides = [1, 1]} : vector<2x128xf32> to vector<2x32xf32>
    %353 = arith.negf %352 : vector<2x32xf32>
    %354 = math.exp %353 : vector<2x32xf32>
    %cst_97 = arith.constant 1.000000e+00 : f32
    %355 = vector.broadcast %cst_97 : f32 to vector<2x32xf32>
    %356 = arith.addf %355, %354 : vector<2x32xf32>
    %357 = arith.divf %355, %356 : vector<2x32xf32>
    %358 = vector.extract_strided_slice %345 {offsets = [0, 64], sizes = [2, 32], strides = [1, 1]} : vector<2x128xf32> to vector<2x32xf32>
    %359 = math.tanh %358 : vector<2x32xf32>
    %360 = vector.extract_strided_slice %345 {offsets = [0, 96], sizes = [2, 32], strides = [1, 1]} : vector<2x128xf32> to vector<2x32xf32>
    %361 = arith.negf %360 : vector<2x32xf32>
    %362 = math.exp %361 : vector<2x32xf32>
    %cst_98 = arith.constant 1.000000e+00 : f32
    %363 = vector.broadcast %cst_98 : f32 to vector<2x32xf32>
    %364 = arith.addf %363, %362 : vector<2x32xf32>
    %365 = arith.divf %363, %364 : vector<2x32xf32>
    %366 = arith.mulf %357, %303 : vector<2x32xf32>
    %367 = arith.mulf %351, %359 : vector<2x32xf32>
    %368 = arith.addf %366, %367 : vector<2x32xf32>
    %369 = math.tanh %368 : vector<2x32xf32>
    %370 = arith.mulf %365, %369 : vector<2x32xf32>
    %371 = arith.index_cast %341 : i32 to index
    %c0_99 = arith.constant 0 : index
    %372 = vector.load %arg11[%371, %c0_99] : memref<32x32xf32, #tpu.memory_space<vmem>>, vector<2x32xf32>
    tpu.vector_store %arg11[%371, %c0_99], %370 {strides = array<i32>} : memref<32x32xf32, #tpu.memory_space<vmem>>, vector<2x32xf32>,
    %c15_i32_100 = arith.constant 15 : i32
    %373 = arith.subi %c15_i32_100, %c5_i32 : i32
    %c2_i32_101 = arith.constant 2 : i32
    %374 = arith.muli %373, %c2_i32_101 : i32
    %375 = arith.index_cast %374 : i32 to index
    %c0_102 = arith.constant 0 : index
    %376 = vector.load %arg10[%375, %c0_102] : memref<32x128xf32, #tpu.memory_space<vmem>>, vector<2x128xf32>
    %cst_103 = arith.constant dense<0.000000e+00> : vector<2x128xf32>
    %377 = tpu.matmul %338, %14, %cst_103 {dimension_numbers = #tpu.dot_dimension_numbers<[1], [0], [0], [1], [0, 0, 1, 1], [], []>} : vector<2x32xf32>, vector<32x128xf32>, vector<2x128xf32> -> vector<2x128xf32>
    %378 = arith.addf %376, %377 : vector<2x128xf32>
    %379 = vector.extract_strided_slice %378 {offsets = [0, 0], sizes = [2, 32], strides = [1, 1]} : vector<2x128xf32> to vector<2x32xf32>
    %380 = arith.negf %379 : vector<2x32xf32>
    %381 = math.exp %380 : vector<2x32xf32>
    %cst_104 = arith.constant 1.000000e+00 : f32
    %382 = vector.broadcast %cst_104 : f32 to vector<2x32xf32>
    %383 = arith.addf %382, %381 : vector<2x32xf32>
    %384 = arith.divf %382, %383 : vector<2x32xf32>
    %385 = vector.extract_strided_slice %378 {offsets = [0, 32], sizes = [2, 32], strides = [1, 1]} : vector<2x128xf32> to vector<2x32xf32>
    %386 = arith.negf %385 : vector<2x32xf32>
    %387 = math.exp %386 : vector<2x32xf32>
    %cst_105 = arith.constant 1.000000e+00 : f32
    %388 = vector.broadcast %cst_105 : f32 to vector<2x32xf32>
    %389 = arith.addf %388, %387 : vector<2x32xf32>
    %390 = arith.divf %388, %389 : vector<2x32xf32>
    %391 = vector.extract_strided_slice %378 {offsets = [0, 64], sizes = [2, 32], strides = [1, 1]} : vector<2x128xf32> to vector<2x32xf32>
    %392 = math.tanh %391 : vector<2x32xf32>
    %393 = vector.extract_strided_slice %378 {offsets = [0, 96], sizes = [2, 32], strides = [1, 1]} : vector<2x128xf32> to vector<2x32xf32>
    %394 = arith.negf %393 : vector<2x32xf32>
    %395 = math.exp %394 : vector<2x32xf32>
    %cst_106 = arith.constant 1.000000e+00 : f32
    %396 = vector.broadcast %cst_106 : f32 to vector<2x32xf32>
    %397 = arith.addf %396, %395 : vector<2x32xf32>
    %398 = arith.divf %396, %397 : vector<2x32xf32>
    %399 = arith.mulf %390, %336 : vector<2x32xf32>
    %400 = arith.mulf %384, %392 : vector<2x32xf32>
    %401 = arith.addf %399, %400 : vector<2x32xf32>
    %402 = math.tanh %401 : vector<2x32xf32>
    %403 = arith.mulf %398, %402 : vector<2x32xf32>
    %404 = arith.index_cast %374 : i32 to index
    %c0_107 = arith.constant 0 : index
    %405 = vector.load %arg12[%404, %c0_107] : memref<32x32xf32, #tpu.memory_space<vmem>>, vector<2x32xf32>
    tpu.vector_store %arg12[%404, %c0_107], %403 {strides = array<i32>} : memref<32x32xf32, #tpu.memory_space<vmem>>, vector<2x32xf32>,
    %c6_i32 = arith.constant 6 : i32
    %c2_i32_108 = arith.constant 2 : i32
    %406 = arith.muli %c6_i32, %c2_i32_108 : i32
    %407 = arith.index_cast %406 : i32 to index
    %c0_109 = arith.constant 0 : index
    %408 = vector.load %arg9[%407, %c0_109] : memref<32x128xf32, #tpu.memory_space<vmem>>, vector<2x128xf32>
    %cst_110 = arith.constant dense<0.000000e+00> : vector<2x128xf32>
    %409 = tpu.matmul %370, %13, %cst_110 {dimension_numbers = #tpu.dot_dimension_numbers<[1], [0], [0], [1], [0, 0, 1, 1], [], []>} : vector<2x32xf32>, vector<32x128xf32>, vector<2x128xf32> -> vector<2x128xf32>
    %410 = arith.addf %408, %409 : vector<2x128xf32>
    %411 = vector.extract_strided_slice %410 {offsets = [0, 0], sizes = [2, 32], strides = [1, 1]} : vector<2x128xf32> to vector<2x32xf32>
    %412 = arith.negf %411 : vector<2x32xf32>
    %413 = math.exp %412 : vector<2x32xf32>
    %cst_111 = arith.constant 1.000000e+00 : f32
    %414 = vector.broadcast %cst_111 : f32 to vector<2x32xf32>
    %415 = arith.addf %414, %413 : vector<2x32xf32>
    %416 = arith.divf %414, %415 : vector<2x32xf32>
    %417 = vector.extract_strided_slice %410 {offsets = [0, 32], sizes = [2, 32], strides = [1, 1]} : vector<2x128xf32> to vector<2x32xf32>
    %418 = arith.negf %417 : vector<2x32xf32>
    %419 = math.exp %418 : vector<2x32xf32>
    %cst_112 = arith.constant 1.000000e+00 : f32
    %420 = vector.broadcast %cst_112 : f32 to vector<2x32xf32>
    %421 = arith.addf %420, %419 : vector<2x32xf32>
    %422 = arith.divf %420, %421 : vector<2x32xf32>
    %423 = vector.extract_strided_slice %410 {offsets = [0, 64], sizes = [2, 32], strides = [1, 1]} : vector<2x128xf32> to vector<2x32xf32>
    %424 = math.tanh %423 : vector<2x32xf32>
    %425 = vector.extract_strided_slice %410 {offsets = [0, 96], sizes = [2, 32], strides = [1, 1]} : vector<2x128xf32> to vector<2x32xf32>
    %426 = arith.negf %425 : vector<2x32xf32>
    %427 = math.exp %426 : vector<2x32xf32>
    %cst_113 = arith.constant 1.000000e+00 : f32
    %428 = vector.broadcast %cst_113 : f32 to vector<2x32xf32>
    %429 = arith.addf %428, %427 : vector<2x32xf32>
    %430 = arith.divf %428, %429 : vector<2x32xf32>
    %431 = arith.mulf %422, %368 : vector<2x32xf32>
    %432 = arith.mulf %416, %424 : vector<2x32xf32>
    %433 = arith.addf %431, %432 : vector<2x32xf32>
    %434 = math.tanh %433 : vector<2x32xf32>
    %435 = arith.mulf %430, %434 : vector<2x32xf32>
    %436 = arith.index_cast %406 : i32 to index
    %c0_114 = arith.constant 0 : index
    %437 = vector.load %arg11[%436, %c0_114] : memref<32x32xf32, #tpu.memory_space<vmem>>, vector<2x32xf32>
    tpu.vector_store %arg11[%436, %c0_114], %435 {strides = array<i32>} : memref<32x32xf32, #tpu.memory_space<vmem>>, vector<2x32xf32>,
    %c15_i32_115 = arith.constant 15 : i32
    %438 = arith.subi %c15_i32_115, %c6_i32 : i32
    %c2_i32_116 = arith.constant 2 : i32
    %439 = arith.muli %438, %c2_i32_116 : i32
    %440 = arith.index_cast %439 : i32 to index
    %c0_117 = arith.constant 0 : index
    %441 = vector.load %arg10[%440, %c0_117] : memref<32x128xf32, #tpu.memory_space<vmem>>, vector<2x128xf32>
    %cst_118 = arith.constant dense<0.000000e+00> : vector<2x128xf32>
    %442 = tpu.matmul %403, %14, %cst_118 {dimension_numbers = #tpu.dot_dimension_numbers<[1], [0], [0], [1], [0, 0, 1, 1], [], []>} : vector<2x32xf32>, vector<32x128xf32>, vector<2x128xf32> -> vector<2x128xf32>
    %443 = arith.addf %441, %442 : vector<2x128xf32>
    %444 = vector.extract_strided_slice %443 {offsets = [0, 0], sizes = [2, 32], strides = [1, 1]} : vector<2x128xf32> to vector<2x32xf32>
    %445 = arith.negf %444 : vector<2x32xf32>
    %446 = math.exp %445 : vector<2x32xf32>
    %cst_119 = arith.constant 1.000000e+00 : f32
    %447 = vector.broadcast %cst_119 : f32 to vector<2x32xf32>
    %448 = arith.addf %447, %446 : vector<2x32xf32>
    %449 = arith.divf %447, %448 : vector<2x32xf32>
    %450 = vector.extract_strided_slice %443 {offsets = [0, 32], sizes = [2, 32], strides = [1, 1]} : vector<2x128xf32> to vector<2x32xf32>
    %451 = arith.negf %450 : vector<2x32xf32>
    %452 = math.exp %451 : vector<2x32xf32>
    %cst_120 = arith.constant 1.000000e+00 : f32
    %453 = vector.broadcast %cst_120 : f32 to vector<2x32xf32>
    %454 = arith.addf %453, %452 : vector<2x32xf32>
    %455 = arith.divf %453, %454 : vector<2x32xf32>
    %456 = vector.extract_strided_slice %443 {offsets = [0, 64], sizes = [2, 32], strides = [1, 1]} : vector<2x128xf32> to vector<2x32xf32>
    %457 = math.tanh %456 : vector<2x32xf32>
    %458 = vector.extract_strided_slice %443 {offsets = [0, 96], sizes = [2, 32], strides = [1, 1]} : vector<2x128xf32> to vector<2x32xf32>
    %459 = arith.negf %458 : vector<2x32xf32>
    %460 = math.exp %459 : vector<2x32xf32>
    %cst_121 = arith.constant 1.000000e+00 : f32
    %461 = vector.broadcast %cst_121 : f32 to vector<2x32xf32>
    %462 = arith.addf %461, %460 : vector<2x32xf32>
    %463 = arith.divf %461, %462 : vector<2x32xf32>
    %464 = arith.mulf %455, %401 : vector<2x32xf32>
    %465 = arith.mulf %449, %457 : vector<2x32xf32>
    %466 = arith.addf %464, %465 : vector<2x32xf32>
    %467 = math.tanh %466 : vector<2x32xf32>
    %468 = arith.mulf %463, %467 : vector<2x32xf32>
    %469 = arith.index_cast %439 : i32 to index
    %c0_122 = arith.constant 0 : index
    %470 = vector.load %arg12[%469, %c0_122] : memref<32x32xf32, #tpu.memory_space<vmem>>, vector<2x32xf32>
    tpu.vector_store %arg12[%469, %c0_122], %468 {strides = array<i32>} : memref<32x32xf32, #tpu.memory_space<vmem>>, vector<2x32xf32>,
    %c7_i32 = arith.constant 7 : i32
    %c2_i32_123 = arith.constant 2 : i32
    %471 = arith.muli %c7_i32, %c2_i32_123 : i32
    %472 = arith.index_cast %471 : i32 to index
    %c0_124 = arith.constant 0 : index
    %473 = vector.load %arg9[%472, %c0_124] : memref<32x128xf32, #tpu.memory_space<vmem>>, vector<2x128xf32>
    %cst_125 = arith.constant dense<0.000000e+00> : vector<2x128xf32>
    %474 = tpu.matmul %435, %13, %cst_125 {dimension_numbers = #tpu.dot_dimension_numbers<[1], [0], [0], [1], [0, 0, 1, 1], [], []>} : vector<2x32xf32>, vector<32x128xf32>, vector<2x128xf32> -> vector<2x128xf32>
    %475 = arith.addf %473, %474 : vector<2x128xf32>
    %476 = vector.extract_strided_slice %475 {offsets = [0, 0], sizes = [2, 32], strides = [1, 1]} : vector<2x128xf32> to vector<2x32xf32>
    %477 = arith.negf %476 : vector<2x32xf32>
    %478 = math.exp %477 : vector<2x32xf32>
    %cst_126 = arith.constant 1.000000e+00 : f32
    %479 = vector.broadcast %cst_126 : f32 to vector<2x32xf32>
    %480 = arith.addf %479, %478 : vector<2x32xf32>
    %481 = arith.divf %479, %480 : vector<2x32xf32>
    %482 = vector.extract_strided_slice %475 {offsets = [0, 32], sizes = [2, 32], strides = [1, 1]} : vector<2x128xf32> to vector<2x32xf32>
    %483 = arith.negf %482 : vector<2x32xf32>
    %484 = math.exp %483 : vector<2x32xf32>
    %cst_127 = arith.constant 1.000000e+00 : f32
    %485 = vector.broadcast %cst_127 : f32 to vector<2x32xf32>
    %486 = arith.addf %485, %484 : vector<2x32xf32>
    %487 = arith.divf %485, %486 : vector<2x32xf32>
    %488 = vector.extract_strided_slice %475 {offsets = [0, 64], sizes = [2, 32], strides = [1, 1]} : vector<2x128xf32> to vector<2x32xf32>
    %489 = math.tanh %488 : vector<2x32xf32>
    %490 = vector.extract_strided_slice %475 {offsets = [0, 96], sizes = [2, 32], strides = [1, 1]} : vector<2x128xf32> to vector<2x32xf32>
    %491 = arith.negf %490 : vector<2x32xf32>
    %492 = math.exp %491 : vector<2x32xf32>
    %cst_128 = arith.constant 1.000000e+00 : f32
    %493 = vector.broadcast %cst_128 : f32 to vector<2x32xf32>
    %494 = arith.addf %493, %492 : vector<2x32xf32>
    %495 = arith.divf %493, %494 : vector<2x32xf32>
    %496 = arith.mulf %487, %433 : vector<2x32xf32>
    %497 = arith.mulf %481, %489 : vector<2x32xf32>
    %498 = arith.addf %496, %497 : vector<2x32xf32>
    %499 = math.tanh %498 : vector<2x32xf32>
    %500 = arith.mulf %495, %499 : vector<2x32xf32>
    %501 = arith.index_cast %471 : i32 to index
    %c0_129 = arith.constant 0 : index
    %502 = vector.load %arg11[%501, %c0_129] : memref<32x32xf32, #tpu.memory_space<vmem>>, vector<2x32xf32>
    tpu.vector_store %arg11[%501, %c0_129], %500 {strides = array<i32>} : memref<32x32xf32, #tpu.memory_space<vmem>>, vector<2x32xf32>,
    %c15_i32_130 = arith.constant 15 : i32
    %503 = arith.subi %c15_i32_130, %c7_i32 : i32
    %c2_i32_131 = arith.constant 2 : i32
    %504 = arith.muli %503, %c2_i32_131 : i32
    %505 = arith.index_cast %504 : i32 to index
    %c0_132 = arith.constant 0 : index
    %506 = vector.load %arg10[%505, %c0_132] : memref<32x128xf32, #tpu.memory_space<vmem>>, vector<2x128xf32>
    %cst_133 = arith.constant dense<0.000000e+00> : vector<2x128xf32>
    %507 = tpu.matmul %468, %14, %cst_133 {dimension_numbers = #tpu.dot_dimension_numbers<[1], [0], [0], [1], [0, 0, 1, 1], [], []>} : vector<2x32xf32>, vector<32x128xf32>, vector<2x128xf32> -> vector<2x128xf32>
    %508 = arith.addf %506, %507 : vector<2x128xf32>
    %509 = vector.extract_strided_slice %508 {offsets = [0, 0], sizes = [2, 32], strides = [1, 1]} : vector<2x128xf32> to vector<2x32xf32>
    %510 = arith.negf %509 : vector<2x32xf32>
    %511 = math.exp %510 : vector<2x32xf32>
    %cst_134 = arith.constant 1.000000e+00 : f32
    %512 = vector.broadcast %cst_134 : f32 to vector<2x32xf32>
    %513 = arith.addf %512, %511 : vector<2x32xf32>
    %514 = arith.divf %512, %513 : vector<2x32xf32>
    %515 = vector.extract_strided_slice %508 {offsets = [0, 32], sizes = [2, 32], strides = [1, 1]} : vector<2x128xf32> to vector<2x32xf32>
    %516 = arith.negf %515 : vector<2x32xf32>
    %517 = math.exp %516 : vector<2x32xf32>
    %cst_135 = arith.constant 1.000000e+00 : f32
    %518 = vector.broadcast %cst_135 : f32 to vector<2x32xf32>
    %519 = arith.addf %518, %517 : vector<2x32xf32>
    %520 = arith.divf %518, %519 : vector<2x32xf32>
    %521 = vector.extract_strided_slice %508 {offsets = [0, 64], sizes = [2, 32], strides = [1, 1]} : vector<2x128xf32> to vector<2x32xf32>
    %522 = math.tanh %521 : vector<2x32xf32>
    %523 = vector.extract_strided_slice %508 {offsets = [0, 96], sizes = [2, 32], strides = [1, 1]} : vector<2x128xf32> to vector<2x32xf32>
    %524 = arith.negf %523 : vector<2x32xf32>
    %525 = math.exp %524 : vector<2x32xf32>
    %cst_136 = arith.constant 1.000000e+00 : f32
    %526 = vector.broadcast %cst_136 : f32 to vector<2x32xf32>
    %527 = arith.addf %526, %525 : vector<2x32xf32>
    %528 = arith.divf %526, %527 : vector<2x32xf32>
    %529 = arith.mulf %520, %466 : vector<2x32xf32>
    %530 = arith.mulf %514, %522 : vector<2x32xf32>
    %531 = arith.addf %529, %530 : vector<2x32xf32>
    %532 = math.tanh %531 : vector<2x32xf32>
    %533 = arith.mulf %528, %532 : vector<2x32xf32>
    %534 = arith.index_cast %504 : i32 to index
    %c0_137 = arith.constant 0 : index
    %535 = vector.load %arg12[%534, %c0_137] : memref<32x32xf32, #tpu.memory_space<vmem>>, vector<2x32xf32>
    tpu.vector_store %arg12[%534, %c0_137], %533 {strides = array<i32>} : memref<32x32xf32, #tpu.memory_space<vmem>>, vector<2x32xf32>,
    %c8_i32 = arith.constant 8 : i32
    %c2_i32_138 = arith.constant 2 : i32
    %536 = arith.muli %c8_i32, %c2_i32_138 : i32
    %537 = arith.index_cast %536 : i32 to index
    %c0_139 = arith.constant 0 : index
    %538 = vector.load %arg9[%537, %c0_139] : memref<32x128xf32, #tpu.memory_space<vmem>>, vector<2x128xf32>
    %cst_140 = arith.constant dense<0.000000e+00> : vector<2x128xf32>
    %539 = tpu.matmul %500, %13, %cst_140 {dimension_numbers = #tpu.dot_dimension_numbers<[1], [0], [0], [1], [0, 0, 1, 1], [], []>} : vector<2x32xf32>, vector<32x128xf32>, vector<2x128xf32> -> vector<2x128xf32>
    %540 = arith.addf %538, %539 : vector<2x128xf32>
    %541 = vector.extract_strided_slice %540 {offsets = [0, 0], sizes = [2, 32], strides = [1, 1]} : vector<2x128xf32> to vector<2x32xf32>
    %542 = arith.negf %541 : vector<2x32xf32>
    %543 = math.exp %542 : vector<2x32xf32>
    %cst_141 = arith.constant 1.000000e+00 : f32
    %544 = vector.broadcast %cst_141 : f32 to vector<2x32xf32>
    %545 = arith.addf %544, %543 : vector<2x32xf32>
    %546 = arith.divf %544, %545 : vector<2x32xf32>
    %547 = vector.extract_strided_slice %540 {offsets = [0, 32], sizes = [2, 32], strides = [1, 1]} : vector<2x128xf32> to vector<2x32xf32>
    %548 = arith.negf %547 : vector<2x32xf32>
    %549 = math.exp %548 : vector<2x32xf32>
    %cst_142 = arith.constant 1.000000e+00 : f32
    %550 = vector.broadcast %cst_142 : f32 to vector<2x32xf32>
    %551 = arith.addf %550, %549 : vector<2x32xf32>
    %552 = arith.divf %550, %551 : vector<2x32xf32>
    %553 = vector.extract_strided_slice %540 {offsets = [0, 64], sizes = [2, 32], strides = [1, 1]} : vector<2x128xf32> to vector<2x32xf32>
    %554 = math.tanh %553 : vector<2x32xf32>
    %555 = vector.extract_strided_slice %540 {offsets = [0, 96], sizes = [2, 32], strides = [1, 1]} : vector<2x128xf32> to vector<2x32xf32>
    %556 = arith.negf %555 : vector<2x32xf32>
    %557 = math.exp %556 : vector<2x32xf32>
    %cst_143 = arith.constant 1.000000e+00 : f32
    %558 = vector.broadcast %cst_143 : f32 to vector<2x32xf32>
    %559 = arith.addf %558, %557 : vector<2x32xf32>
    %560 = arith.divf %558, %559 : vector<2x32xf32>
    %561 = arith.mulf %552, %498 : vector<2x32xf32>
    %562 = arith.mulf %546, %554 : vector<2x32xf32>
    %563 = arith.addf %561, %562 : vector<2x32xf32>
    %564 = math.tanh %563 : vector<2x32xf32>
    %565 = arith.mulf %560, %564 : vector<2x32xf32>
    %566 = arith.index_cast %536 : i32 to index
    %c0_144 = arith.constant 0 : index
    %567 = vector.load %arg11[%566, %c0_144] : memref<32x32xf32, #tpu.memory_space<vmem>>, vector<2x32xf32>
    tpu.vector_store %arg11[%566, %c0_144], %565 {strides = array<i32>} : memref<32x32xf32, #tpu.memory_space<vmem>>, vector<2x32xf32>,
    %c15_i32_145 = arith.constant 15 : i32
    %568 = arith.subi %c15_i32_145, %c8_i32 : i32
    %c2_i32_146 = arith.constant 2 : i32
    %569 = arith.muli %568, %c2_i32_146 : i32
    %570 = arith.index_cast %569 : i32 to index
    %c0_147 = arith.constant 0 : index
    %571 = vector.load %arg10[%570, %c0_147] : memref<32x128xf32, #tpu.memory_space<vmem>>, vector<2x128xf32>
    %cst_148 = arith.constant dense<0.000000e+00> : vector<2x128xf32>
    %572 = tpu.matmul %533, %14, %cst_148 {dimension_numbers = #tpu.dot_dimension_numbers<[1], [0], [0], [1], [0, 0, 1, 1], [], []>} : vector<2x32xf32>, vector<32x128xf32>, vector<2x128xf32> -> vector<2x128xf32>
    %573 = arith.addf %571, %572 : vector<2x128xf32>
    %574 = vector.extract_strided_slice %573 {offsets = [0, 0], sizes = [2, 32], strides = [1, 1]} : vector<2x128xf32> to vector<2x32xf32>
    %575 = arith.negf %574 : vector<2x32xf32>
    %576 = math.exp %575 : vector<2x32xf32>
    %cst_149 = arith.constant 1.000000e+00 : f32
    %577 = vector.broadcast %cst_149 : f32 to vector<2x32xf32>
    %578 = arith.addf %577, %576 : vector<2x32xf32>
    %579 = arith.divf %577, %578 : vector<2x32xf32>
    %580 = vector.extract_strided_slice %573 {offsets = [0, 32], sizes = [2, 32], strides = [1, 1]} : vector<2x128xf32> to vector<2x32xf32>
    %581 = arith.negf %580 : vector<2x32xf32>
    %582 = math.exp %581 : vector<2x32xf32>
    %cst_150 = arith.constant 1.000000e+00 : f32
    %583 = vector.broadcast %cst_150 : f32 to vector<2x32xf32>
    %584 = arith.addf %583, %582 : vector<2x32xf32>
    %585 = arith.divf %583, %584 : vector<2x32xf32>
    %586 = vector.extract_strided_slice %573 {offsets = [0, 64], sizes = [2, 32], strides = [1, 1]} : vector<2x128xf32> to vector<2x32xf32>
    %587 = math.tanh %586 : vector<2x32xf32>
    %588 = vector.extract_strided_slice %573 {offsets = [0, 96], sizes = [2, 32], strides = [1, 1]} : vector<2x128xf32> to vector<2x32xf32>
    %589 = arith.negf %588 : vector<2x32xf32>
    %590 = math.exp %589 : vector<2x32xf32>
    %cst_151 = arith.constant 1.000000e+00 : f32
    %591 = vector.broadcast %cst_151 : f32 to vector<2x32xf32>
    %592 = arith.addf %591, %590 : vector<2x32xf32>
    %593 = arith.divf %591, %592 : vector<2x32xf32>
    %594 = arith.mulf %585, %531 : vector<2x32xf32>
    %595 = arith.mulf %579, %587 : vector<2x32xf32>
    %596 = arith.addf %594, %595 : vector<2x32xf32>
    %597 = math.tanh %596 : vector<2x32xf32>
    %598 = arith.mulf %593, %597 : vector<2x32xf32>
    %599 = arith.index_cast %569 : i32 to index
    %c0_152 = arith.constant 0 : index
    %600 = vector.load %arg12[%599, %c0_152] : memref<32x32xf32, #tpu.memory_space<vmem>>, vector<2x32xf32>
    tpu.vector_store %arg12[%599, %c0_152], %598 {strides = array<i32>} : memref<32x32xf32, #tpu.memory_space<vmem>>, vector<2x32xf32>,
    %c9_i32 = arith.constant 9 : i32
    %c2_i32_153 = arith.constant 2 : i32
    %601 = arith.muli %c9_i32, %c2_i32_153 : i32
    %602 = arith.index_cast %601 : i32 to index
    %c0_154 = arith.constant 0 : index
    %603 = vector.load %arg9[%602, %c0_154] : memref<32x128xf32, #tpu.memory_space<vmem>>, vector<2x128xf32>
    %cst_155 = arith.constant dense<0.000000e+00> : vector<2x128xf32>
    %604 = tpu.matmul %565, %13, %cst_155 {dimension_numbers = #tpu.dot_dimension_numbers<[1], [0], [0], [1], [0, 0, 1, 1], [], []>} : vector<2x32xf32>, vector<32x128xf32>, vector<2x128xf32> -> vector<2x128xf32>
    %605 = arith.addf %603, %604 : vector<2x128xf32>
    %606 = vector.extract_strided_slice %605 {offsets = [0, 0], sizes = [2, 32], strides = [1, 1]} : vector<2x128xf32> to vector<2x32xf32>
    %607 = arith.negf %606 : vector<2x32xf32>
    %608 = math.exp %607 : vector<2x32xf32>
    %cst_156 = arith.constant 1.000000e+00 : f32
    %609 = vector.broadcast %cst_156 : f32 to vector<2x32xf32>
    %610 = arith.addf %609, %608 : vector<2x32xf32>
    %611 = arith.divf %609, %610 : vector<2x32xf32>
    %612 = vector.extract_strided_slice %605 {offsets = [0, 32], sizes = [2, 32], strides = [1, 1]} : vector<2x128xf32> to vector<2x32xf32>
    %613 = arith.negf %612 : vector<2x32xf32>
    %614 = math.exp %613 : vector<2x32xf32>
    %cst_157 = arith.constant 1.000000e+00 : f32
    %615 = vector.broadcast %cst_157 : f32 to vector<2x32xf32>
    %616 = arith.addf %615, %614 : vector<2x32xf32>
    %617 = arith.divf %615, %616 : vector<2x32xf32>
    %618 = vector.extract_strided_slice %605 {offsets = [0, 64], sizes = [2, 32], strides = [1, 1]} : vector<2x128xf32> to vector<2x32xf32>
    %619 = math.tanh %618 : vector<2x32xf32>
    %620 = vector.extract_strided_slice %605 {offsets = [0, 96], sizes = [2, 32], strides = [1, 1]} : vector<2x128xf32> to vector<2x32xf32>
    %621 = arith.negf %620 : vector<2x32xf32>
    %622 = math.exp %621 : vector<2x32xf32>
    %cst_158 = arith.constant 1.000000e+00 : f32
    %623 = vector.broadcast %cst_158 : f32 to vector<2x32xf32>
    %624 = arith.addf %623, %622 : vector<2x32xf32>
    %625 = arith.divf %623, %624 : vector<2x32xf32>
    %626 = arith.mulf %617, %563 : vector<2x32xf32>
    %627 = arith.mulf %611, %619 : vector<2x32xf32>
    %628 = arith.addf %626, %627 : vector<2x32xf32>
    %629 = math.tanh %628 : vector<2x32xf32>
    %630 = arith.mulf %625, %629 : vector<2x32xf32>
    %631 = arith.index_cast %601 : i32 to index
    %c0_159 = arith.constant 0 : index
    %632 = vector.load %arg11[%631, %c0_159] : memref<32x32xf32, #tpu.memory_space<vmem>>, vector<2x32xf32>
    tpu.vector_store %arg11[%631, %c0_159], %630 {strides = array<i32>} : memref<32x32xf32, #tpu.memory_space<vmem>>, vector<2x32xf32>,
    %c15_i32_160 = arith.constant 15 : i32
    %633 = arith.subi %c15_i32_160, %c9_i32 : i32
    %c2_i32_161 = arith.constant 2 : i32
    %634 = arith.muli %633, %c2_i32_161 : i32
    %635 = arith.index_cast %634 : i32 to index
    %c0_162 = arith.constant 0 : index
    %636 = vector.load %arg10[%635, %c0_162] : memref<32x128xf32, #tpu.memory_space<vmem>>, vector<2x128xf32>
    %cst_163 = arith.constant dense<0.000000e+00> : vector<2x128xf32>
    %637 = tpu.matmul %598, %14, %cst_163 {dimension_numbers = #tpu.dot_dimension_numbers<[1], [0], [0], [1], [0, 0, 1, 1], [], []>} : vector<2x32xf32>, vector<32x128xf32>, vector<2x128xf32> -> vector<2x128xf32>
    %638 = arith.addf %636, %637 : vector<2x128xf32>
    %639 = vector.extract_strided_slice %638 {offsets = [0, 0], sizes = [2, 32], strides = [1, 1]} : vector<2x128xf32> to vector<2x32xf32>
    %640 = arith.negf %639 : vector<2x32xf32>
    %641 = math.exp %640 : vector<2x32xf32>
    %cst_164 = arith.constant 1.000000e+00 : f32
    %642 = vector.broadcast %cst_164 : f32 to vector<2x32xf32>
    %643 = arith.addf %642, %641 : vector<2x32xf32>
    %644 = arith.divf %642, %643 : vector<2x32xf32>
    %645 = vector.extract_strided_slice %638 {offsets = [0, 32], sizes = [2, 32], strides = [1, 1]} : vector<2x128xf32> to vector<2x32xf32>
    %646 = arith.negf %645 : vector<2x32xf32>
    %647 = math.exp %646 : vector<2x32xf32>
    %cst_165 = arith.constant 1.000000e+00 : f32
    %648 = vector.broadcast %cst_165 : f32 to vector<2x32xf32>
    %649 = arith.addf %648, %647 : vector<2x32xf32>
    %650 = arith.divf %648, %649 : vector<2x32xf32>
    %651 = vector.extract_strided_slice %638 {offsets = [0, 64], sizes = [2, 32], strides = [1, 1]} : vector<2x128xf32> to vector<2x32xf32>
    %652 = math.tanh %651 : vector<2x32xf32>
    %653 = vector.extract_strided_slice %638 {offsets = [0, 96], sizes = [2, 32], strides = [1, 1]} : vector<2x128xf32> to vector<2x32xf32>
    %654 = arith.negf %653 : vector<2x32xf32>
    %655 = math.exp %654 : vector<2x32xf32>
    %cst_166 = arith.constant 1.000000e+00 : f32
    %656 = vector.broadcast %cst_166 : f32 to vector<2x32xf32>
    %657 = arith.addf %656, %655 : vector<2x32xf32>
    %658 = arith.divf %656, %657 : vector<2x32xf32>
    %659 = arith.mulf %650, %596 : vector<2x32xf32>
    %660 = arith.mulf %644, %652 : vector<2x32xf32>
    %661 = arith.addf %659, %660 : vector<2x32xf32>
    %662 = math.tanh %661 : vector<2x32xf32>
    %663 = arith.mulf %658, %662 : vector<2x32xf32>
    %664 = arith.index_cast %634 : i32 to index
    %c0_167 = arith.constant 0 : index
    %665 = vector.load %arg12[%664, %c0_167] : memref<32x32xf32, #tpu.memory_space<vmem>>, vector<2x32xf32>
    tpu.vector_store %arg12[%664, %c0_167], %663 {strides = array<i32>} : memref<32x32xf32, #tpu.memory_space<vmem>>, vector<2x32xf32>,
    %c10_i32 = arith.constant 10 : i32
    %c2_i32_168 = arith.constant 2 : i32
    %666 = arith.muli %c10_i32, %c2_i32_168 : i32
    %667 = arith.index_cast %666 : i32 to index
    %c0_169 = arith.constant 0 : index
    %668 = vector.load %arg9[%667, %c0_169] : memref<32x128xf32, #tpu.memory_space<vmem>>, vector<2x128xf32>
    %cst_170 = arith.constant dense<0.000000e+00> : vector<2x128xf32>
    %669 = tpu.matmul %630, %13, %cst_170 {dimension_numbers = #tpu.dot_dimension_numbers<[1], [0], [0], [1], [0, 0, 1, 1], [], []>} : vector<2x32xf32>, vector<32x128xf32>, vector<2x128xf32> -> vector<2x128xf32>
    %670 = arith.addf %668, %669 : vector<2x128xf32>
    %671 = vector.extract_strided_slice %670 {offsets = [0, 0], sizes = [2, 32], strides = [1, 1]} : vector<2x128xf32> to vector<2x32xf32>
    %672 = arith.negf %671 : vector<2x32xf32>
    %673 = math.exp %672 : vector<2x32xf32>
    %cst_171 = arith.constant 1.000000e+00 : f32
    %674 = vector.broadcast %cst_171 : f32 to vector<2x32xf32>
    %675 = arith.addf %674, %673 : vector<2x32xf32>
    %676 = arith.divf %674, %675 : vector<2x32xf32>
    %677 = vector.extract_strided_slice %670 {offsets = [0, 32], sizes = [2, 32], strides = [1, 1]} : vector<2x128xf32> to vector<2x32xf32>
    %678 = arith.negf %677 : vector<2x32xf32>
    %679 = math.exp %678 : vector<2x32xf32>
    %cst_172 = arith.constant 1.000000e+00 : f32
    %680 = vector.broadcast %cst_172 : f32 to vector<2x32xf32>
    %681 = arith.addf %680, %679 : vector<2x32xf32>
    %682 = arith.divf %680, %681 : vector<2x32xf32>
    %683 = vector.extract_strided_slice %670 {offsets = [0, 64], sizes = [2, 32], strides = [1, 1]} : vector<2x128xf32> to vector<2x32xf32>
    %684 = math.tanh %683 : vector<2x32xf32>
    %685 = vector.extract_strided_slice %670 {offsets = [0, 96], sizes = [2, 32], strides = [1, 1]} : vector<2x128xf32> to vector<2x32xf32>
    %686 = arith.negf %685 : vector<2x32xf32>
    %687 = math.exp %686 : vector<2x32xf32>
    %cst_173 = arith.constant 1.000000e+00 : f32
    %688 = vector.broadcast %cst_173 : f32 to vector<2x32xf32>
    %689 = arith.addf %688, %687 : vector<2x32xf32>
    %690 = arith.divf %688, %689 : vector<2x32xf32>
    %691 = arith.mulf %682, %628 : vector<2x32xf32>
    %692 = arith.mulf %676, %684 : vector<2x32xf32>
    %693 = arith.addf %691, %692 : vector<2x32xf32>
    %694 = math.tanh %693 : vector<2x32xf32>
    %695 = arith.mulf %690, %694 : vector<2x32xf32>
    %696 = arith.index_cast %666 : i32 to index
    %c0_174 = arith.constant 0 : index
    %697 = vector.load %arg11[%696, %c0_174] : memref<32x32xf32, #tpu.memory_space<vmem>>, vector<2x32xf32>
    tpu.vector_store %arg11[%696, %c0_174], %695 {strides = array<i32>} : memref<32x32xf32, #tpu.memory_space<vmem>>, vector<2x32xf32>,
    %c15_i32_175 = arith.constant 15 : i32
    %698 = arith.subi %c15_i32_175, %c10_i32 : i32
    %c2_i32_176 = arith.constant 2 : i32
    %699 = arith.muli %698, %c2_i32_176 : i32
    %700 = arith.index_cast %699 : i32 to index
    %c0_177 = arith.constant 0 : index
    %701 = vector.load %arg10[%700, %c0_177] : memref<32x128xf32, #tpu.memory_space<vmem>>, vector<2x128xf32>
    %cst_178 = arith.constant dense<0.000000e+00> : vector<2x128xf32>
    %702 = tpu.matmul %663, %14, %cst_178 {dimension_numbers = #tpu.dot_dimension_numbers<[1], [0], [0], [1], [0, 0, 1, 1], [], []>} : vector<2x32xf32>, vector<32x128xf32>, vector<2x128xf32> -> vector<2x128xf32>
    %703 = arith.addf %701, %702 : vector<2x128xf32>
    %704 = vector.extract_strided_slice %703 {offsets = [0, 0], sizes = [2, 32], strides = [1, 1]} : vector<2x128xf32> to vector<2x32xf32>
    %705 = arith.negf %704 : vector<2x32xf32>
    %706 = math.exp %705 : vector<2x32xf32>
    %cst_179 = arith.constant 1.000000e+00 : f32
    %707 = vector.broadcast %cst_179 : f32 to vector<2x32xf32>
    %708 = arith.addf %707, %706 : vector<2x32xf32>
    %709 = arith.divf %707, %708 : vector<2x32xf32>
    %710 = vector.extract_strided_slice %703 {offsets = [0, 32], sizes = [2, 32], strides = [1, 1]} : vector<2x128xf32> to vector<2x32xf32>
    %711 = arith.negf %710 : vector<2x32xf32>
    %712 = math.exp %711 : vector<2x32xf32>
    %cst_180 = arith.constant 1.000000e+00 : f32
    %713 = vector.broadcast %cst_180 : f32 to vector<2x32xf32>
    %714 = arith.addf %713, %712 : vector<2x32xf32>
    %715 = arith.divf %713, %714 : vector<2x32xf32>
    %716 = vector.extract_strided_slice %703 {offsets = [0, 64], sizes = [2, 32], strides = [1, 1]} : vector<2x128xf32> to vector<2x32xf32>
    %717 = math.tanh %716 : vector<2x32xf32>
    %718 = vector.extract_strided_slice %703 {offsets = [0, 96], sizes = [2, 32], strides = [1, 1]} : vector<2x128xf32> to vector<2x32xf32>
    %719 = arith.negf %718 : vector<2x32xf32>
    %720 = math.exp %719 : vector<2x32xf32>
    %cst_181 = arith.constant 1.000000e+00 : f32
    %721 = vector.broadcast %cst_181 : f32 to vector<2x32xf32>
    %722 = arith.addf %721, %720 : vector<2x32xf32>
    %723 = arith.divf %721, %722 : vector<2x32xf32>
    %724 = arith.mulf %715, %661 : vector<2x32xf32>
    %725 = arith.mulf %709, %717 : vector<2x32xf32>
    %726 = arith.addf %724, %725 : vector<2x32xf32>
    %727 = math.tanh %726 : vector<2x32xf32>
    %728 = arith.mulf %723, %727 : vector<2x32xf32>
    %729 = arith.index_cast %699 : i32 to index
    %c0_182 = arith.constant 0 : index
    %730 = vector.load %arg12[%729, %c0_182] : memref<32x32xf32, #tpu.memory_space<vmem>>, vector<2x32xf32>
    tpu.vector_store %arg12[%729, %c0_182], %728 {strides = array<i32>} : memref<32x32xf32, #tpu.memory_space<vmem>>, vector<2x32xf32>,
    %c11_i32 = arith.constant 11 : i32
    %c2_i32_183 = arith.constant 2 : i32
    %731 = arith.muli %c11_i32, %c2_i32_183 : i32
    %732 = arith.index_cast %731 : i32 to index
    %c0_184 = arith.constant 0 : index
    %733 = vector.load %arg9[%732, %c0_184] : memref<32x128xf32, #tpu.memory_space<vmem>>, vector<2x128xf32>
    %cst_185 = arith.constant dense<0.000000e+00> : vector<2x128xf32>
    %734 = tpu.matmul %695, %13, %cst_185 {dimension_numbers = #tpu.dot_dimension_numbers<[1], [0], [0], [1], [0, 0, 1, 1], [], []>} : vector<2x32xf32>, vector<32x128xf32>, vector<2x128xf32> -> vector<2x128xf32>
    %735 = arith.addf %733, %734 : vector<2x128xf32>
    %736 = vector.extract_strided_slice %735 {offsets = [0, 0], sizes = [2, 32], strides = [1, 1]} : vector<2x128xf32> to vector<2x32xf32>
    %737 = arith.negf %736 : vector<2x32xf32>
    %738 = math.exp %737 : vector<2x32xf32>
    %cst_186 = arith.constant 1.000000e+00 : f32
    %739 = vector.broadcast %cst_186 : f32 to vector<2x32xf32>
    %740 = arith.addf %739, %738 : vector<2x32xf32>
    %741 = arith.divf %739, %740 : vector<2x32xf32>
    %742 = vector.extract_strided_slice %735 {offsets = [0, 32], sizes = [2, 32], strides = [1, 1]} : vector<2x128xf32> to vector<2x32xf32>
    %743 = arith.negf %742 : vector<2x32xf32>
    %744 = math.exp %743 : vector<2x32xf32>
    %cst_187 = arith.constant 1.000000e+00 : f32
    %745 = vector.broadcast %cst_187 : f32 to vector<2x32xf32>
    %746 = arith.addf %745, %744 : vector<2x32xf32>
    %747 = arith.divf %745, %746 : vector<2x32xf32>
    %748 = vector.extract_strided_slice %735 {offsets = [0, 64], sizes = [2, 32], strides = [1, 1]} : vector<2x128xf32> to vector<2x32xf32>
    %749 = math.tanh %748 : vector<2x32xf32>
    %750 = vector.extract_strided_slice %735 {offsets = [0, 96], sizes = [2, 32], strides = [1, 1]} : vector<2x128xf32> to vector<2x32xf32>
    %751 = arith.negf %750 : vector<2x32xf32>
    %752 = math.exp %751 : vector<2x32xf32>
    %cst_188 = arith.constant 1.000000e+00 : f32
    %753 = vector.broadcast %cst_188 : f32 to vector<2x32xf32>
    %754 = arith.addf %753, %752 : vector<2x32xf32>
    %755 = arith.divf %753, %754 : vector<2x32xf32>
    %756 = arith.mulf %747, %693 : vector<2x32xf32>
    %757 = arith.mulf %741, %749 : vector<2x32xf32>
    %758 = arith.addf %756, %757 : vector<2x32xf32>
    %759 = math.tanh %758 : vector<2x32xf32>
    %760 = arith.mulf %755, %759 : vector<2x32xf32>
    %761 = arith.index_cast %731 : i32 to index
    %c0_189 = arith.constant 0 : index
    %762 = vector.load %arg11[%761, %c0_189] : memref<32x32xf32, #tpu.memory_space<vmem>>, vector<2x32xf32>
    tpu.vector_store %arg11[%761, %c0_189], %760 {strides = array<i32>} : memref<32x32xf32, #tpu.memory_space<vmem>>, vector<2x32xf32>,
    %c15_i32_190 = arith.constant 15 : i32
    %763 = arith.subi %c15_i32_190, %c11_i32 : i32
    %c2_i32_191 = arith.constant 2 : i32
    %764 = arith.muli %763, %c2_i32_191 : i32
    %765 = arith.index_cast %764 : i32 to index
    %c0_192 = arith.constant 0 : index
    %766 = vector.load %arg10[%765, %c0_192] : memref<32x128xf32, #tpu.memory_space<vmem>>, vector<2x128xf32>
    %cst_193 = arith.constant dense<0.000000e+00> : vector<2x128xf32>
    %767 = tpu.matmul %728, %14, %cst_193 {dimension_numbers = #tpu.dot_dimension_numbers<[1], [0], [0], [1], [0, 0, 1, 1], [], []>} : vector<2x32xf32>, vector<32x128xf32>, vector<2x128xf32> -> vector<2x128xf32>
    %768 = arith.addf %766, %767 : vector<2x128xf32>
    %769 = vector.extract_strided_slice %768 {offsets = [0, 0], sizes = [2, 32], strides = [1, 1]} : vector<2x128xf32> to vector<2x32xf32>
    %770 = arith.negf %769 : vector<2x32xf32>
    %771 = math.exp %770 : vector<2x32xf32>
    %cst_194 = arith.constant 1.000000e+00 : f32
    %772 = vector.broadcast %cst_194 : f32 to vector<2x32xf32>
    %773 = arith.addf %772, %771 : vector<2x32xf32>
    %774 = arith.divf %772, %773 : vector<2x32xf32>
    %775 = vector.extract_strided_slice %768 {offsets = [0, 32], sizes = [2, 32], strides = [1, 1]} : vector<2x128xf32> to vector<2x32xf32>
    %776 = arith.negf %775 : vector<2x32xf32>
    %777 = math.exp %776 : vector<2x32xf32>
    %cst_195 = arith.constant 1.000000e+00 : f32
    %778 = vector.broadcast %cst_195 : f32 to vector<2x32xf32>
    %779 = arith.addf %778, %777 : vector<2x32xf32>
    %780 = arith.divf %778, %779 : vector<2x32xf32>
    %781 = vector.extract_strided_slice %768 {offsets = [0, 64], sizes = [2, 32], strides = [1, 1]} : vector<2x128xf32> to vector<2x32xf32>
    %782 = math.tanh %781 : vector<2x32xf32>
    %783 = vector.extract_strided_slice %768 {offsets = [0, 96], sizes = [2, 32], strides = [1, 1]} : vector<2x128xf32> to vector<2x32xf32>
    %784 = arith.negf %783 : vector<2x32xf32>
    %785 = math.exp %784 : vector<2x32xf32>
    %cst_196 = arith.constant 1.000000e+00 : f32
    %786 = vector.broadcast %cst_196 : f32 to vector<2x32xf32>
    %787 = arith.addf %786, %785 : vector<2x32xf32>
    %788 = arith.divf %786, %787 : vector<2x32xf32>
    %789 = arith.mulf %780, %726 : vector<2x32xf32>
    %790 = arith.mulf %774, %782 : vector<2x32xf32>
    %791 = arith.addf %789, %790 : vector<2x32xf32>
    %792 = math.tanh %791 : vector<2x32xf32>
    %793 = arith.mulf %788, %792 : vector<2x32xf32>
    %794 = arith.index_cast %764 : i32 to index
    %c0_197 = arith.constant 0 : index
    %795 = vector.load %arg12[%794, %c0_197] : memref<32x32xf32, #tpu.memory_space<vmem>>, vector<2x32xf32>
    tpu.vector_store %arg12[%794, %c0_197], %793 {strides = array<i32>} : memref<32x32xf32, #tpu.memory_space<vmem>>, vector<2x32xf32>,
    %c12_i32 = arith.constant 12 : i32
    %c2_i32_198 = arith.constant 2 : i32
    %796 = arith.muli %c12_i32, %c2_i32_198 : i32
    %797 = arith.index_cast %796 : i32 to index
    %c0_199 = arith.constant 0 : index
    %798 = vector.load %arg9[%797, %c0_199] : memref<32x128xf32, #tpu.memory_space<vmem>>, vector<2x128xf32>
    %cst_200 = arith.constant dense<0.000000e+00> : vector<2x128xf32>
    %799 = tpu.matmul %760, %13, %cst_200 {dimension_numbers = #tpu.dot_dimension_numbers<[1], [0], [0], [1], [0, 0, 1, 1], [], []>} : vector<2x32xf32>, vector<32x128xf32>, vector<2x128xf32> -> vector<2x128xf32>
    %800 = arith.addf %798, %799 : vector<2x128xf32>
    %801 = vector.extract_strided_slice %800 {offsets = [0, 0], sizes = [2, 32], strides = [1, 1]} : vector<2x128xf32> to vector<2x32xf32>
    %802 = arith.negf %801 : vector<2x32xf32>
    %803 = math.exp %802 : vector<2x32xf32>
    %cst_201 = arith.constant 1.000000e+00 : f32
    %804 = vector.broadcast %cst_201 : f32 to vector<2x32xf32>
    %805 = arith.addf %804, %803 : vector<2x32xf32>
    %806 = arith.divf %804, %805 : vector<2x32xf32>
    %807 = vector.extract_strided_slice %800 {offsets = [0, 32], sizes = [2, 32], strides = [1, 1]} : vector<2x128xf32> to vector<2x32xf32>
    %808 = arith.negf %807 : vector<2x32xf32>
    %809 = math.exp %808 : vector<2x32xf32>
    %cst_202 = arith.constant 1.000000e+00 : f32
    %810 = vector.broadcast %cst_202 : f32 to vector<2x32xf32>
    %811 = arith.addf %810, %809 : vector<2x32xf32>
    %812 = arith.divf %810, %811 : vector<2x32xf32>
    %813 = vector.extract_strided_slice %800 {offsets = [0, 64], sizes = [2, 32], strides = [1, 1]} : vector<2x128xf32> to vector<2x32xf32>
    %814 = math.tanh %813 : vector<2x32xf32>
    %815 = vector.extract_strided_slice %800 {offsets = [0, 96], sizes = [2, 32], strides = [1, 1]} : vector<2x128xf32> to vector<2x32xf32>
    %816 = arith.negf %815 : vector<2x32xf32>
    %817 = math.exp %816 : vector<2x32xf32>
    %cst_203 = arith.constant 1.000000e+00 : f32
    %818 = vector.broadcast %cst_203 : f32 to vector<2x32xf32>
    %819 = arith.addf %818, %817 : vector<2x32xf32>
    %820 = arith.divf %818, %819 : vector<2x32xf32>
    %821 = arith.mulf %812, %758 : vector<2x32xf32>
    %822 = arith.mulf %806, %814 : vector<2x32xf32>
    %823 = arith.addf %821, %822 : vector<2x32xf32>
    %824 = math.tanh %823 : vector<2x32xf32>
    %825 = arith.mulf %820, %824 : vector<2x32xf32>
    %826 = arith.index_cast %796 : i32 to index
    %c0_204 = arith.constant 0 : index
    %827 = vector.load %arg11[%826, %c0_204] : memref<32x32xf32, #tpu.memory_space<vmem>>, vector<2x32xf32>
    tpu.vector_store %arg11[%826, %c0_204], %825 {strides = array<i32>} : memref<32x32xf32, #tpu.memory_space<vmem>>, vector<2x32xf32>,
    %c15_i32_205 = arith.constant 15 : i32
    %828 = arith.subi %c15_i32_205, %c12_i32 : i32
    %c2_i32_206 = arith.constant 2 : i32
    %829 = arith.muli %828, %c2_i32_206 : i32
    %830 = arith.index_cast %829 : i32 to index
    %c0_207 = arith.constant 0 : index
    %831 = vector.load %arg10[%830, %c0_207] : memref<32x128xf32, #tpu.memory_space<vmem>>, vector<2x128xf32>
    %cst_208 = arith.constant dense<0.000000e+00> : vector<2x128xf32>
    %832 = tpu.matmul %793, %14, %cst_208 {dimension_numbers = #tpu.dot_dimension_numbers<[1], [0], [0], [1], [0, 0, 1, 1], [], []>} : vector<2x32xf32>, vector<32x128xf32>, vector<2x128xf32> -> vector<2x128xf32>
    %833 = arith.addf %831, %832 : vector<2x128xf32>
    %834 = vector.extract_strided_slice %833 {offsets = [0, 0], sizes = [2, 32], strides = [1, 1]} : vector<2x128xf32> to vector<2x32xf32>
    %835 = arith.negf %834 : vector<2x32xf32>
    %836 = math.exp %835 : vector<2x32xf32>
    %cst_209 = arith.constant 1.000000e+00 : f32
    %837 = vector.broadcast %cst_209 : f32 to vector<2x32xf32>
    %838 = arith.addf %837, %836 : vector<2x32xf32>
    %839 = arith.divf %837, %838 : vector<2x32xf32>
    %840 = vector.extract_strided_slice %833 {offsets = [0, 32], sizes = [2, 32], strides = [1, 1]} : vector<2x128xf32> to vector<2x32xf32>
    %841 = arith.negf %840 : vector<2x32xf32>
    %842 = math.exp %841 : vector<2x32xf32>
    %cst_210 = arith.constant 1.000000e+00 : f32
    %843 = vector.broadcast %cst_210 : f32 to vector<2x32xf32>
    %844 = arith.addf %843, %842 : vector<2x32xf32>
    %845 = arith.divf %843, %844 : vector<2x32xf32>
    %846 = vector.extract_strided_slice %833 {offsets = [0, 64], sizes = [2, 32], strides = [1, 1]} : vector<2x128xf32> to vector<2x32xf32>
    %847 = math.tanh %846 : vector<2x32xf32>
    %848 = vector.extract_strided_slice %833 {offsets = [0, 96], sizes = [2, 32], strides = [1, 1]} : vector<2x128xf32> to vector<2x32xf32>
    %849 = arith.negf %848 : vector<2x32xf32>
    %850 = math.exp %849 : vector<2x32xf32>
    %cst_211 = arith.constant 1.000000e+00 : f32
    %851 = vector.broadcast %cst_211 : f32 to vector<2x32xf32>
    %852 = arith.addf %851, %850 : vector<2x32xf32>
    %853 = arith.divf %851, %852 : vector<2x32xf32>
    %854 = arith.mulf %845, %791 : vector<2x32xf32>
    %855 = arith.mulf %839, %847 : vector<2x32xf32>
    %856 = arith.addf %854, %855 : vector<2x32xf32>
    %857 = math.tanh %856 : vector<2x32xf32>
    %858 = arith.mulf %853, %857 : vector<2x32xf32>
    %859 = arith.index_cast %829 : i32 to index
    %c0_212 = arith.constant 0 : index
    %860 = vector.load %arg12[%859, %c0_212] : memref<32x32xf32, #tpu.memory_space<vmem>>, vector<2x32xf32>
    tpu.vector_store %arg12[%859, %c0_212], %858 {strides = array<i32>} : memref<32x32xf32, #tpu.memory_space<vmem>>, vector<2x32xf32>,
    %c13_i32 = arith.constant 13 : i32
    %c2_i32_213 = arith.constant 2 : i32
    %861 = arith.muli %c13_i32, %c2_i32_213 : i32
    %862 = arith.index_cast %861 : i32 to index
    %c0_214 = arith.constant 0 : index
    %863 = vector.load %arg9[%862, %c0_214] : memref<32x128xf32, #tpu.memory_space<vmem>>, vector<2x128xf32>
    %cst_215 = arith.constant dense<0.000000e+00> : vector<2x128xf32>
    %864 = tpu.matmul %825, %13, %cst_215 {dimension_numbers = #tpu.dot_dimension_numbers<[1], [0], [0], [1], [0, 0, 1, 1], [], []>} : vector<2x32xf32>, vector<32x128xf32>, vector<2x128xf32> -> vector<2x128xf32>
    %865 = arith.addf %863, %864 : vector<2x128xf32>
    %866 = vector.extract_strided_slice %865 {offsets = [0, 0], sizes = [2, 32], strides = [1, 1]} : vector<2x128xf32> to vector<2x32xf32>
    %867 = arith.negf %866 : vector<2x32xf32>
    %868 = math.exp %867 : vector<2x32xf32>
    %cst_216 = arith.constant 1.000000e+00 : f32
    %869 = vector.broadcast %cst_216 : f32 to vector<2x32xf32>
    %870 = arith.addf %869, %868 : vector<2x32xf32>
    %871 = arith.divf %869, %870 : vector<2x32xf32>
    %872 = vector.extract_strided_slice %865 {offsets = [0, 32], sizes = [2, 32], strides = [1, 1]} : vector<2x128xf32> to vector<2x32xf32>
    %873 = arith.negf %872 : vector<2x32xf32>
    %874 = math.exp %873 : vector<2x32xf32>
    %cst_217 = arith.constant 1.000000e+00 : f32
    %875 = vector.broadcast %cst_217 : f32 to vector<2x32xf32>
    %876 = arith.addf %875, %874 : vector<2x32xf32>
    %877 = arith.divf %875, %876 : vector<2x32xf32>
    %878 = vector.extract_strided_slice %865 {offsets = [0, 64], sizes = [2, 32], strides = [1, 1]} : vector<2x128xf32> to vector<2x32xf32>
    %879 = math.tanh %878 : vector<2x32xf32>
    %880 = vector.extract_strided_slice %865 {offsets = [0, 96], sizes = [2, 32], strides = [1, 1]} : vector<2x128xf32> to vector<2x32xf32>
    %881 = arith.negf %880 : vector<2x32xf32>
    %882 = math.exp %881 : vector<2x32xf32>
    %cst_218 = arith.constant 1.000000e+00 : f32
    %883 = vector.broadcast %cst_218 : f32 to vector<2x32xf32>
    %884 = arith.addf %883, %882 : vector<2x32xf32>
    %885 = arith.divf %883, %884 : vector<2x32xf32>
    %886 = arith.mulf %877, %823 : vector<2x32xf32>
    %887 = arith.mulf %871, %879 : vector<2x32xf32>
    %888 = arith.addf %886, %887 : vector<2x32xf32>
    %889 = math.tanh %888 : vector<2x32xf32>
    %890 = arith.mulf %885, %889 : vector<2x32xf32>
    %891 = arith.index_cast %861 : i32 to index
    %c0_219 = arith.constant 0 : index
    %892 = vector.load %arg11[%891, %c0_219] : memref<32x32xf32, #tpu.memory_space<vmem>>, vector<2x32xf32>
    tpu.vector_store %arg11[%891, %c0_219], %890 {strides = array<i32>} : memref<32x32xf32, #tpu.memory_space<vmem>>, vector<2x32xf32>,
    %c15_i32_220 = arith.constant 15 : i32
    %893 = arith.subi %c15_i32_220, %c13_i32 : i32
    %c2_i32_221 = arith.constant 2 : i32
    %894 = arith.muli %893, %c2_i32_221 : i32
    %895 = arith.index_cast %894 : i32 to index
    %c0_222 = arith.constant 0 : index
    %896 = vector.load %arg10[%895, %c0_222] : memref<32x128xf32, #tpu.memory_space<vmem>>, vector<2x128xf32>
    %cst_223 = arith.constant dense<0.000000e+00> : vector<2x128xf32>
    %897 = tpu.matmul %858, %14, %cst_223 {dimension_numbers = #tpu.dot_dimension_numbers<[1], [0], [0], [1], [0, 0, 1, 1], [], []>} : vector<2x32xf32>, vector<32x128xf32>, vector<2x128xf32> -> vector<2x128xf32>
    %898 = arith.addf %896, %897 : vector<2x128xf32>
    %899 = vector.extract_strided_slice %898 {offsets = [0, 0], sizes = [2, 32], strides = [1, 1]} : vector<2x128xf32> to vector<2x32xf32>
    %900 = arith.negf %899 : vector<2x32xf32>
    %901 = math.exp %900 : vector<2x32xf32>
    %cst_224 = arith.constant 1.000000e+00 : f32
    %902 = vector.broadcast %cst_224 : f32 to vector<2x32xf32>
    %903 = arith.addf %902, %901 : vector<2x32xf32>
    %904 = arith.divf %902, %903 : vector<2x32xf32>
    %905 = vector.extract_strided_slice %898 {offsets = [0, 32], sizes = [2, 32], strides = [1, 1]} : vector<2x128xf32> to vector<2x32xf32>
    %906 = arith.negf %905 : vector<2x32xf32>
    %907 = math.exp %906 : vector<2x32xf32>
    %cst_225 = arith.constant 1.000000e+00 : f32
    %908 = vector.broadcast %cst_225 : f32 to vector<2x32xf32>
    %909 = arith.addf %908, %907 : vector<2x32xf32>
    %910 = arith.divf %908, %909 : vector<2x32xf32>
    %911 = vector.extract_strided_slice %898 {offsets = [0, 64], sizes = [2, 32], strides = [1, 1]} : vector<2x128xf32> to vector<2x32xf32>
    %912 = math.tanh %911 : vector<2x32xf32>
    %913 = vector.extract_strided_slice %898 {offsets = [0, 96], sizes = [2, 32], strides = [1, 1]} : vector<2x128xf32> to vector<2x32xf32>
    %914 = arith.negf %913 : vector<2x32xf32>
    %915 = math.exp %914 : vector<2x32xf32>
    %cst_226 = arith.constant 1.000000e+00 : f32
    %916 = vector.broadcast %cst_226 : f32 to vector<2x32xf32>
    %917 = arith.addf %916, %915 : vector<2x32xf32>
    %918 = arith.divf %916, %917 : vector<2x32xf32>
    %919 = arith.mulf %910, %856 : vector<2x32xf32>
    %920 = arith.mulf %904, %912 : vector<2x32xf32>
    %921 = arith.addf %919, %920 : vector<2x32xf32>
    %922 = math.tanh %921 : vector<2x32xf32>
    %923 = arith.mulf %918, %922 : vector<2x32xf32>
    %924 = arith.index_cast %894 : i32 to index
    %c0_227 = arith.constant 0 : index
    %925 = vector.load %arg12[%924, %c0_227] : memref<32x32xf32, #tpu.memory_space<vmem>>, vector<2x32xf32>
    tpu.vector_store %arg12[%924, %c0_227], %923 {strides = array<i32>} : memref<32x32xf32, #tpu.memory_space<vmem>>, vector<2x32xf32>,
    %c14_i32 = arith.constant 14 : i32
    %c2_i32_228 = arith.constant 2 : i32
    %926 = arith.muli %c14_i32, %c2_i32_228 : i32
    %927 = arith.index_cast %926 : i32 to index
    %c0_229 = arith.constant 0 : index
    %928 = vector.load %arg9[%927, %c0_229] : memref<32x128xf32, #tpu.memory_space<vmem>>, vector<2x128xf32>
    %cst_230 = arith.constant dense<0.000000e+00> : vector<2x128xf32>
    %929 = tpu.matmul %890, %13, %cst_230 {dimension_numbers = #tpu.dot_dimension_numbers<[1], [0], [0], [1], [0, 0, 1, 1], [], []>} : vector<2x32xf32>, vector<32x128xf32>, vector<2x128xf32> -> vector<2x128xf32>
    %930 = arith.addf %928, %929 : vector<2x128xf32>
    %931 = vector.extract_strided_slice %930 {offsets = [0, 0], sizes = [2, 32], strides = [1, 1]} : vector<2x128xf32> to vector<2x32xf32>
    %932 = arith.negf %931 : vector<2x32xf32>
    %933 = math.exp %932 : vector<2x32xf32>
    %cst_231 = arith.constant 1.000000e+00 : f32
    %934 = vector.broadcast %cst_231 : f32 to vector<2x32xf32>
    %935 = arith.addf %934, %933 : vector<2x32xf32>
    %936 = arith.divf %934, %935 : vector<2x32xf32>
    %937 = vector.extract_strided_slice %930 {offsets = [0, 32], sizes = [2, 32], strides = [1, 1]} : vector<2x128xf32> to vector<2x32xf32>
    %938 = arith.negf %937 : vector<2x32xf32>
    %939 = math.exp %938 : vector<2x32xf32>
    %cst_232 = arith.constant 1.000000e+00 : f32
    %940 = vector.broadcast %cst_232 : f32 to vector<2x32xf32>
    %941 = arith.addf %940, %939 : vector<2x32xf32>
    %942 = arith.divf %940, %941 : vector<2x32xf32>
    %943 = vector.extract_strided_slice %930 {offsets = [0, 64], sizes = [2, 32], strides = [1, 1]} : vector<2x128xf32> to vector<2x32xf32>
    %944 = math.tanh %943 : vector<2x32xf32>
    %945 = vector.extract_strided_slice %930 {offsets = [0, 96], sizes = [2, 32], strides = [1, 1]} : vector<2x128xf32> to vector<2x32xf32>
    %946 = arith.negf %945 : vector<2x32xf32>
    %947 = math.exp %946 : vector<2x32xf32>
    %cst_233 = arith.constant 1.000000e+00 : f32
    %948 = vector.broadcast %cst_233 : f32 to vector<2x32xf32>
    %949 = arith.addf %948, %947 : vector<2x32xf32>
    %950 = arith.divf %948, %949 : vector<2x32xf32>
    %951 = arith.mulf %942, %888 : vector<2x32xf32>
    %952 = arith.mulf %936, %944 : vector<2x32xf32>
    %953 = arith.addf %951, %952 : vector<2x32xf32>
    %954 = math.tanh %953 : vector<2x32xf32>
    %955 = arith.mulf %950, %954 : vector<2x32xf32>
    %956 = arith.index_cast %926 : i32 to index
    %c0_234 = arith.constant 0 : index
    %957 = vector.load %arg11[%956, %c0_234] : memref<32x32xf32, #tpu.memory_space<vmem>>, vector<2x32xf32>
    tpu.vector_store %arg11[%956, %c0_234], %955 {strides = array<i32>} : memref<32x32xf32, #tpu.memory_space<vmem>>, vector<2x32xf32>,
    %c15_i32_235 = arith.constant 15 : i32
    %958 = arith.subi %c15_i32_235, %c14_i32 : i32
    %c2_i32_236 = arith.constant 2 : i32
    %959 = arith.muli %958, %c2_i32_236 : i32
    %960 = arith.index_cast %959 : i32 to index
    %c0_237 = arith.constant 0 : index
    %961 = vector.load %arg10[%960, %c0_237] : memref<32x128xf32, #tpu.memory_space<vmem>>, vector<2x128xf32>
    %cst_238 = arith.constant dense<0.000000e+00> : vector<2x128xf32>
    %962 = tpu.matmul %923, %14, %cst_238 {dimension_numbers = #tpu.dot_dimension_numbers<[1], [0], [0], [1], [0, 0, 1, 1], [], []>} : vector<2x32xf32>, vector<32x128xf32>, vector<2x128xf32> -> vector<2x128xf32>
    %963 = arith.addf %961, %962 : vector<2x128xf32>
    %964 = vector.extract_strided_slice %963 {offsets = [0, 0], sizes = [2, 32], strides = [1, 1]} : vector<2x128xf32> to vector<2x32xf32>
    %965 = arith.negf %964 : vector<2x32xf32>
    %966 = math.exp %965 : vector<2x32xf32>
    %cst_239 = arith.constant 1.000000e+00 : f32
    %967 = vector.broadcast %cst_239 : f32 to vector<2x32xf32>
    %968 = arith.addf %967, %966 : vector<2x32xf32>
    %969 = arith.divf %967, %968 : vector<2x32xf32>
    %970 = vector.extract_strided_slice %963 {offsets = [0, 32], sizes = [2, 32], strides = [1, 1]} : vector<2x128xf32> to vector<2x32xf32>
    %971 = arith.negf %970 : vector<2x32xf32>
    %972 = math.exp %971 : vector<2x32xf32>
    %cst_240 = arith.constant 1.000000e+00 : f32
    %973 = vector.broadcast %cst_240 : f32 to vector<2x32xf32>
    %974 = arith.addf %973, %972 : vector<2x32xf32>
    %975 = arith.divf %973, %974 : vector<2x32xf32>
    %976 = vector.extract_strided_slice %963 {offsets = [0, 64], sizes = [2, 32], strides = [1, 1]} : vector<2x128xf32> to vector<2x32xf32>
    %977 = math.tanh %976 : vector<2x32xf32>
    %978 = vector.extract_strided_slice %963 {offsets = [0, 96], sizes = [2, 32], strides = [1, 1]} : vector<2x128xf32> to vector<2x32xf32>
    %979 = arith.negf %978 : vector<2x32xf32>
    %980 = math.exp %979 : vector<2x32xf32>
    %cst_241 = arith.constant 1.000000e+00 : f32
    %981 = vector.broadcast %cst_241 : f32 to vector<2x32xf32>
    %982 = arith.addf %981, %980 : vector<2x32xf32>
    %983 = arith.divf %981, %982 : vector<2x32xf32>
    %984 = arith.mulf %975, %921 : vector<2x32xf32>
    %985 = arith.mulf %969, %977 : vector<2x32xf32>
    %986 = arith.addf %984, %985 : vector<2x32xf32>
    %987 = math.tanh %986 : vector<2x32xf32>
    %988 = arith.mulf %983, %987 : vector<2x32xf32>
    %989 = arith.index_cast %959 : i32 to index
    %c0_242 = arith.constant 0 : index
    %990 = vector.load %arg12[%989, %c0_242] : memref<32x32xf32, #tpu.memory_space<vmem>>, vector<2x32xf32>
    tpu.vector_store %arg12[%989, %c0_242], %988 {strides = array<i32>} : memref<32x32xf32, #tpu.memory_space<vmem>>, vector<2x32xf32>,
    %c15_i32_243 = arith.constant 15 : i32
    %c2_i32_244 = arith.constant 2 : i32
    %991 = arith.muli %c15_i32_243, %c2_i32_244 : i32
    %992 = arith.index_cast %991 : i32 to index
    %c0_245 = arith.constant 0 : index
    %993 = vector.load %arg9[%992, %c0_245] : memref<32x128xf32, #tpu.memory_space<vmem>>, vector<2x128xf32>
    %cst_246 = arith.constant dense<0.000000e+00> : vector<2x128xf32>
    %994 = tpu.matmul %955, %13, %cst_246 {dimension_numbers = #tpu.dot_dimension_numbers<[1], [0], [0], [1], [0, 0, 1, 1], [], []>} : vector<2x32xf32>, vector<32x128xf32>, vector<2x128xf32> -> vector<2x128xf32>
    %995 = arith.addf %993, %994 : vector<2x128xf32>
    %996 = vector.extract_strided_slice %995 {offsets = [0, 0], sizes = [2, 32], strides = [1, 1]} : vector<2x128xf32> to vector<2x32xf32>
    %997 = arith.negf %996 : vector<2x32xf32>
    %998 = math.exp %997 : vector<2x32xf32>
    %cst_247 = arith.constant 1.000000e+00 : f32
    %999 = vector.broadcast %cst_247 : f32 to vector<2x32xf32>
    %1000 = arith.addf %999, %998 : vector<2x32xf32>
    %1001 = arith.divf %999, %1000 : vector<2x32xf32>
    %1002 = vector.extract_strided_slice %995 {offsets = [0, 32], sizes = [2, 32], strides = [1, 1]} : vector<2x128xf32> to vector<2x32xf32>
    %1003 = arith.negf %1002 : vector<2x32xf32>
    %1004 = math.exp %1003 : vector<2x32xf32>
    %cst_248 = arith.constant 1.000000e+00 : f32
    %1005 = vector.broadcast %cst_248 : f32 to vector<2x32xf32>
    %1006 = arith.addf %1005, %1004 : vector<2x32xf32>
    %1007 = arith.divf %1005, %1006 : vector<2x32xf32>
    %1008 = vector.extract_strided_slice %995 {offsets = [0, 64], sizes = [2, 32], strides = [1, 1]} : vector<2x128xf32> to vector<2x32xf32>
    %1009 = math.tanh %1008 : vector<2x32xf32>
    %1010 = vector.extract_strided_slice %995 {offsets = [0, 96], sizes = [2, 32], strides = [1, 1]} : vector<2x128xf32> to vector<2x32xf32>
    %1011 = arith.negf %1010 : vector<2x32xf32>
    %1012 = math.exp %1011 : vector<2x32xf32>
    %cst_249 = arith.constant 1.000000e+00 : f32
    %1013 = vector.broadcast %cst_249 : f32 to vector<2x32xf32>
    %1014 = arith.addf %1013, %1012 : vector<2x32xf32>
    %1015 = arith.divf %1013, %1014 : vector<2x32xf32>
    %1016 = arith.mulf %1007, %953 : vector<2x32xf32>
    %1017 = arith.mulf %1001, %1009 : vector<2x32xf32>
    %1018 = arith.addf %1016, %1017 : vector<2x32xf32>
    %1019 = math.tanh %1018 : vector<2x32xf32>
    %1020 = arith.mulf %1015, %1019 : vector<2x32xf32>
    %1021 = arith.index_cast %991 : i32 to index
    %c0_250 = arith.constant 0 : index
    %1022 = vector.load %arg11[%1021, %c0_250] : memref<32x32xf32, #tpu.memory_space<vmem>>, vector<2x32xf32>
    tpu.vector_store %arg11[%1021, %c0_250], %1020 {strides = array<i32>} : memref<32x32xf32, #tpu.memory_space<vmem>>, vector<2x32xf32>,
    %c15_i32_251 = arith.constant 15 : i32
    %1023 = arith.subi %c15_i32_251, %c15_i32_243 : i32
    %c2_i32_252 = arith.constant 2 : i32
    %1024 = arith.muli %1023, %c2_i32_252 : i32
    %1025 = arith.index_cast %1024 : i32 to index
    %c0_253 = arith.constant 0 : index
    %1026 = vector.load %arg10[%1025, %c0_253] : memref<32x128xf32, #tpu.memory_space<vmem>>, vector<2x128xf32>
    %cst_254 = arith.constant dense<0.000000e+00> : vector<2x128xf32>
    %1027 = tpu.matmul %988, %14, %cst_254 {dimension_numbers = #tpu.dot_dimension_numbers<[1], [0], [0], [1], [0, 0, 1, 1], [], []>} : vector<2x32xf32>, vector<32x128xf32>, vector<2x128xf32> -> vector<2x128xf32>
    %1028 = arith.addf %1026, %1027 : vector<2x128xf32>
    %1029 = vector.extract_strided_slice %1028 {offsets = [0, 0], sizes = [2, 32], strides = [1, 1]} : vector<2x128xf32> to vector<2x32xf32>
    %1030 = arith.negf %1029 : vector<2x32xf32>
    %1031 = math.exp %1030 : vector<2x32xf32>
    %cst_255 = arith.constant 1.000000e+00 : f32
    %1032 = vector.broadcast %cst_255 : f32 to vector<2x32xf32>
    %1033 = arith.addf %1032, %1031 : vector<2x32xf32>
    %1034 = arith.divf %1032, %1033 : vector<2x32xf32>
    %1035 = vector.extract_strided_slice %1028 {offsets = [0, 32], sizes = [2, 32], strides = [1, 1]} : vector<2x128xf32> to vector<2x32xf32>
    %1036 = arith.negf %1035 : vector<2x32xf32>
    %1037 = math.exp %1036 : vector<2x32xf32>
    %cst_256 = arith.constant 1.000000e+00 : f32
    %1038 = vector.broadcast %cst_256 : f32 to vector<2x32xf32>
    %1039 = arith.addf %1038, %1037 : vector<2x32xf32>
    %1040 = arith.divf %1038, %1039 : vector<2x32xf32>
    %1041 = vector.extract_strided_slice %1028 {offsets = [0, 64], sizes = [2, 32], strides = [1, 1]} : vector<2x128xf32> to vector<2x32xf32>
    %1042 = math.tanh %1041 : vector<2x32xf32>
    %1043 = vector.extract_strided_slice %1028 {offsets = [0, 96], sizes = [2, 32], strides = [1, 1]} : vector<2x128xf32> to vector<2x32xf32>
    %1044 = arith.negf %1043 : vector<2x32xf32>
    %1045 = math.exp %1044 : vector<2x32xf32>
    %cst_257 = arith.constant 1.000000e+00 : f32
    %1046 = vector.broadcast %cst_257 : f32 to vector<2x32xf32>
    %1047 = arith.addf %1046, %1045 : vector<2x32xf32>
    %1048 = arith.divf %1046, %1047 : vector<2x32xf32>
    %1049 = arith.mulf %1040, %986 : vector<2x32xf32>
    %1050 = arith.mulf %1034, %1042 : vector<2x32xf32>
    %1051 = arith.addf %1049, %1050 : vector<2x32xf32>
    %1052 = math.tanh %1051 : vector<2x32xf32>
    %1053 = arith.mulf %1048, %1052 : vector<2x32xf32>
    %1054 = arith.index_cast %1024 : i32 to index
    %c0_258 = arith.constant 0 : index
    %1055 = vector.load %arg12[%1054, %c0_258] : memref<32x32xf32, #tpu.memory_space<vmem>>, vector<2x32xf32>
    tpu.vector_store %arg12[%1054, %c0_258], %1053 {strides = array<i32>} : memref<32x32xf32, #tpu.memory_space<vmem>>, vector<2x32xf32>,
    %c16_i32 = arith.constant 16 : i32
    %c0_259 = arith.constant 0 : index
    %c0_260 = arith.constant 0 : index
    %1056 = vector.load %arg11[%c0_259, %c0_260] : memref<32x32xf32, #tpu.memory_space<vmem>>, vector<32x32xf32>
    %c0_261 = arith.constant 0 : index
    %c0_262 = arith.constant 0 : index
    %1057 = vector.load %arg12[%c0_261, %c0_262] : memref<32x32xf32, #tpu.memory_space<vmem>>, vector<32x32xf32>
    %1058 = tpu.concatenate %1056, %1057 in 1 : vector<32x32xf32>, vector<32x32xf32> -> vector<32x64xf32>
    %c0_263 = arith.constant 0 : index
    %c0_264 = arith.constant 0 : index
    %1059 = vector.load %arg8[%c0_263, %c0_264] : memref<32x64xf32, #tpu.memory_space<vmem>>, vector<32x64xf32>
    tpu.vector_store %arg8[%c0_263, %c0_264], %1058 {strides = array<i32>} : memref<32x64xf32, #tpu.memory_space<vmem>>, vector<32x64xf32>,
    return
  }
  func.func @transform_0(%arg0: i32) -> (i32, i32) {
    %c0_i32 = arith.constant 0 : i32
    %c0_i32_0 = arith.constant 0 : i32
    %c0_i32_1 = arith.constant 0 : i32
    return %c0_i32, %c0_i32_0 : i32, i32
  }
  func.func @transform_1(%arg0: i32) -> (i32, i32) {
    %c0_i32 = arith.constant 0 : i32
    %c0_i32_0 = arith.constant 0 : i32
    %c0_i32_1 = arith.constant 0 : i32
    return %c0_i32, %c0_i32_0 : i32, i32
  }
  func.func @transform_2(%arg0: i32) -> (i32, i32) {
    %c0_i32 = arith.constant 0 : i32
    %c0_i32_0 = arith.constant 0 : i32
    %c0_i32_1 = arith.constant 0 : i32
    return %c0_i32, %c0_i32_0 : i32, i32
  }
  func.func @transform_3(%arg0: i32) -> (i32, i32) {
    %c0_i32 = arith.constant 0 : i32
    %c0_i32_0 = arith.constant 0 : i32
    %c0_i32_1 = arith.constant 0 : i32
    return %c0_i32, %c0_i32_0 : i32, i32
  }
  func.func @transform_4(%arg0: i32) -> (i32, i32) {
    %c0_i32 = arith.constant 0 : i32
    %c0_i32_0 = arith.constant 0 : i32
    %c0_i32_1 = arith.constant 0 : i32
    return %c0_i32, %c0_i32_0 : i32, i32
  }
  func.func @transform_5(%arg0: i32) -> (i32, i32) {
    %c0_i32 = arith.constant 0 : i32
    %c0_i32_0 = arith.constant 0 : i32
    %c0_i32_1 = arith.constant 0 : i32
    return %c0_i32, %c0_i32_0 : i32, i32
  }
  func.func @transform_6(%arg0: i32) -> (i32, i32) {
    %c0_i32 = arith.constant 0 : i32
    %c0_i32_0 = arith.constant 0 : i32
    %c0_i32_1 = arith.constant 0 : i32
    return %c0_i32, %c0_i32_0 : i32, i32
  }
  func.func @transform_7(%arg0: i32) -> (i32, i32) {
    %c0_i32 = arith.constant 0 : i32
    %c0_i32_0 = arith.constant 0 : i32
    %c0_i32_1 = arith.constant 0 : i32
    return %c0_i32, %c0_i32_0 : i32, i32
  }
}

</mosaic_0001>

<llo_original>
// kernel: tpu_custom_call.1
$region0: #{tpu_custom_call.1}
  #allocation0 [shape = 'u32[]', space=smem, size = 0x4, offset = 0x4, fixed_abs, tag = 'smem constant byte address 0x4 - core index']
  #allocation1 [shape = 'u32[144,128]{1,0:T(1,128)}', space=vmem, size = 0x12000, scoped, tag = 'internal scratch']
  #allocation2 [shape = 'f32[32,128]{1,0:T(8,128)}', space=vmem, size = 0x4000, scoped, tag = 'scratch operand']
  #allocation3 [shape = 'f32[32,128]{1,0:T(8,128)}', space=vmem, size = 0x4000, scoped, tag = 'scratch operand']
  #allocation4 [shape = 'f32[32,32]{1,0:T(8,128)}', space=vmem, size = 0x4000, scoped, tag = 'scratch operand']
  #allocation5 [shape = 'f32[32,32]{1,0:T(8,128)}', space=vmem, size = 0x4000, scoped, tag = 'scratch operand']
  %s0 = inlined_call_operand.vmem [shape: f32[32,16], index: 0, kind: input, shape index: {}]
  %s1 = inlined_call_operand.hbm [shape: f32[16,128], index: 1, kind: input, shape index: {}]
  %s2 = inlined_call_operand.vmem [shape: f32[32,128], index: 2, kind: input, shape index: {}]
  %s3 = inlined_call_operand.vmem [shape: f32[1,128], index: 3, kind: input, shape index: {}]
  %s4 = inlined_call_operand.hbm [shape: f32[16,128], index: 4, kind: input, shape index: {}]
  %s5 = inlined_call_operand.vmem [shape: f32[32,128], index: 5, kind: input, shape index: {}]
  %s6 = inlined_call_operand.vmem [shape: f32[1,128], index: 6, kind: input, shape index: {}]
  %s7 = inlined_call_operand.hbm [shape: f32[32,64], index: 7, kind: output, shape index: {}]
  %s8 = sld [smem:[#allocation0]]
  $region46: #{tpu_custom_call.1} parent=0
    _
  %s10 = ssub.s32 1, %s8
  %s11 = scalar_select 0, %s10, %s8
  $region1: #{tpu_custom_call.1} parent=0
    #allocation6 [shape = 'u8[8192]{0}', space=vmem, size = 0x2000, scoped, tag = 'input window, operand 1, single buffered']
    #allocation7 [shape = 's32[1]{0}', space=sflag, size = 0x4, scoped, tag = 'scoped memory for tpu_custom_call.1']
    #allocation8 [shape = 's32[1]{0}', space=sflag, size = 0x4, scoped, tag = 'scoped memory for tpu_custom_call.1']
    #allocation9 [shape = 'u8[8192]{0}', space=vmem, size = 0x2000, scoped, tag = 'input window, operand 4, single buffered']
    #allocation10 [shape = 's32[1]{0}', space=sflag, size = 0x4, scoped, tag = 'scoped memory for tpu_custom_call.1']
    #allocation11 [shape = 'u8[16384]{0}', space=vmem, size = 0x4000, scoped, tag = 'output window, operand 0, single buffered']
    %12 = vsyncpa [#allocation7], 0
    %13 = vsyncpa [#allocation10], 0
    %14 = vsyncpa [#allocation8], 0
    // Predicated region
    $region2: #{tpu_custom_call.1} parent=1 // pred_check
      _
    $region3: #{tpu_custom_call.1} parent=1 // pred_check_branch
      %16 = sbr.rel (0) target = $region5
    $region4: #{tpu_custom_call.1} parent=1 // pred_region
      _
    $region5: #{tpu_custom_call.1} parent=1 // pred_fallthru
      _
    // Predicated region
    $region6: #{tpu_custom_call.1} parent=1 // pred_check
      _
    $region7: #{tpu_custom_call.1} parent=1 // pred_check_branch
      %18 = sbr.rel (0) target = $region9
    $region8: #{tpu_custom_call.1} parent=1 // pred_region
      %s20 = ssub.s32 256, 256
      %21 = vsyncadd [#allocation7], %s20
      %s22 = sshll.u32 [#allocation6], 4
      %s23 = int_to_ptr.vmem [resolvable:$true] %s22
      %28 = dma.hbm_to_vmem [thread:$0]  %s1, 256, %s23, [#allocation7], 128, 128, 8
    $region9: #{tpu_custom_call.1} parent=1 // pred_fallthru
      _
    // Predicated region
    $region10: #{tpu_custom_call.1} parent=1 // pred_check
      _
    $region11: #{tpu_custom_call.1} parent=1 // pred_check_branch
      %30 = sbr.rel (0) target = $region13
    $region12: #{tpu_custom_call.1} parent=1 // pred_region
      _
    $region13: #{tpu_custom_call.1} parent=1 // pred_fallthru
      _
    // Predicated region
    $region14: #{tpu_custom_call.1} parent=1 // pred_check
      _
    $region15: #{tpu_custom_call.1} parent=1 // pred_check_branch
      %32 = sbr.rel (0) target = $region17
    $region16: #{tpu_custom_call.1} parent=1 // pred_region
      _
    $region17: #{tpu_custom_call.1} parent=1 // pred_fallthru
      _
    // Predicated region
    $region18: #{tpu_custom_call.1} parent=1 // pred_check
      _
    $region19: #{tpu_custom_call.1} parent=1 // pred_check_branch
      %34 = sbr.rel (0) target = $region21
    $region20: #{tpu_custom_call.1} parent=1 // pred_region
      %s36 = ssub.s32 256, 256
      %37 = vsyncadd [#allocation10], %s36
      %s38 = sshll.u32 [#allocation9], 4
      %s39 = int_to_ptr.vmem [resolvable:$true] %s38
      %44 = dma.hbm_to_vmem [thread:$0]  %s4, 256, %s39, [#allocation10], 128, 128, 8
    $region21: #{tpu_custom_call.1} parent=1 // pred_fallthru
      _
    // Predicated region
    $region22: #{tpu_custom_call.1} parent=1 // pred_check
      _
    $region23: #{tpu_custom_call.1} parent=1 // pred_check_branch
      %46 = sbr.rel (0) target = $region25
    $region24: #{tpu_custom_call.1} parent=1 // pred_region
      _
    $region25: #{tpu_custom_call.1} parent=1 // pred_fallthru
      _
    // Predicated region
    $region26: #{tpu_custom_call.1} parent=1 // pred_check
      _
    $region27: #{tpu_custom_call.1} parent=1 // pred_check_branch
      %48 = sbr.rel (0) target = $region29
    $region28: #{tpu_custom_call.1} parent=1 // pred_region
      _
    $region29: #{tpu_custom_call.1} parent=1 // pred_fallthru
      _
    // Predicated region
    $region30: #{tpu_custom_call.1} parent=1 // pred_check
      _
    $region31: #{tpu_custom_call.1} parent=1 // pred_check_branch
      %50 = sbr.rel (0) target = $region33
    $region32: #{tpu_custom_call.1} parent=1 // pred_region
      %51 = dma.done [#allocation7], 256
    $region33: #{tpu_custom_call.1} parent=1 // pred_fallthru
      _
    // Predicated region
    $region34: #{tpu_custom_call.1} parent=1 // pred_check
      _
    $region35: #{tpu_custom_call.1} parent=1 // pred_check_branch
      %53 = sbr.rel (0) target = $region37
    $region36: #{tpu_custom_call.1} parent=1 // pred_region
      %54 = dma.done [#allocation10], 256
    $region37: #{tpu_custom_call.1} parent=1 // pred_fallthru
      _
    %v55 = vld [vmem:[%s0] sm:$0xff]
    %v56 = vld [vmem:[%s0 + $0x8] sm:$0xff]
    %v57 = vld [vmem:[%s0 + $0x10] sm:$0xff]
    %v58 = vld [vmem:[%s0 + $0x18] sm:$0xff]
    %v59 = vld [vmem:[#allocation6] sm:$0xff]
    %v60 = vld [vmem:[#allocation6 + $0x8] sm:$0xff]
    %v61 = vld [vmem:[%s3] sm:$0x1]
    %v63 = vlaneseq
    %v64 = vshrl.u32 %v63, 7
    %v65 = vsub.s32 0, %v64
    %v66 = vrot.slane %v61, %v65
    %vm68 = vcmask 130048
    %v70 = vsel %vm68, %v55, 0
    %v73 = vsel %vm68, %v56, 0
    %v76 = vsel %vm68, %v57, 0
    %v79 = vsel %vm68, %v58, 0
    %81 = vmatprep.subr.mxu0 0.0
    %82 = vmatpush1.msra.mxu0 %v59
    %83 = vmatprep.subr.mxu0 0.0
    %84 = vmatpush1.msra.mxu0 %v60
    %85 = vmatprep.subr.mxu0 0.0
    %86 = vmatpush1.msra.mxu0 0.0
    %87 = vmatprep.subr.mxu0 0.0
    %88 = vmatpush1.msra.mxu0 0.0
    %89 = vmatprep.subr.mxu0 0.0
    %90 = vmatpush1.msra.mxu0 0.0
    %91 = vmatprep.subr.mxu0 0.0
    %92 = vmatpush1.msra.mxu0 0.0
    %93 = vmatprep.subr.mxu0 0.0
    %94 = vmatpush1.msra.mxu0 0.0
    %95 = vmatprep.subr.mxu0 0.0
    %96 = vmatpush1.msra.mxu0 0.0
    %97 = vmatprep.subr.mxu0 0.0
    %98 = vmatpush1.msra.mxu0 0.0
    %99 = vmatprep.subr.mxu0 0.0
    %100 = vmatpush1.msra.mxu0 0.0
    %101 = vmatprep.subr.mxu0 0.0
    %102 = vmatpush1.msra.mxu0 0.0
    %103 = vmatprep.subr.mxu0 0.0
    %104 = vmatpush1.msra.mxu0 0.0
    %105 = vmatprep.subr.mxu0 0.0
    %106 = vmatpush1.msra.mxu0 0.0
    %107 = vmatprep.subr.mxu0 0.0
    %108 = vmatpush1.msra.mxu0 0.0
    %109 = vmatprep.subr.mxu0 0.0
    %110 = vmatpush1.msra.mxu0 0.0
    %111 = vmatprep.subr.mxu0 0.0
    %112 = vmatpush1.msra.mxu0 0.0
    %113 = vmatprep.subr.mxu0 0.0
    %114 = vmatpush1.msra.mxu0 0.0
    %115 = vmatprep.subr.mxu0 0.0
    %116 = vmatpush1.msra.mxu0 0.0
    %117 = vmatprep.subr.mxu0 0.0
    %118 = vmatpush1.msra.mxu0 0.0
    %119 = vmatprep.subr.mxu0 0.0
    %120 = vmatpush1.msra.mxu0 0.0
    %121 = vmatprep.subr.mxu0 0.0
    %122 = vmatpush1.msra.mxu0 0.0
    %123 = vmatprep.subr.mxu0 0.0
    %124 = vmatpush1.msra.mxu0 0.0
    %125 = vmatprep.subr.mxu0 0.0
    %126 = vmatpush1.msra.mxu0 0.0
    %127 = vmatprep.subr.mxu0 0.0
    %128 = vmatpush1.msra.mxu0 0.0
    %129 = vmatprep.subr.mxu0 0.0
    %130 = vmatpush1.msra.mxu0 0.0
    %131 = vmatprep.subr.mxu0 0.0
    %132 = vmatpush1.msra.mxu0 0.0
    %133 = vmatprep.subr.mxu0 0.0
    %134 = vmatpush1.msra.mxu0 0.0
    %135 = vmatprep.subr.mxu0 0.0
    %136 = vmatpush1.msra.mxu0 0.0
    %137 = vmatprep.subr.mxu0 0.0
    %138 = vmatpush1.msra.mxu0 0.0
    %139 = vmatprep.subr.mxu0 0.0
    %140 = vmatpush1.msra.mxu0 0.0
    %141 = vmatprep.subr.mxu0 0.0
    %142 = vmatpush1.msra.mxu0 0.0
    %143 = vmatprep.subr.mxu0 0.0
    %144 = vmatpush1.msra.mxu0 0.0
    %145 = vmatprep.mubr.f32.mxu0 0.0
    %146 = vmatmul.mubr.f32.gmra.mrb[0].mxu0 %v70
    %v147 = vpop.f32.mrb[0].mxu0
    %v148 = vadd.f32 %v66, %v147
    %v149 = vpop.f32.mrb[0].mxu0
    %150 = vmatprep.mubr.f32.mxu0 0.0
    %151 = vmatmul.mubr.f32.gmra.mrb[0].mxu0 %v73
    %v152 = vpop.f32.mrb[0].mxu0
    %v153 = vadd.f32 %v66, %v152
    %v154 = vpop.f32.mrb[0].mxu0
    %155 = vmatprep.mubr.f32.mxu0 0.0
    %156 = vmatmul.mubr.f32.gmra.mrb[0].mxu0 %v76
    %v157 = vpop.f32.mrb[0].mxu0
    %v158 = vadd.f32 %v66, %v157
    %v159 = vpop.f32.mrb[0].mxu0
    %160 = vmatprep.mubr.f32.mxu0 0.0
    %161 = vmatmul.mubr.f32.gmra.mrb[0].mxu0 %v79
    %v162 = vpop.f32.mrb[0].mxu0
    %v163 = vadd.f32 %v66, %v162
    %v164 = vpop.f32.mrb[0].mxu0
    %165 = vdwg.mxu0
    %166 = vst [vmem:[#allocation2] sm:$0xff] %v148
    %167 = vst [vmem:[#allocation2 + $0x8] sm:$0xff] %v153
    %168 = vst [vmem:[#allocation2 + $0x10] sm:$0xff] %v158
    %169 = vst [vmem:[#allocation2 + $0x18] sm:$0xff] %v163
    %v170 = vld [vmem:[#allocation9] sm:$0xff]
    %v171 = vld [vmem:[#allocation9 + $0x8] sm:$0xff]
    %v172 = vld [vmem:[%s6] sm:$0x1]
    %v174 = vlaneseq
    %v175 = vshrl.u32 %v174, 7
    %v176 = vsub.s32 0, %v175
    %v177 = vrot.slane %v172, %v176
    %179 = vmatprep.subr.mxu0 0.0
    %180 = vmatpush1.msra.mxu0 %v170
    %181 = vmatprep.subr.mxu0 0.0
    %182 = vmatpush1.msra.mxu0 %v171
    %183 = vmatprep.subr.mxu0 0.0
    %184 = vmatpush1.msra.mxu0 0.0
    %185 = vmatprep.subr.mxu0 0.0
    %186 = vmatpush1.msra.mxu0 0.0
    %187 = vmatprep.subr.mxu0 0.0
    %188 = vmatpush1.msra.mxu0 0.0
    %189 = vmatprep.subr.mxu0 0.0
    %190 = vmatpush1.msra.mxu0 0.0
    %191 = vmatprep.subr.mxu0 0.0
    %192 = vmatpush1.msra.mxu0 0.0
    %193 = vmatprep.subr.mxu0 0.0
    %194 = vmatpush1.msra.mxu0 0.0
    %195 = vmatprep.subr.mxu0 0.0
    %196 = vmatpush1.msra.mxu0 0.0
    %197 = vmatprep.subr.mxu0 0.0
    %198 = vmatpush1.msra.mxu0 0.0
    %199 = vmatprep.subr.mxu0 0.0
    %200 = vmatpush1.msra.mxu0 0.0
    %201 = vmatprep.subr.mxu0 0.0
    %202 = vmatpush1.msra.mxu0 0.0
    %203 = vmatprep.subr.mxu0 0.0
    %204 = vmatpush1.msra.mxu0 0.0
    %205 = vmatprep.subr.mxu0 0.0
    %206 = vmatpush1.msra.mxu0 0.0
    %207 = vmatprep.subr.mxu0 0.0
    %208 = vmatpush1.msra.mxu0 0.0
    %209 = vmatprep.subr.mxu0 0.0
    %210 = vmatpush1.msra.mxu0 0.0
    %211 = vmatprep.subr.mxu0 0.0
    %212 = vmatpush1.msra.mxu0 0.0
    %213 = vmatprep.subr.mxu0 0.0
    %214 = vmatpush1.msra.mxu0 0.0
    %215 = vmatprep.subr.mxu0 0.0
    %216 = vmatpush1.msra.mxu0 0.0
    %217 = vmatprep.subr.mxu0 0.0
    %218 = vmatpush1.msra.mxu0 0.0
    %219 = vmatprep.subr.mxu0 0.0
    %220 = vmatpush1.msra.mxu0 0.0
    %221 = vmatprep.subr.mxu0 0.0
    %222 = vmatpush1.msra.mxu0 0.0
    %223 = vmatprep.subr.mxu0 0.0
    %224 = vmatpush1.msra.mxu0 0.0
    %225 = vmatprep.subr.mxu0 0.0
    %226 = vmatpush1.msra.mxu0 0.0
    %227 = vmatprep.subr.mxu0 0.0
    %228 = vmatpush1.msra.mxu0 0.0
    %229 = vmatprep.subr.mxu0 0.0
    %230 = vmatpush1.msra.mxu0 0.0
    %231 = vmatprep.subr.mxu0 0.0
    %232 = vmatpush1.msra.mxu0 0.0
    %233 = vmatprep.subr.mxu0 0.0
    %234 = vmatpush1.msra.mxu0 0.0
    %235 = vmatprep.subr.mxu0 0.0
    %236 = vmatpush1.msra.mxu0 0.0
    %237 = vmatprep.subr.mxu0 0.0
    %238 = vmatpush1.msra.mxu0 0.0
    %239 = vmatprep.subr.mxu0 0.0
    %240 = vmatpush1.msra.mxu0 0.0
    %241 = vmatprep.subr.mxu0 0.0
    %242 = vmatpush1.msra.mxu0 0.0
    %243 = vmatprep.mubr.f32.mxu0 0.0
    %244 = vmatmul.mubr.f32.gmra.mrb[0].mxu0 %v70
    %v245 = vpop.f32.mrb[0].mxu0
    %v246 = vadd.f32 %v177, %v245
    %v247 = vpop.f32.mrb[0].mxu0
    %248 = vmatprep.mubr.f32.mxu0 0.0
    %249 = vmatmul.mubr.f32.gmra.mrb[0].mxu0 %v73
    %v250 = vpop.f32.mrb[0].mxu0
    %v251 = vadd.f32 %v177, %v250
    %v252 = vpop.f32.mrb[0].mxu0
    %253 = vmatprep.mubr.f32.mxu0 0.0
    %254 = vmatmul.mubr.f32.gmra.mrb[0].mxu0 %v76
    %v255 = vpop.f32.mrb[0].mxu0
    %v256 = vadd.f32 %v177, %v255
    %v257 = vpop.f32.mrb[0].mxu0
    %258 = vmatprep.mubr.f32.mxu0 0.0
    %259 = vmatmul.mubr.f32.gmra.mrb[0].mxu0 %v79
    %v260 = vpop.f32.mrb[0].mxu0
    %v261 = vadd.f32 %v177, %v260
    %v262 = vpop.f32.mrb[0].mxu0
    %263 = vdwg.mxu0
    %264 = vst [vmem:[#allocation3] sm:$0xff] %v246
    %265 = vst [vmem:[#allocation3 + $0x8] sm:$0xff] %v251
    %266 = vst [vmem:[#allocation3 + $0x10] sm:$0xff] %v256
    %267 = vst [vmem:[#allocation3 + $0x18] sm:$0xff] %v261
    %v268 = vld [vmem:[%s2] sm:$0xff]
    %v269 = vld [vmem:[%s2 + $0x8] sm:$0xff]
    %v270 = vld [vmem:[%s2 + $0x10] sm:$0xff]
    %v271 = vld [vmem:[%s2 + $0x18] sm:$0xff]
    %v272 = vld [vmem:[%s5] sm:$0xff]
    %v273 = vld [vmem:[%s5 + $0x8] sm:$0xff]
    %v274 = vld [vmem:[%s5 + $0x10] sm:$0xff]
    %v275 = vld [vmem:[%s5 + $0x18] sm:$0xff]
    %v276 = vld [vmem:[#allocation2] sm:$0x3]
    %vm277 = vcmask 261120
    %v279 = vsel %vm277, 0.0, 0
    %281 = vmatprep.subr.mxu0 0.0
    %282 = vmatpush1.msra.mxu0 %v268
    %283 = vmatprep.subr.mxu0 0.0
    %284 = vmatpush1.msra.mxu0 %v269
    %285 = vmatprep.subr.mxu0 0.0
    %286 = vmatpush1.msra.mxu0 %v270
    %287 = vmatprep.subr.mxu0 0.0
    %288 = vmatpush1.msra.mxu0 %v271
    %289 = vmatprep.subr.mxu0 0.0
    %290 = vmatpush1.msra.mxu0 0.0
    %291 = vmatprep.subr.mxu0 0.0
    %292 = vmatpush1.msra.mxu0 0.0
    %293 = vmatprep.subr.mxu0 0.0
    %294 = vmatpush1.msra.mxu0 0.0
    %295 = vmatprep.subr.mxu0 0.0
    %296 = vmatpush1.msra.mxu0 0.0
    %297 = vmatprep.subr.mxu0 0.0
    %298 = vmatpush1.msra.mxu0 0.0
    %299 = vmatprep.subr.mxu0 0.0
    %300 = vmatpush1.msra.mxu0 0.0
    %301 = vmatprep.subr.mxu0 0.0
    %302 = vmatpush1.msra.mxu0 0.0
    %303 = vmatprep.subr.mxu0 0.0
    %304 = vmatpush1.msra.mxu0 0.0
    %305 = vmatprep.subr.mxu0 0.0
    %306 = vmatpush1.msra.mxu0 0.0
    %307 = vmatprep.subr.mxu0 0.0
    %308 = vmatpush1.msra.mxu0 0.0
    %309 = vmatprep.subr.mxu0 0.0
    %310 = vmatpush1.msra.mxu0 0.0
    %311 = vmatprep.subr.mxu0 0.0
    %312 = vmatpush1.msra.mxu0 0.0
    %313 = vmatprep.subr.mxu0 0.0
    %314 = vmatpush1.msra.mxu0 0.0
    %315 = vmatprep.subr.mxu0 0.0
    %316 = vmatpush1.msra.mxu0 0.0
    %317 = vmatprep.subr.mxu0 0.0
    %318 = vmatpush1.msra.mxu0 0.0
    %319 = vmatprep.subr.mxu0 0.0
    %320 = vmatpush1.msra.mxu0 0.0
    %321 = vmatprep.subr.mxu0 0.0
    %322 = vmatpush1.msra.mxu0 0.0
    %323 = vmatprep.subr.mxu0 0.0
    %324 = vmatpush1.msra.mxu0 0.0
    %325 = vmatprep.subr.mxu0 0.0
    %326 = vmatpush1.msra.mxu0 0.0
    %327 = vmatprep.subr.mxu0 0.0
    %328 = vmatpush1.msra.mxu0 0.0
    %329 = vmatprep.subr.mxu0 0.0
    %330 = vmatpush1.msra.mxu0 0.0
    %331 = vmatprep.subr.mxu0 0.0
    %332 = vmatpush1.msra.mxu0 0.0
    %333 = vmatprep.subr.mxu0 0.0
    %334 = vmatpush1.msra.mxu0 0.0
    %335 = vmatprep.subr.mxu0 0.0
    %336 = vmatpush1.msra.mxu0 0.0
    %337 = vmatprep.subr.mxu0 0.0
    %338 = vmatpush1.msra.mxu0 0.0
    %339 = vmatprep.subr.mxu0 0.0
    %340 = vmatpush1.msra.mxu0 0.0
    %341 = vmatprep.subr.mxu0 0.0
    %342 = vmatpush1.msra.mxu0 0.0
    %343 = vmatprep.subr.mxu0 0.0
    %344 = vmatpush1.msra.mxu0 0.0
    %345 = vmatprep.mubr.f32.mxu0 0.0
    %346 = vmatmul.mubr.f32.gmra.mrb[0].mxu0 %v279
    %v347 = vpop.f32.mrb[0].mxu0
    %v348 = vadd.f32 0.0, %v347
    %v349 = vpop.f32.mrb[0].mxu0
    %350 = vdwg.mxu0
    %v351 = vadd.f32 %v276, %v348
    %v352 = vxor.u32 %v351, 2147483648
    %v353 = vmul.f32 %v352, 1.442695
    %v354 = vpow.pop %v353
    %v355 = vadd.f32 %v354, 1.0
    %v356 = vrcp.pop %v355
    %v357 = vmul.f32 1.0, %v356
    %v358 = vtanh.pop %v351
    %v359 = vmul.f32 %v357, 0.0
    %361 = vrot.lane.b32.xlu0 %v358, 64
    %v362 = vpop.permute.xlu0 %361
    %v364 = vmul.f32 %v357, %v362
    %366 = vrot.lane.b32.xlu0 %v364, 32
    %v367 = vpop.permute.xlu0 %366
    %v369 = vadd.f32 %v359, %v367
    %v370 = vtanh.pop %v369
    %372 = vrot.lane.b32.xlu0 %v370, 64
    %v373 = vpop.permute.xlu0 %372
    %v375 = vmul.f32 %v357, %v373
    %377 = vrot.lane.b32.xlu0 %v375, 32
    %v378 = vpop.permute.xlu0 %377
    %vm380 = vcmask 254976
    %381 = vst.msk [vmem:[#allocation4] sm:$0x3] %vm380, %v378
    %v382 = vld [vmem:[#allocation3 + $0x1e] sm:$0x3]
    %383 = vmatprep.subr.mxu0 0.0
    %384 = vmatpush1.msra.mxu0 %v272
    %385 = vmatprep.subr.mxu0 0.0
    %386 = vmatpush1.msra.mxu0 %v273
    %387 = vmatprep.subr.mxu0 0.0
    %388 = vmatpush1.msra.mxu0 %v274
    %389 = vmatprep.subr.mxu0 0.0
    %390 = vmatpush1.msra.mxu0 %v275
    %391 = vmatprep.subr.mxu0 0.0
    %392 = vmatpush1.msra.mxu0 0.0
    %393 = vmatprep.subr.mxu0 0.0
    %394 = vmatpush1.msra.mxu0 0.0
    %395 = vmatprep.subr.mxu0 0.0
    %396 = vmatpush1.msra.mxu0 0.0
    %397 = vmatprep.subr.mxu0 0.0
    %398 = vmatpush1.msra.mxu0 0.0
    %399 = vmatprep.subr.mxu0 0.0
    %400 = vmatpush1.msra.mxu0 0.0
    %401 = vmatprep.subr.mxu0 0.0
    %402 = vmatpush1.msra.mxu0 0.0
    %403 = vmatprep.subr.mxu0 0.0
    %404 = vmatpush1.msra.mxu0 0.0
    %405 = vmatprep.subr.mxu0 0.0
    %406 = vmatpush1.msra.mxu0 0.0
    %407 = vmatprep.subr.mxu0 0.0
    %408 = vmatpush1.msra.mxu0 0.0
    %409 = vmatprep.subr.mxu0 0.0
    %410 = vmatpush1.msra.mxu0 0.0
    %411 = vmatprep.subr.mxu0 0.0
    %412 = vmatpush1.msra.mxu0 0.0
    %413 = vmatprep.subr.mxu0 0.0
    %414 = vmatpush1.msra.mxu0 0.0
    %415 = vmatprep.subr.mxu0 0.0
    %416 = vmatpush1.msra.mxu0 0.0
    %417 = vmatprep.subr.mxu0 0.0
    %418 = vmatpush1.msra.mxu0 0.0
    %419 = vmatprep.subr.mxu0 0.0
    %420 = vmatpush1.msra.mxu0 0.0
    %421 = vmatprep.subr.mxu0 0.0
    %422 = vmatpush1.msra.mxu0 0.0
    %423 = vmatprep.subr.mxu0 0.0
    %424 = vmatpush1.msra.mxu0 0.0
    %425 = vmatprep.subr.mxu0 0.0
    %426 = vmatpush1.msra.mxu0 0.0
    %427 = vmatprep.subr.mxu0 0.0
    %428 = vmatpush1.msra.mxu0 0.0
    %429 = vmatprep.subr.mxu0 0.0
    %430 = vmatpush1.msra.mxu0 0.0
    %431 = vmatprep.subr.mxu0 0.0
    %432 = vmatpush1.msra.mxu0 0.0
    %433 = vmatprep.subr.mxu0 0.0
    %434 = vmatpush1.msra.mxu0 0.0
    %435 = vmatprep.subr.mxu0 0.0
    %436 = vmatpush1.msra.mxu0 0.0
    %437 = vmatprep.subr.mxu0 0.0
    %438 = vmatpush1.msra.mxu0 0.0
    %439 = vmatprep.subr.mxu0 0.0
    %440 = vmatpush1.msra.mxu0 0.0
    %441 = vmatprep.subr.mxu0 0.0
    %442 = vmatpush1.msra.mxu0 0.0
    %443 = vmatprep.subr.mxu0 0.0
    %444 = vmatpush1.msra.mxu0 0.0
    %445 = vmatprep.subr.mxu0 0.0
    %446 = vmatpush1.msra.mxu0 0.0
    %447 = vmatprep.mubr.f32.mxu0 0.0
    %448 = vmatmul.mubr.f32.gmra.mrb[0].mxu0 %v279
    %v449 = vpop.f32.mrb[0].mxu0
    %v450 = vadd.f32 0.0, %v449
    %v451 = vpop.f32.mrb[0].mxu0
    %452 = vdwg.mxu0
    %v453 = vadd.f32 %v382, %v450
    %v454 = vxor.u32 %v453, 2147483648
    %v455 = vmul.f32 %v454, 1.442695
    %v456 = vpow.pop %v455
    %v457 = vadd.f32 %v456, 1.0
    %v458 = vrcp.pop %v457
    %v459 = vmul.f32 1.0, %v458
    %v460 = vtanh.pop %v453
    %v461 = vmul.f32 %v459, 0.0
    %463 = vrot.lane.b32.xlu0 %v460, 64
    %v464 = vpop.permute.xlu0 %463
    %v466 = vmul.f32 %v459, %v464
    %468 = vrot.lane.b32.xlu0 %v466, 32
    %v469 = vpop.permute.xlu0 %468
    %v471 = vadd.f32 %v461, %v469
    %v472 = vtanh.pop %v471
    %474 = vrot.lane.b32.xlu0 %v472, 64
    %v475 = vpop.permute.xlu0 %474
    %v477 = vmul.f32 %v459, %v475
    %479 = vrot.lane.b32.xlu0 %v477, 32
    %v480 = vpop.permute.xlu0 %479
    %482 = vst.msk [vmem:[#allocation5 + $0x1e] sm:$0x3] %vm380, %v480
    %v483 = vld [vmem:[#allocation2 + $0x2] sm:$0x3]
    %v484 = vsel %vm277, %v378, 0
    %486 = vmatprep.subr.mxu0 0.0
    %487 = vmatpush1.msra.mxu0 %v268
    %488 = vmatprep.subr.mxu0 0.0
    %489 = vmatpush1.msra.mxu0 %v269
    %490 = vmatprep.subr.mxu0 0.0
    %491 = vmatpush1.msra.mxu0 %v270
    %492 = vmatprep.subr.mxu0 0.0
    %493 = vmatpush1.msra.mxu0 %v271
    %494 = vmatprep.subr.mxu0 0.0
    %495 = vmatpush1.msra.mxu0 0.0
    %496 = vmatprep.subr.mxu0 0.0
    %497 = vmatpush1.msra.mxu0 0.0
    %498 = vmatprep.subr.mxu0 0.0
    %499 = vmatpush1.msra.mxu0 0.0
    %500 = vmatprep.subr.mxu0 0.0
    %501 = vmatpush1.msra.mxu0 0.0
    %502 = vmatprep.subr.mxu0 0.0
    %503 = vmatpush1.msra.mxu0 0.0
    %504 = vmatprep.subr.mxu0 0.0
    %505 = vmatpush1.msra.mxu0 0.0
    %506 = vmatprep.subr.mxu0 0.0
    %507 = vmatpush1.msra.mxu0 0.0
    %508 = vmatprep.subr.mxu0 0.0
    %509 = vmatpush1.msra.mxu0 0.0
    %510 = vmatprep.subr.mxu0 0.0
    %511 = vmatpush1.msra.mxu0 0.0
    %512 = vmatprep.subr.mxu0 0.0
    %513 = vmatpush1.msra.mxu0 0.0
    %514 = vmatprep.subr.mxu0 0.0
    %515 = vmatpush1.msra.mxu0 0.0
    %516 = vmatprep.subr.mxu0 0.0
    %517 = vmatpush1.msra.mxu0 0.0
    %518 = vmatprep.subr.mxu0 0.0
    %519 = vmatpush1.msra.mxu0 0.0
    %520 = vmatprep.subr.mxu0 0.0
    %521 = vmatpush1.msra.mxu0 0.0
    %522 = vmatprep.subr.mxu0 0.0
    %523 = vmatpush1.msra.mxu0 0.0
    %524 = vmatprep.subr.mxu0 0.0
    %525 = vmatpush1.msra.mxu0 0.0
    %526 = vmatprep.subr.mxu0 0.0
    %527 = vmatpush1.msra.mxu0 0.0
    %528 = vmatprep.subr.mxu0 0.0
    %529 = vmatpush1.msra.mxu0 0.0
    %530 = vmatprep.subr.mxu0 0.0
    %531 = vmatpush1.msra.mxu0 0.0
    %532 = vmatprep.subr.mxu0 0.0
    %533 = vmatpush1.msra.mxu0 0.0
    %534 = vmatprep.subr.mxu0 0.0
    %535 = vmatpush1.msra.mxu0 0.0
    %536 = vmatprep.subr.mxu0 0.0
    %537 = vmatpush1.msra.mxu0 0.0
    %538 = vmatprep.subr.mxu0 0.0
    %539 = vmatpush1.msra.mxu0 0.0
    %540 = vmatprep.subr.mxu0 0.0
    %541 = vmatpush1.msra.mxu0 0.0
    %542 = vmatprep.subr.mxu0 0.0
    %543 = vmatpush1.msra.mxu0 0.0
    %544 = vmatprep.subr.mxu0 0.0
    %545 = vmatpush1.msra.mxu0 0.0
    %546 = vmatprep.subr.mxu0 0.0
    %547 = vmatpush1.msra.mxu0 0.0
    %548 = vmatprep.subr.mxu0 0.0
    %549 = vmatpush1.msra.mxu0 0.0
    %550 = vmatprep.mubr.f32.mxu0 0.0
    %551 = vmatmul.mubr.f32.gmra.mrb[0].mxu0 %v484
    %v552 = vpop.f32.mrb[0].mxu0
    %v553 = vadd.f32 0.0, %v552
    %v554 = vpop.f32.mrb[0].mxu0
    %555 = vdwg.mxu0
    %v556 = vadd.f32 %v483, %v553
    %v557 = vxor.u32 %v556, 2147483648
    %v558 = vmul.f32 %v557, 1.442695
    %v559 = vpow.pop %v558
    %v560 = vadd.f32 %v559, 1.0
    %v561 = vrcp.pop %v560
    %v562 = vmul.f32 1.0, %v561
    %v563 = vtanh.pop %v556
    %v564 = vmul.f32 %v562, %v369
    %566 = vrot.lane.b32.xlu0 %v563, 64
    %v567 = vpop.permute.xlu0 %566
    %v569 = vmul.f32 %v562, %v567
    %571 = vrot.lane.b32.xlu0 %v569, 32
    %v572 = vpop.permute.xlu0 %571
    %v574 = vadd.f32 %v564, %v572
    %v575 = vtanh.pop %v574
    %577 = vrot.lane.b32.xlu0 %v575, 64
    %v578 = vpop.permute.xlu0 %577
    %v580 = vmul.f32 %v562, %v578
    %582 = vrot.lane.b32.xlu0 %v580, 32
    %v583 = vpop.permute.xlu0 %582
    %585 = vst.msk [vmem:[#allocation4 + $0x2] sm:$0x3] %vm380, %v583
    %v586 = vld [vmem:[#allocation3 + $0x1c] sm:$0x3]
    %v587 = vsel %vm277, %v480, 0
    %589 = vmatprep.subr.mxu0 0.0
    %590 = vmatpush1.msra.mxu0 %v272
    %591 = vmatprep.subr.mxu0 0.0
    %592 = vmatpush1.msra.mxu0 %v273
    %593 = vmatprep.subr.mxu0 0.0
    %594 = vmatpush1.msra.mxu0 %v274
    %595 = vmatprep.subr.mxu0 0.0
    %596 = vmatpush1.msra.mxu0 %v275
    %597 = vmatprep.subr.mxu0 0.0
    %598 = vmatpush1.msra.mxu0 0.0
    %599 = vmatprep.subr.mxu0 0.0
    %600 = vmatpush1.msra.mxu0 0.0
    %601 = vmatprep.subr.mxu0 0.0
    %602 = vmatpush1.msra.mxu0 0.0
    %603 = vmatprep.subr.mxu0 0.0
    %604 = vmatpush1.msra.mxu0 0.0
    %605 = vmatprep.subr.mxu0 0.0
    %606 = vmatpush1.msra.mxu0 0.0
    %607 = vmatprep.subr.mxu0 0.0
    %608 = vmatpush1.msra.mxu0 0.0
    %609 = vmatprep.subr.mxu0 0.0
    %610 = vmatpush1.msra.mxu0 0.0
    %611 = vmatprep.subr.mxu0 0.0
    %612 = vmatpush1.msra.mxu0 0.0
    %613 = vmatprep.subr.mxu0 0.0
    %614 = vmatpush1.msra.mxu0 0.0
    %615 = vmatprep.subr.mxu0 0.0
    %616 = vmatpush1.msra.mxu0 0.0
    %617 = vmatprep.subr.mxu0 0.0
    %618 = vmatpush1.msra.mxu0 0.0
    %619 = vmatprep.subr.mxu0 0.0
    %620 = vmatpush1.msra.mxu0 0.0
    %621 = vmatprep.subr.mxu0 0.0
    %622 = vmatpush1.msra.mxu0 0.0
    %623 = vmatprep.subr.mxu0 0.0
    %624 = vmatpush1.msra.mxu0 0.0
    %625 = vmatprep.subr.mxu0 0.0
    %626 = vmatpush1.msra.mxu0 0.0
    %627 = vmatprep.subr.mxu0 0.0
    %628 = vmatpush1.msra.mxu0 0.0
    %629 = vmatprep.subr.mxu0 0.0
    %630 = vmatpush1.msra.mxu0 0.0
    %631 = vmatprep.subr.mxu0 0.0
    %632 = vmatpush1.msra.mxu0 0.0
    %633 = vmatprep.subr.mxu0 0.0
    %634 = vmatpush1.msra.mxu0 0.0
    %635 = vmatprep.subr.mxu0 0.0
    %636 = vmatpush1.msra.mxu0 0.0
    %637 = vmatprep.subr.mxu0 0.0
    %638 = vmatpush1.msra.mxu0 0.0
    %639 = vmatprep.subr.mxu0 0.0
    %640 = vmatpush1.msra.mxu0 0.0
    %641 = vmatprep.subr.mxu0 0.0
    %642 = vmatpush1.msra.mxu0 0.0
    %643 = vmatprep.subr.mxu0 0.0
    %644 = vmatpush1.msra.mxu0 0.0
    %645 = vmatprep.subr.mxu0 0.0
    %646 = vmatpush1.msra.mxu0 0.0
    %647 = vmatprep.subr.mxu0 0.0
    %648 = vmatpush1.msra.mxu0 0.0
    %649 = vmatprep.subr.mxu0 0.0
    %650 = vmatpush1.msra.mxu0 0.0
    %651 = vmatprep.subr.mxu0 0.0
    %652 = vmatpush1.msra.mxu0 0.0
    %653 = vmatprep.mubr.f32.mxu0 0.0
    %654 = vmatmul.mubr.f32.gmra.mrb[0].mxu0 %v587
    %v655 = vpop.f32.mrb[0].mxu0
    %v656 = vadd.f32 0.0, %v655
    %v657 = vpop.f32.mrb[0].mxu0
    %658 = vdwg.mxu0
    %v659 = vadd.f32 %v586, %v656
    %v660 = vxor.u32 %v659, 2147483648
    %v661 = vmul.f32 %v660, 1.442695
    %v662 = vpow.pop %v661
    %v663 = vadd.f32 %v662, 1.0
    %v664 = vrcp.pop %v663
    %v665 = vmul.f32 1.0, %v664
    %v666 = vtanh.pop %v659
    %v667 = vmul.f32 %v665, %v471
    %669 = vrot.lane.b32.xlu0 %v666, 64
    %v670 = vpop.permute.xlu0 %669
    %v672 = vmul.f32 %v665, %v670
    %674 = vrot.lane.b32.xlu0 %v672, 32
    %v675 = vpop.permute.xlu0 %674
    %v677 = vadd.f32 %v667, %v675
    %v678 = vtanh.pop %v677
    %680 = vrot.lane.b32.xlu0 %v678, 64
    %v681 = vpop.permute.xlu0 %680
    %v683 = vmul.f32 %v665, %v681
    %685 = vrot.lane.b32.xlu0 %v683, 32
    %v686 = vpop.permute.xlu0 %685
    %688 = vst.msk [vmem:[#allocation5 + $0x1c] sm:$0x3] %vm380, %v686
    %v689 = vld [vmem:[#allocation2 + $0x4] sm:$0x3]
    %v690 = vsel %vm277, %v583, 0
    %692 = vmatprep.subr.mxu0 0.0
    %693 = vmatpush1.msra.mxu0 %v268
    %694 = vmatprep.subr.mxu0 0.0
    %695 = vmatpush1.msra.mxu0 %v269
    %696 = vmatprep.subr.mxu0 0.0
    %697 = vmatpush1.msra.mxu0 %v270
    %698 = vmatprep.subr.mxu0 0.0
    %699 = vmatpush1.msra.mxu0 %v271
    %700 = vmatprep.subr.mxu0 0.0
    %701 = vmatpush1.msra.mxu0 0.0
    %702 = vmatprep.subr.mxu0 0.0
    %703 = vmatpush1.msra.mxu0 0.0
    %704 = vmatprep.subr.mxu0 0.0
    %705 = vmatpush1.msra.mxu0 0.0
    %706 = vmatprep.subr.mxu0 0.0
    %707 = vmatpush1.msra.mxu0 0.0
    %708 = vmatprep.subr.mxu0 0.0
    %709 = vmatpush1.msra.mxu0 0.0
    %710 = vmatprep.subr.mxu0 0.0
    %711 = vmatpush1.msra.mxu0 0.0
    %712 = vmatprep.subr.mxu0 0.0
    %713 = vmatpush1.msra.mxu0 0.0
    %714 = vmatprep.subr.mxu0 0.0
    %715 = vmatpush1.msra.mxu0 0.0
    %716 = vmatprep.subr.mxu0 0.0
    %717 = vmatpush1.msra.mxu0 0.0
    %718 = vmatprep.subr.mxu0 0.0
    %719 = vmatpush1.msra.mxu0 0.0
    %720 = vmatprep.subr.mxu0 0.0
    %721 = vmatpush1.msra.mxu0 0.0
    %722 = vmatprep.subr.mxu0 0.0
    %723 = vmatpush1.msra.mxu0 0.0
    %724 = vmatprep.subr.mxu0 0.0
    %725 = vmatpush1.msra.mxu0 0.0
    %726 = vmatprep.subr.mxu0 0.0
    %727 = vmatpush1.msra.mxu0 0.0
    %728 = vmatprep.subr.mxu0 0.0
    %729 = vmatpush1.msra.mxu0 0.0
    %730 = vmatprep.subr.mxu0 0.0
    %731 = vmatpush1.msra.mxu0 0.0
    %732 = vmatprep.subr.mxu0 0.0
    %733 = vmatpush1.msra.mxu0 0.0
    %734 = vmatprep.subr.mxu0 0.0
    %735 = vmatpush1.msra.mxu0 0.0
    %736 = vmatprep.subr.mxu0 0.0
    %737 = vmatpush1.msra.mxu0 0.0
    %738 = vmatprep.subr.mxu0 0.0
    %739 = vmatpush1.msra.mxu0 0.0
    %740 = vmatprep.subr.mxu0 0.0
    %741 = vmatpush1.msra.mxu0 0.0
    %742 = vmatprep.subr.mxu0 0.0
    %743 = vmatpush1.msra.mxu0 0.0
    %744 = vmatprep.subr.mxu0 0.0
    %745 = vmatpush1.msra.mxu0 0.0
    %746 = vmatprep.subr.mxu0 0.0
    %747 = vmatpush1.msra.mxu0 0.0
    %748 = vmatprep.subr.mxu0 0.0
    %749 = vmatpush1.msra.mxu0 0.0
    %750 = vmatprep.subr.mxu0 0.0
    %751 = vmatpush1.msra.mxu0 0.0
    %752 = vmatprep.subr.mxu0 0.0
    %753 = vmatpush1.msra.mxu0 0.0
    %754 = vmatprep.subr.mxu0 0.0
    %755 = vmatpush1.msra.mxu0 0.0
    %756 = vmatprep.mubr.f32.mxu0 0.0
    %757 = vmatmul.mubr.f32.gmra.mrb[0].mxu0 %v690
    %v758 = vpop.f32.mrb[0].mxu0
    %v759 = vadd.f32 0.0, %v758
    %v760 = vpop.f32.mrb[0].mxu0
    %761 = vdwg.mxu0
    %v762 = vadd.f32 %v689, %v759
    %v763 = vxor.u32 %v762, 2147483648
    %v764 = vmul.f32 %v763, 1.442695
    %v765 = vpow.pop %v764
    %v766 = vadd.f32 %v765, 1.0
    %v767 = vrcp.pop %v766
    %v768 = vmul.f32 1.0, %v767
    %v769 = vtanh.pop %v762
    %v770 = vmul.f32 %v768, %v574
    %772 = vrot.lane.b32.xlu0 %v769, 64
    %v773 = vpop.permute.xlu0 %772
    %v775 = vmul.f32 %v768, %v773
    %777 = vrot.lane.b32.xlu0 %v775, 32
    %v778 = vpop.permute.xlu0 %777
    %v780 = vadd.f32 %v770, %v778
    %v781 = vtanh.pop %v780
    %783 = vrot.lane.b32.xlu0 %v781, 64
    %v784 = vpop.permute.xlu0 %783
    %v786 = vmul.f32 %v768, %v784
    %788 = vrot.lane.b32.xlu0 %v786, 32
    %v789 = vpop.permute.xlu0 %788
    %791 = vst.msk [vmem:[#allocation4 + $0x4] sm:$0x3] %vm380, %v789
    %v792 = vld [vmem:[#allocation3 + $0x1a] sm:$0x3]
    %v793 = vsel %vm277, %v686, 0
    %795 = vmatprep.subr.mxu0 0.0
    %796 = vmatpush1.msra.mxu0 %v272
    %797 = vmatprep.subr.mxu0 0.0
    %798 = vmatpush1.msra.mxu0 %v273
    %799 = vmatprep.subr.mxu0 0.0
    %800 = vmatpush1.msra.mxu0 %v274
    %801 = vmatprep.subr.mxu0 0.0
    %802 = vmatpush1.msra.mxu0 %v275
    %803 = vmatprep.subr.mxu0 0.0
    %804 = vmatpush1.msra.mxu0 0.0
    %805 = vmatprep.subr.mxu0 0.0
    %806 = vmatpush1.msra.mxu0 0.0
    %807 = vmatprep.subr.mxu0 0.0
    %808 = vmatpush1.msra.mxu0 0.0
    %809 = vmatprep.subr.mxu0 0.0
    %810 = vmatpush1.msra.mxu0 0.0
    %811 = vmatprep.subr.mxu0 0.0
    %812 = vmatpush1.msra.mxu0 0.0
    %813 = vmatprep.subr.mxu0 0.0
    %814 = vmatpush1.msra.mxu0 0.0
    %815 = vmatprep.subr.mxu0 0.0
    %816 = vmatpush1.msra.mxu0 0.0
    %817 = vmatprep.subr.mxu0 0.0
    %818 = vmatpush1.msra.mxu0 0.0
    %819 = vmatprep.subr.mxu0 0.0
    %820 = vmatpush1.msra.mxu0 0.0
    %821 = vmatprep.subr.mxu0 0.0
    %822 = vmatpush1.msra.mxu0 0.0
    %823 = vmatprep.subr.mxu0 0.0
    %824 = vmatpush1.msra.mxu0 0.0
    %825 = vmatprep.subr.mxu0 0.0
    %826 = vmatpush1.msra.mxu0 0.0
    %827 = vmatprep.subr.mxu0 0.0
    %828 = vmatpush1.msra.mxu0 0.0
    %829 = vmatprep.subr.mxu0 0.0
    %830 = vmatpush1.msra.mxu0 0.0
    %831 = vmatprep.subr.mxu0 0.0
    %832 = vmatpush1.msra.mxu0 0.0
    %833 = vmatprep.subr.mxu0 0.0
    %834 = vmatpush1.msra.mxu0 0.0
    %835 = vmatprep.subr.mxu0 0.0
    %836 = vmatpush1.msra.mxu0 0.0
    %837 = vmatprep.subr.mxu0 0.0
    %838 = vmatpush1.msra.mxu0 0.0
    %839 = vmatprep.subr.mxu0 0.0
    %840 = vmatpush1.msra.mxu0 0.0
    %841 = vmatprep.subr.mxu0 0.0
    %842 = vmatpush1.msra.mxu0 0.0
    %843 = vmatprep.subr.mxu0 0.0
    %844 = vmatpush1.msra.mxu0 0.0
    %845 = vmatprep.subr.mxu0 0.0
    %846 = vmatpush1.msra.mxu0 0.0
    %847 = vmatprep.subr.mxu0 0.0
    %848 = vmatpush1.msra.mxu0 0.0
    %849 = vmatprep.subr.mxu0 0.0
    %850 = vmatpush1.msra.mxu0 0.0
    %851 = vmatprep.subr.mxu0 0.0
    %852 = vmatpush1.msra.mxu0 0.0
    %853 = vmatprep.subr.mxu0 0.0
    %854 = vmatpush1.msra.mxu0 0.0
    %855 = vmatprep.subr.mxu0 0.0
    %856 = vmatpush1.msra.mxu0 0.0
    %857 = vmatprep.subr.mxu0 0.0
    %858 = vmatpush1.msra.mxu0 0.0
    %859 = vmatprep.mubr.f32.mxu0 0.0
    %860 = vmatmul.mubr.f32.gmra.mrb[0].mxu0 %v793
    %v861 = vpop.f32.mrb[0].mxu0
    %v862 = vadd.f32 0.0, %v861
    %v863 = vpop.f32.mrb[0].mxu0
    %864 = vdwg.mxu0
    %v865 = vadd.f32 %v792, %v862
    %v866 = vxor.u32 %v865, 2147483648
    %v867 = vmul.f32 %v866, 1.442695
    %v868 = vpow.pop %v867
    %v869 = vadd.f32 %v868, 1.0
    %v870 = vrcp.pop %v869
    %v871 = vmul.f32 1.0, %v870
    %v872 = vtanh.pop %v865
    %v873 = vmul.f32 %v871, %v677
    %875 = vrot.lane.b32.xlu0 %v872, 64
    %v876 = vpop.permute.xlu0 %875
    %v878 = vmul.f32 %v871, %v876
    %880 = vrot.lane.b32.xlu0 %v878, 32
    %v881 = vpop.permute.xlu0 %880
    %v883 = vadd.f32 %v873, %v881
    %v884 = vtanh.pop %v883
    %886 = vrot.lane.b32.xlu0 %v884, 64
    %v887 = vpop.permute.xlu0 %886
    %v889 = vmul.f32 %v871, %v887
    %891 = vrot.lane.b32.xlu0 %v889, 32
    %v892 = vpop.permute.xlu0 %891
    %894 = vst.msk [vmem:[#allocation5 + $0x1a] sm:$0x3] %vm380, %v892
    %v895 = vld [vmem:[#allocation2 + $0x6] sm:$0x3]
    %v896 = vsel %vm277, %v789, 0
    %898 = vmatprep.subr.mxu0 0.0
    %899 = vmatpush1.msra.mxu0 %v268
    %900 = vmatprep.subr.mxu0 0.0
    %901 = vmatpush1.msra.mxu0 %v269
    %902 = vmatprep.subr.mxu0 0.0
    %903 = vmatpush1.msra.mxu0 %v270
    %904 = vmatprep.subr.mxu0 0.0
    %905 = vmatpush1.msra.mxu0 %v271
    %906 = vmatprep.subr.mxu0 0.0
    %907 = vmatpush1.msra.mxu0 0.0
    %908 = vmatprep.subr.mxu0 0.0
    %909 = vmatpush1.msra.mxu0 0.0
    %910 = vmatprep.subr.mxu0 0.0
    %911 = vmatpush1.msra.mxu0 0.0
    %912 = vmatprep.subr.mxu0 0.0
    %913 = vmatpush1.msra.mxu0 0.0
    %914 = vmatprep.subr.mxu0 0.0
    %915 = vmatpush1.msra.mxu0 0.0
    %916 = vmatprep.subr.mxu0 0.0
    %917 = vmatpush1.msra.mxu0 0.0
    %918 = vmatprep.subr.mxu0 0.0
    %919 = vmatpush1.msra.mxu0 0.0
    %920 = vmatprep.subr.mxu0 0.0
    %921 = vmatpush1.msra.mxu0 0.0
    %922 = vmatprep.subr.mxu0 0.0
    %923 = vmatpush1.msra.mxu0 0.0
    %924 = vmatprep.subr.mxu0 0.0
    %925 = vmatpush1.msra.mxu0 0.0
    %926 = vmatprep.subr.mxu0 0.0
    %927 = vmatpush1.msra.mxu0 0.0
    %928 = vmatprep.subr.mxu0 0.0
    %929 = vmatpush1.msra.mxu0 0.0
    %930 = vmatprep.subr.mxu0 0.0
    %931 = vmatpush1.msra.mxu0 0.0
    %932 = vmatprep.subr.mxu0 0.0
    %933 = vmatpush1.msra.mxu0 0.0
    %934 = vmatprep.subr.mxu0 0.0
    %935 = vmatpush1.msra.mxu0 0.0
    %936 = vmatprep.subr.mxu0 0.0
    %937 = vmatpush1.msra.mxu0 0.0
    %938 = vmatprep.subr.mxu0 0.0
    %939 = vmatpush1.msra.mxu0 0.0
    %940 = vmatprep.subr.mxu0 0.0
    %941 = vmatpush1.msra.mxu0 0.0
    %942 = vmatprep.subr.mxu0 0.0
    %943 = vmatpush1.msra.mxu0 0.0
    %944 = vmatprep.subr.mxu0 0.0
    %945 = vmatpush1.msra.mxu0 0.0
    %946 = vmatprep.subr.mxu0 0.0
    %947 = vmatpush1.msra.mxu0 0.0
    %948 = vmatprep.subr.mxu0 0.0
    %949 = vmatpush1.msra.mxu0 0.0
    %950 = vmatprep.subr.mxu0 0.0
    %951 = vmatpush1.msra.mxu0 0.0
    %952 = vmatprep.subr.mxu0 0.0
    %953 = vmatpush1.msra.mxu0 0.0
    %954 = vmatprep.subr.mxu0 0.0
    %955 = vmatpush1.msra.mxu0 0.0
    %956 = vmatprep.subr.mxu0 0.0
    %957 = vmatpush1.msra.mxu0 0.0
    %958 = vmatprep.subr.mxu0 0.0
    %959 = vmatpush1.msra.mxu0 0.0
    %960 = vmatprep.subr.mxu0 0.0
    %961 = vmatpush1.msra.mxu0 0.0
    %962 = vmatprep.mubr.f32.mxu0 0.0
    %963 = vmatmul.mubr.f32.gmra.mrb[0].mxu0 %v896
    %v964 = vpop.f32.mrb[0].mxu0
    %v965 = vadd.f32 0.0, %v964
    %v966 = vpop.f32.mrb[0].mxu0
    %967 = vdwg.mxu0
    %v968 = vadd.f32 %v895, %v965
    %v969 = vxor.u32 %v968, 2147483648
    %v970 = vmul.f32 %v969, 1.442695
    %v971 = vpow.pop %v970
    %v972 = vadd.f32 %v971, 1.0
    %v973 = vrcp.pop %v972
    %v974 = vmul.f32 1.0, %v973
    %v975 = vtanh.pop %v968
    %v976 = vmul.f32 %v974, %v780
    %978 = vrot.lane.b32.xlu0 %v975, 64
    %v979 = vpop.permute.xlu0 %978
    %v981 = vmul.f32 %v974, %v979
    %983 = vrot.lane.b32.xlu0 %v981, 32
    %v984 = vpop.permute.xlu0 %983
    %v986 = vadd.f32 %v976, %v984
    %v987 = vtanh.pop %v986
    %989 = vrot.lane.b32.xlu0 %v987, 64
    %v990 = vpop.permute.xlu0 %989
    %v992 = vmul.f32 %v974, %v990
    %994 = vrot.lane.b32.xlu0 %v992, 32
    %v995 = vpop.permute.xlu0 %994
    %997 = vst.msk [vmem:[#allocation4 + $0x6] sm:$0x3] %vm380, %v995
    %v998 = vld [vmem:[#allocation3 + $0x18] sm:$0x3]
    %v999 = vsel %vm277, %v892, 0
    %1001 = vmatprep.subr.mxu0 0.0
    %1002 = vmatpush1.msra.mxu0 %v272
    %1003 = vmatprep.subr.mxu0 0.0
    %1004 = vmatpush1.msra.mxu0 %v273
    %1005 = vmatprep.subr.mxu0 0.0
    %1006 = vmatpush1.msra.mxu0 %v274
    %1007 = vmatprep.subr.mxu0 0.0
    %1008 = vmatpush1.msra.mxu0 %v275
    %1009 = vmatprep.subr.mxu0 0.0
    %1010 = vmatpush1.msra.mxu0 0.0
    %1011 = vmatprep.subr.mxu0 0.0
    %1012 = vmatpush1.msra.mxu0 0.0
    %1013 = vmatprep.subr.mxu0 0.0
    %1014 = vmatpush1.msra.mxu0 0.0
    %1015 = vmatprep.subr.mxu0 0.0
    %1016 = vmatpush1.msra.mxu0 0.0
    %1017 = vmatprep.subr.mxu0 0.0
    %1018 = vmatpush1.msra.mxu0 0.0
    %1019 = vmatprep.subr.mxu0 0.0
    %1020 = vmatpush1.msra.mxu0 0.0
    %1021 = vmatprep.subr.mxu0 0.0
    %1022 = vmatpush1.msra.mxu0 0.0
    %1023 = vmatprep.subr.mxu0 0.0
    %1024 = vmatpush1.msra.mxu0 0.0
    %1025 = vmatprep.subr.mxu0 0.0
    %1026 = vmatpush1.msra.mxu0 0.0
    %1027 = vmatprep.subr.mxu0 0.0
    %1028 = vmatpush1.msra.mxu0 0.0
    %1029 = vmatprep.subr.mxu0 0.0
    %1030 = vmatpush1.msra.mxu0 0.0
    %1031 = vmatprep.subr.mxu0 0.0
    %1032 = vmatpush1.msra.mxu0 0.0
    %1033 = vmatprep.subr.mxu0 0.0
    %1034 = vmatpush1.msra.mxu0 0.0
    %1035 = vmatprep.subr.mxu0 0.0
    %1036 = vmatpush1.msra.mxu0 0.0
    %1037 = vmatprep.subr.mxu0 0.0
    %1038 = vmatpush1.msra.mxu0 0.0
    %1039 = vmatprep.subr.mxu0 0.0
    %1040 = vmatpush1.msra.mxu0 0.0
    %1041 = vmatprep.subr.mxu0 0.0
    %1042 = vmatpush1.msra.mxu0 0.0
    %1043 = vmatprep.subr.mxu0 0.0
    %1044 = vmatpush1.msra.mxu0 0.0
    %1045 = vmatprep.subr.mxu0 0.0
    %1046 = vmatpush1.msra.mxu0 0.0
    %1047 = vmatprep.subr.mxu0 0.0
    %1048 = vmatpush1.msra.mxu0 0.0
    %1049 = vmatprep.subr.mxu0 0.0
    %1050 = vmatpush1.msra.mxu0 0.0
    %1051 = vmatprep.subr.mxu0 0.0
    %1052 = vmatpush1.msra.mxu0 0.0
    %1053 = vmatprep.subr.mxu0 0.0
    %1054 = vmatpush1.msra.mxu0 0.0
    %1055 = vmatprep.subr.mxu0 0.0
    %1056 = vmatpush1.msra.mxu0 0.0
    %1057 = vmatprep.subr.mxu0 0.0
    %1058 = vmatpush1.msra.mxu0 0.0
    %1059 = vmatprep.subr.mxu0 0.0
    %1060 = vmatpush1.msra.mxu0 0.0
    %1061 = vmatprep.subr.mxu0 0.0
    %1062 = vmatpush1.msra.mxu0 0.0
    %1063 = vmatprep.subr.mxu0 0.0
    %1064 = vmatpush1.msra.mxu0 0.0
    %1065 = vmatprep.mubr.f32.mxu0 0.0
    %1066 = vmatmul.mubr.f32.gmra.mrb[0].mxu0 %v999
    %v1067 = vpop.f32.mrb[0].mxu0
    %v1068 = vadd.f32 0.0, %v1067
    %v1069 = vpop.f32.mrb[0].mxu0
    %1070 = vdwg.mxu0
    %v1071 = vadd.f32 %v998, %v1068
    %v1072 = vxor.u32 %v1071, 2147483648
    %v1073 = vmul.f32 %v1072, 1.442695
    %v1074 = vpow.pop %v1073
    %v1075 = vadd.f32 %v1074, 1.0
    %v1076 = vrcp.pop %v1075
    %v1077 = vmul.f32 1.0, %v1076
    %v1078 = vtanh.pop %v1071
    %v1079 = vmul.f32 %v1077, %v883
    %1081 = vrot.lane.b32.xlu0 %v1078, 64
    %v1082 = vpop.permute.xlu0 %1081
    %v1084 = vmul.f32 %v1077, %v1082
    %1086 = vrot.lane.b32.xlu0 %v1084, 32
    %v1087 = vpop.permute.xlu0 %1086
    %v1089 = vadd.f32 %v1079, %v1087
    %v1090 = vtanh.pop %v1089
    %1092 = vrot.lane.b32.xlu0 %v1090, 64
    %v1093 = vpop.permute.xlu0 %1092
    %v1095 = vmul.f32 %v1077, %v1093
    %1097 = vrot.lane.b32.xlu0 %v1095, 32
    %v1098 = vpop.permute.xlu0 %1097
    %1100 = vst.msk [vmem:[#allocation5 + $0x18] sm:$0x3] %vm380, %v1098
    %v1101 = vld [vmem:[#allocation2 + $0x8] sm:$0x3]
    %v1102 = vsel %vm277, %v995, 0
    %1104 = vmatprep.subr.mxu0 0.0
    %1105 = vmatpush1.msra.mxu0 %v268
    %1106 = vmatprep.subr.mxu0 0.0
    %1107 = vmatpush1.msra.mxu0 %v269
    %1108 = vmatprep.subr.mxu0 0.0
    %1109 = vmatpush1.msra.mxu0 %v270
    %1110 = vmatprep.subr.mxu0 0.0
    %1111 = vmatpush1.msra.mxu0 %v271
    %1112 = vmatprep.subr.mxu0 0.0
    %1113 = vmatpush1.msra.mxu0 0.0
    %1114 = vmatprep.subr.mxu0 0.0
    %1115 = vmatpush1.msra.mxu0 0.0
    %1116 = vmatprep.subr.mxu0 0.0
    %1117 = vmatpush1.msra.mxu0 0.0
    %1118 = vmatprep.subr.mxu0 0.0
    %1119 = vmatpush1.msra.mxu0 0.0
    %1120 = vmatprep.subr.mxu0 0.0
    %1121 = vmatpush1.msra.mxu0 0.0
    %1122 = vmatprep.subr.mxu0 0.0
    %1123 = vmatpush1.msra.mxu0 0.0
    %1124 = vmatprep.subr.mxu0 0.0
    %1125 = vmatpush1.msra.mxu0 0.0
    %1126 = vmatprep.subr.mxu0 0.0
    %1127 = vmatpush1.msra.mxu0 0.0
    %1128 = vmatprep.subr.mxu0 0.0
    %1129 = vmatpush1.msra.mxu0 0.0
    %1130 = vmatprep.subr.mxu0 0.0
    %1131 = vmatpush1.msra.mxu0 0.0
    %1132 = vmatprep.subr.mxu0 0.0
    %1133 = vmatpush1.msra.mxu0 0.0
    %1134 = vmatprep.subr.mxu0 0.0
    %1135 = vmatpush1.msra.mxu0 0.0
    %1136 = vmatprep.subr.mxu0 0.0
    %1137 = vmatpush1.msra.mxu0 0.0
    %1138 = vmatprep.subr.mxu0 0.0
    %1139 = vmatpush1.msra.mxu0 0.0
    %1140 = vmatprep.subr.mxu0 0.0
    %1141 = vmatpush1.msra.mxu0 0.0
    %1142 = vmatprep.subr.mxu0 0.0
    %1143 = vmatpush1.msra.mxu0 0.0
    %1144 = vmatprep.subr.mxu0 0.0
    %1145 = vmatpush1.msra.mxu0 0.0
    %1146 = vmatprep.subr.mxu0 0.0
    %1147 = vmatpush1.msra.mxu0 0.0
    %1148 = vmatprep.subr.mxu0 0.0
    %1149 = vmatpush1.msra.mxu0 0.0
    %1150 = vmatprep.subr.mxu0 0.0
    %1151 = vmatpush1.msra.mxu0 0.0
    %1152 = vmatprep.subr.mxu0 0.0
    %1153 = vmatpush1.msra.mxu0 0.0
    %1154 = vmatprep.subr.mxu0 0.0
    %1155 = vmatpush1.msra.mxu0 0.0
    %1156 = vmatprep.subr.mxu0 0.0
    %1157 = vmatpush1.msra.mxu0 0.0
    %1158 = vmatprep.subr.mxu0 0.0
    %1159 = vmatpush1.msra.mxu0 0.0
    %1160 = vmatprep.subr.mxu0 0.0
    %1161 = vmatpush1.msra.mxu0 0.0
    %1162 = vmatprep.subr.mxu0 0.0
    %1163 = vmatpush1.msra.mxu0 0.0
    %1164 = vmatprep.subr.mxu0 0.0
    %1165 = vmatpush1.msra.mxu0 0.0
    %1166 = vmatprep.subr.mxu0 0.0
    %1167 = vmatpush1.msra.mxu0 0.0
    %1168 = vmatprep.mubr.f32.mxu0 0.0
    %1169 = vmatmul.mubr.f32.gmra.mrb[0].mxu0 %v1102
    %v1170 = vpop.f32.mrb[0].mxu0
    %v1171 = vadd.f32 0.0, %v1170
    %v1172 = vpop.f32.mrb[0].mxu0
    %1173 = vdwg.mxu0
    %v1174 = vadd.f32 %v1101, %v1171
    %v1175 = vxor.u32 %v1174, 2147483648
    %v1176 = vmul.f32 %v1175, 1.442695
    %v1177 = vpow.pop %v1176
    %v1178 = vadd.f32 %v1177, 1.0
    %v1179 = vrcp.pop %v1178
    %v1180 = vmul.f32 1.0, %v1179
    %v1181 = vtanh.pop %v1174
    %v1182 = vmul.f32 %v1180, %v986
    %1184 = vrot.lane.b32.xlu0 %v1181, 64
    %v1185 = vpop.permute.xlu0 %1184
    %v1187 = vmul.f32 %v1180, %v1185
    %1189 = vrot.lane.b32.xlu0 %v1187, 32
    %v1190 = vpop.permute.xlu0 %1189
    %v1192 = vadd.f32 %v1182, %v1190
    %v1193 = vtanh.pop %v1192
    %1195 = vrot.lane.b32.xlu0 %v1193, 64
    %v1196 = vpop.permute.xlu0 %1195
    %v1198 = vmul.f32 %v1180, %v1196
    %1200 = vrot.lane.b32.xlu0 %v1198, 32
    %v1201 = vpop.permute.xlu0 %1200
    %1203 = vst.msk [vmem:[#allocation4 + $0x8] sm:$0x3] %vm380, %v1201
    %v1204 = vld [vmem:[#allocation3 + $0x16] sm:$0x3]
    %v1205 = vsel %vm277, %v1098, 0
    %1207 = vmatprep.subr.mxu0 0.0
    %1208 = vmatpush1.msra.mxu0 %v272
    %1209 = vmatprep.subr.mxu0 0.0
    %1210 = vmatpush1.msra.mxu0 %v273
    %1211 = vmatprep.subr.mxu0 0.0
    %1212 = vmatpush1.msra.mxu0 %v274
    %1213 = vmatprep.subr.mxu0 0.0
    %1214 = vmatpush1.msra.mxu0 %v275
    %1215 = vmatprep.subr.mxu0 0.0
    %1216 = vmatpush1.msra.mxu0 0.0
    %1217 = vmatprep.subr.mxu0 0.0
    %1218 = vmatpush1.msra.mxu0 0.0
    %1219 = vmatprep.subr.mxu0 0.0
    %1220 = vmatpush1.msra.mxu0 0.0
    %1221 = vmatprep.subr.mxu0 0.0
    %1222 = vmatpush1.msra.mxu0 0.0
    %1223 = vmatprep.subr.mxu0 0.0
    %1224 = vmatpush1.msra.mxu0 0.0
    %1225 = vmatprep.subr.mxu0 0.0
    %1226 = vmatpush1.msra.mxu0 0.0
    %1227 = vmatprep.subr.mxu0 0.0
    %1228 = vmatpush1.msra.mxu0 0.0
    %1229 = vmatprep.subr.mxu0 0.0
    %1230 = vmatpush1.msra.mxu0 0.0
    %1231 = vmatprep.subr.mxu0 0.0
    %1232 = vmatpush1.msra.mxu0 0.0
    %1233 = vmatprep.subr.mxu0 0.0
    %1234 = vmatpush1.msra.mxu0 0.0
    %1235 = vmatprep.subr.mxu0 0.0
    %1236 = vmatpush1.msra.mxu0 0.0
    %1237 = vmatprep.subr.mxu0 0.0
    %1238 = vmatpush1.msra.mxu0 0.0
    %1239 = vmatprep.subr.mxu0 0.0
    %1240 = vmatpush1.msra.mxu0 0.0
    %1241 = vmatprep.subr.mxu0 0.0
    %1242 = vmatpush1.msra.mxu0 0.0
    %1243 = vmatprep.subr.mxu0 0.0
    %1244 = vmatpush1.msra.mxu0 0.0
    %1245 = vmatprep.subr.mxu0 0.0
    %1246 = vmatpush1.msra.mxu0 0.0
    %1247 = vmatprep.subr.mxu0 0.0
    %1248 = vmatpush1.msra.mxu0 0.0
    %1249 = vmatprep.subr.mxu0 0.0
    %1250 = vmatpush1.msra.mxu0 0.0
    %1251 = vmatprep.subr.mxu0 0.0
    %1252 = vmatpush1.msra.mxu0 0.0
    %1253 = vmatprep.subr.mxu0 0.0
    %1254 = vmatpush1.msra.mxu0 0.0
    %1255 = vmatprep.subr.mxu0 0.0
    %1256 = vmatpush1.msra.mxu0 0.0
    %1257 = vmatprep.subr.mxu0 0.0
    %1258 = vmatpush1.msra.mxu0 0.0
    %1259 = vmatprep.subr.mxu0 0.0
    %1260 = vmatpush1.msra.mxu0 0.0
    %1261 = vmatprep.subr.mxu0 0.0
    %1262 = vmatpush1.msra.mxu0 0.0
    %1263 = vmatprep.subr.mxu0 0.0
    %1264 = vmatpush1.msra.mxu0 0.0
    %1265 = vmatprep.subr.mxu0 0.0
    %1266 = vmatpush1.msra.mxu0 0.0
    %1267 = vmatprep.subr.mxu0 0.0
    %1268 = vmatpush1.msra.mxu0 0.0
    %1269 = vmatprep.subr.mxu0 0.0
    %1270 = vmatpush1.msra.mxu0 0.0
    %1271 = vmatprep.mubr.f32.mxu0 0.0
    %1272 = vmatmul.mubr.f32.gmra.mrb[0].mxu0 %v1205
    %v1273 = vpop.f32.mrb[0].mxu0
    %v1274 = vadd.f32 0.0, %v1273
    %v1275 = vpop.f32.mrb[0].mxu0
    %1276 = vdwg.mxu0
    %v1277 = vadd.f32 %v1204, %v1274
    %v1278 = vxor.u32 %v1277, 2147483648
    %v1279 = vmul.f32 %v1278, 1.442695
    %v1280 = vpow.pop %v1279
    %v1281 = vadd.f32 %v1280, 1.0
    %v1282 = vrcp.pop %v1281
    %v1283 = vmul.f32 1.0, %v1282
    %v1284 = vtanh.pop %v1277
    %v1285 = vmul.f32 %v1283, %v1089
    %1287 = vrot.lane.b32.xlu0 %v1284, 64
    %v1288 = vpop.permute.xlu0 %1287
    %v1290 = vmul.f32 %v1283, %v1288
    %1292 = vrot.lane.b32.xlu0 %v1290, 32
    %v1293 = vpop.permute.xlu0 %1292
    %v1295 = vadd.f32 %v1285, %v1293
    %v1296 = vtanh.pop %v1295
    %1298 = vrot.lane.b32.xlu0 %v1296, 64
    %v1299 = vpop.permute.xlu0 %1298
    %v1301 = vmul.f32 %v1283, %v1299
    %1303 = vrot.lane.b32.xlu0 %v1301, 32
    %v1304 = vpop.permute.xlu0 %1303
    %1306 = vst.msk [vmem:[#allocation5 + $0x16] sm:$0x3] %vm380, %v1304
    %v1307 = vld [vmem:[#allocation2 + $0xa] sm:$0x3]
    %v1308 = vsel %vm277, %v1201, 0
    %1310 = vmatprep.subr.mxu0 0.0
    %1311 = vmatpush1.msra.mxu0 %v268
    %1312 = vmatprep.subr.mxu0 0.0
    %1313 = vmatpush1.msra.mxu0 %v269
    %1314 = vmatprep.subr.mxu0 0.0
    %1315 = vmatpush1.msra.mxu0 %v270
    %1316 = vmatprep.subr.mxu0 0.0
    %1317 = vmatpush1.msra.mxu0 %v271
    %1318 = vmatprep.subr.mxu0 0.0
    %1319 = vmatpush1.msra.mxu0 0.0
    %1320 = vmatprep.subr.mxu0 0.0
    %1321 = vmatpush1.msra.mxu0 0.0
    %1322 = vmatprep.subr.mxu0 0.0
    %1323 = vmatpush1.msra.mxu0 0.0
    %1324 = vmatprep.subr.mxu0 0.0
    %1325 = vmatpush1.msra.mxu0 0.0
    %1326 = vmatprep.subr.mxu0 0.0
    %1327 = vmatpush1.msra.mxu0 0.0
    %1328 = vmatprep.subr.mxu0 0.0
    %1329 = vmatpush1.msra.mxu0 0.0
    %1330 = vmatprep.subr.mxu0 0.0
    %1331 = vmatpush1.msra.mxu0 0.0
    %1332 = vmatprep.subr.mxu0 0.0
    %1333 = vmatpush1.msra.mxu0 0.0
    %1334 = vmatprep.subr.mxu0 0.0
    %1335 = vmatpush1.msra.mxu0 0.0
    %1336 = vmatprep.subr.mxu0 0.0
    %1337 = vmatpush1.msra.mxu0 0.0
    %1338 = vmatprep.subr.mxu0 0.0
    %1339 = vmatpush1.msra.mxu0 0.0
    %1340 = vmatprep.subr.mxu0 0.0
    %1341 = vmatpush1.msra.mxu0 0.0
    %1342 = vmatprep.subr.mxu0 0.0
    %1343 = vmatpush1.msra.mxu0 0.0
    %1344 = vmatprep.subr.mxu0 0.0
    %1345 = vmatpush1.msra.mxu0 0.0
    %1346 = vmatprep.subr.mxu0 0.0
    %1347 = vmatpush1.msra.mxu0 0.0
    %1348 = vmatprep.subr.mxu0 0.0
    %1349 = vmatpush1.msra.mxu0 0.0
    %1350 = vmatprep.subr.mxu0 0.0
    %1351 = vmatpush1.msra.mxu0 0.0
    %1352 = vmatprep.subr.mxu0 0.0
    %1353 = vmatpush1.msra.mxu0 0.0
    %1354 = vmatprep.subr.mxu0 0.0
    %1355 = vmatpush1.msra.mxu0 0.0
    %1356 = vmatprep.subr.mxu0 0.0
    %1357 = vmatpush1.msra.mxu0 0.0
    %1358 = vmatprep.subr.mxu0 0.0
    %1359 = vmatpush1.msra.mxu0 0.0
    %1360 = vmatprep.subr.mxu0 0.0
    %1361 = vmatpush1.msra.mxu0 0.0
    %1362 = vmatprep.subr.mxu0 0.0
    %1363 = vmatpush1.msra.mxu0 0.0
    %1364 = vmatprep.subr.mxu0 0.0
    %1365 = vmatpush1.msra.mxu0 0.0
    %1366 = vmatprep.subr.mxu0 0.0
    %1367 = vmatpush1.msra.mxu0 0.0
    %1368 = vmatprep.subr.mxu0 0.0
    %1369 = vmatpush1.msra.mxu0 0.0
    %1370 = vmatprep.subr.mxu0 0.0
    %1371 = vmatpush1.msra.mxu0 0.0
    %1372 = vmatprep.subr.mxu0 0.0
    %1373 = vmatpush1.msra.mxu0 0.0
    %1374 = vmatprep.mubr.f32.mxu0 0.0
    %1375 = vmatmul.mubr.f32.gmra.mrb[0].mxu0 %v1308
    %v1376 = vpop.f32.mrb[0].mxu0
    %v1377 = vadd.f32 0.0, %v1376
    %v1378 = vpop.f32.mrb[0].mxu0
    %1379 = vdwg.mxu0
    %v1380 = vadd.f32 %v1307, %v1377
    %v1381 = vxor.u32 %v1380, 2147483648
    %v1382 = vmul.f32 %v1381, 1.442695
    %v1383 = vpow.pop %v1382
    %v1384 = vadd.f32 %v1383, 1.0
    %v1385 = vrcp.pop %v1384
    %v1386 = vmul.f32 1.0, %v1385
    %v1387 = vtanh.pop %v1380
    %v1388 = vmul.f32 %v1386, %v1192
    %1390 = vrot.lane.b32.xlu0 %v1387, 64
    %v1391 = vpop.permute.xlu0 %1390
    %v1393 = vmul.f32 %v1386, %v1391
    %1395 = vrot.lane.b32.xlu0 %v1393, 32
    %v1396 = vpop.permute.xlu0 %1395
    %v1398 = vadd.f32 %v1388, %v1396
    %v1399 = vtanh.pop %v1398
    %1401 = vrot.lane.b32.xlu0 %v1399, 64
    %v1402 = vpop.permute.xlu0 %1401
    %v1404 = vmul.f32 %v1386, %v1402
    %1406 = vrot.lane.b32.xlu0 %v1404, 32
    %v1407 = vpop.permute.xlu0 %1406
    %1409 = vst.msk [vmem:[#allocation4 + $0xa] sm:$0x3] %vm380, %v1407
    %v1410 = vld [vmem:[#allocation3 + $0x14] sm:$0x3]
    %v1411 = vsel %vm277, %v1304, 0
    %1413 = vmatprep.subr.mxu0 0.0
    %1414 = vmatpush1.msra.mxu0 %v272
    %1415 = vmatprep.subr.mxu0 0.0
    %1416 = vmatpush1.msra.mxu0 %v273
    %1417 = vmatprep.subr.mxu0 0.0
    %1418 = vmatpush1.msra.mxu0 %v274
    %1419 = vmatprep.subr.mxu0 0.0
    %1420 = vmatpush1.msra.mxu0 %v275
    %1421 = vmatprep.subr.mxu0 0.0
    %1422 = vmatpush1.msra.mxu0 0.0
    %1423 = vmatprep.subr.mxu0 0.0
    %1424 = vmatpush1.msra.mxu0 0.0
    %1425 = vmatprep.subr.mxu0 0.0
    %1426 = vmatpush1.msra.mxu0 0.0
    %1427 = vmatprep.subr.mxu0 0.0
    %1428 = vmatpush1.msra.mxu0 0.0
    %1429 = vmatprep.subr.mxu0 0.0
    %1430 = vmatpush1.msra.mxu0 0.0
    %1431 = vmatprep.subr.mxu0 0.0
    %1432 = vmatpush1.msra.mxu0 0.0
    %1433 = vmatprep.subr.mxu0 0.0
    %1434 = vmatpush1.msra.mxu0 0.0
    %1435 = vmatprep.subr.mxu0 0.0
    %1436 = vmatpush1.msra.mxu0 0.0
    %1437 = vmatprep.subr.mxu0 0.0
    %1438 = vmatpush1.msra.mxu0 0.0
    %1439 = vmatprep.subr.mxu0 0.0
    %1440 = vmatpush1.msra.mxu0 0.0
    %1441 = vmatprep.subr.mxu0 0.0
    %1442 = vmatpush1.msra.mxu0 0.0
    %1443 = vmatprep.subr.mxu0 0.0
    %1444 = vmatpush1.msra.mxu0 0.0
    %1445 = vmatprep.subr.mxu0 0.0
    %1446 = vmatpush1.msra.mxu0 0.0
    %1447 = vmatprep.subr.mxu0 0.0
    %1448 = vmatpush1.msra.mxu0 0.0
    %1449 = vmatprep.subr.mxu0 0.0
    %1450 = vmatpush1.msra.mxu0 0.0
    %1451 = vmatprep.subr.mxu0 0.0
    %1452 = vmatpush1.msra.mxu0 0.0
    %1453 = vmatprep.subr.mxu0 0.0
    %1454 = vmatpush1.msra.mxu0 0.0
    %1455 = vmatprep.subr.mxu0 0.0
    %1456 = vmatpush1.msra.mxu0 0.0
    %1457 = vmatprep.subr.mxu0 0.0
    %1458 = vmatpush1.msra.mxu0 0.0
    %1459 = vmatprep.subr.mxu0 0.0
    %1460 = vmatpush1.msra.mxu0 0.0
    %1461 = vmatprep.subr.mxu0 0.0
    %1462 = vmatpush1.msra.mxu0 0.0
    %1463 = vmatprep.subr.mxu0 0.0
    %1464 = vmatpush1.msra.mxu0 0.0
    %1465 = vmatprep.subr.mxu0 0.0
    %1466 = vmatpush1.msra.mxu0 0.0
    %1467 = vmatprep.subr.mxu0 0.0
    %1468 = vmatpush1.msra.mxu0 0.0
    %1469 = vmatprep.subr.mxu0 0.0
    %1470 = vmatpush1.msra.mxu0 0.0
    %1471 = vmatprep.subr.mxu0 0.0
    %1472 = vmatpush1.msra.mxu0 0.0
    %1473 = vmatprep.subr.mxu0 0.0
    %1474 = vmatpush1.msra.mxu0 0.0
    %1475 = vmatprep.subr.mxu0 0.0
    %1476 = vmatpush1.msra.mxu0 0.0
    %1477 = vmatprep.mubr.f32.mxu0 0.0
    %1478 = vmatmul.mubr.f32.gmra.mrb[0].mxu0 %v1411
    %v1479 = vpop.f32.mrb[0].mxu0
    %v1480 = vadd.f32 0.0, %v1479
    %v1481 = vpop.f32.mrb[0].mxu0
    %1482 = vdwg.mxu0
    %v1483 = vadd.f32 %v1410, %v1480
    %v1484 = vxor.u32 %v1483, 2147483648
    %v1485 = vmul.f32 %v1484, 1.442695
    %v1486 = vpow.pop %v1485
    %v1487 = vadd.f32 %v1486, 1.0
    %v1488 = vrcp.pop %v1487
    %v1489 = vmul.f32 1.0, %v1488
    %v1490 = vtanh.pop %v1483
    %v1491 = vmul.f32 %v1489, %v1295
    %1493 = vrot.lane.b32.xlu0 %v1490, 64
    %v1494 = vpop.permute.xlu0 %1493
    %v1496 = vmul.f32 %v1489, %v1494
    %1498 = vrot.lane.b32.xlu0 %v1496, 32
    %v1499 = vpop.permute.xlu0 %1498
    %v1501 = vadd.f32 %v1491, %v1499
    %v1502 = vtanh.pop %v1501
    %1504 = vrot.lane.b32.xlu0 %v1502, 64
    %v1505 = vpop.permute.xlu0 %1504
    %v1507 = vmul.f32 %v1489, %v1505
    %1509 = vrot.lane.b32.xlu0 %v1507, 32
    %v1510 = vpop.permute.xlu0 %1509
    %1512 = vst.msk [vmem:[#allocation5 + $0x14] sm:$0x3] %vm380, %v1510
    %v1513 = vld [vmem:[#allocation2 + $0xc] sm:$0x3]
    %v1514 = vsel %vm277, %v1407, 0
    %1516 = vmatprep.subr.mxu0 0.0
    %1517 = vmatpush1.msra.mxu0 %v268
    %1518 = vmatprep.subr.mxu0 0.0
    %1519 = vmatpush1.msra.mxu0 %v269
    %1520 = vmatprep.subr.mxu0 0.0
    %1521 = vmatpush1.msra.mxu0 %v270
    %1522 = vmatprep.subr.mxu0 0.0
    %1523 = vmatpush1.msra.mxu0 %v271
    %1524 = vmatprep.subr.mxu0 0.0
    %1525 = vmatpush1.msra.mxu0 0.0
    %1526 = vmatprep.subr.mxu0 0.0
    %1527 = vmatpush1.msra.mxu0 0.0
    %1528 = vmatprep.subr.mxu0 0.0
    %1529 = vmatpush1.msra.mxu0 0.0
    %1530 = vmatprep.subr.mxu0 0.0
    %1531 = vmatpush1.msra.mxu0 0.0
    %1532 = vmatprep.subr.mxu0 0.0
    %1533 = vmatpush1.msra.mxu0 0.0
    %1534 = vmatprep.subr.mxu0 0.0
    %1535 = vmatpush1.msra.mxu0 0.0
    %1536 = vmatprep.subr.mxu0 0.0
    %1537 = vmatpush1.msra.mxu0 0.0
    %1538 = vmatprep.subr.mxu0 0.0
    %1539 = vmatpush1.msra.mxu0 0.0
    %1540 = vmatprep.subr.mxu0 0.0
    %1541 = vmatpush1.msra.mxu0 0.0
    %1542 = vmatprep.subr.mxu0 0.0
    %1543 = vmatpush1.msra.mxu0 0.0
    %1544 = vmatprep.subr.mxu0 0.0
    %1545 = vmatpush1.msra.mxu0 0.0
    %1546 = vmatprep.subr.mxu0 0.0
    %1547 = vmatpush1.msra.mxu0 0.0
    %1548 = vmatprep.subr.mxu0 0.0
    %1549 = vmatpush1.msra.mxu0 0.0
    %1550 = vmatprep.subr.mxu0 0.0
    %1551 = vmatpush1.msra.mxu0 0.0
    %1552 = vmatprep.subr.mxu0 0.0
    %1553 = vmatpush1.msra.mxu0 0.0
    %1554 = vmatprep.subr.mxu0 0.0
    %1555 = vmatpush1.msra.mxu0 0.0
    %1556 = vmatprep.subr.mxu0 0.0
    %1557 = vmatpush1.msra.mxu0 0.0
    %1558 = vmatprep.subr.mxu0 0.0
    %1559 = vmatpush1.msra.mxu0 0.0
    %1560 = vmatprep.subr.mxu0 0.0
    %1561 = vmatpush1.msra.mxu0 0.0
    %1562 = vmatprep.subr.mxu0 0.0
    %1563 = vmatpush1.msra.mxu0 0.0
    %1564 = vmatprep.subr.mxu0 0.0
    %1565 = vmatpush1.msra.mxu0 0.0
    %1566 = vmatprep.subr.mxu0 0.0
    %1567 = vmatpush1.msra.mxu0 0.0
    %1568 = vmatprep.subr.mxu0 0.0
    %1569 = vmatpush1.msra.mxu0 0.0
    %1570 = vmatprep.subr.mxu0 0.0
    %1571 = vmatpush1.msra.mxu0 0.0
    %1572 = vmatprep.subr.mxu0 0.0
    %1573 = vmatpush1.msra.mxu0 0.0
    %1574 = vmatprep.subr.mxu0 0.0
    %1575 = vmatpush1.msra.mxu0 0.0
    %1576 = vmatprep.subr.mxu0 0.0
    %1577 = vmatpush1.msra.mxu0 0.0
    %1578 = vmatprep.subr.mxu0 0.0
    %1579 = vmatpush1.msra.mxu0 0.0
    %1580 = vmatprep.mubr.f32.mxu0 0.0
    %1581 = vmatmul.mubr.f32.gmra.mrb[0].mxu0 %v1514
    %v1582 = vpop.f32.mrb[0].mxu0
    %v1583 = vadd.f32 0.0, %v1582
    %v1584 = vpop.f32.mrb[0].mxu0
    %1585 = vdwg.mxu0
    %v1586 = vadd.f32 %v1513, %v1583
    %v1587 = vxor.u32 %v1586, 2147483648
    %v1588 = vmul.f32 %v1587, 1.442695
    %v1589 = vpow.pop %v1588
    %v1590 = vadd.f32 %v1589, 1.0
    %v1591 = vrcp.pop %v1590
    %v1592 = vmul.f32 1.0, %v1591
    %v1593 = vtanh.pop %v1586
    %v1594 = vmul.f32 %v1592, %v1398
    %1596 = vrot.lane.b32.xlu0 %v1593, 64
    %v1597 = vpop.permute.xlu0 %1596
    %v1599 = vmul.f32 %v1592, %v1597
    %1601 = vrot.lane.b32.xlu0 %v1599, 32
    %v1602 = vpop.permute.xlu0 %1601
    %v1604 = vadd.f32 %v1594, %v1602
    %v1605 = vtanh.pop %v1604
    %1607 = vrot.lane.b32.xlu0 %v1605, 64
    %v1608 = vpop.permute.xlu0 %1607
    %v1610 = vmul.f32 %v1592, %v1608
    %1612 = vrot.lane.b32.xlu0 %v1610, 32
    %v1613 = vpop.permute.xlu0 %1612
    %1615 = vst.msk [vmem:[#allocation4 + $0xc] sm:$0x3] %vm380, %v1613
    %v1616 = vld [vmem:[#allocation3 + $0x12] sm:$0x3]
    %v1617 = vsel %vm277, %v1510, 0
    %1619 = vmatprep.subr.mxu0 0.0
    %1620 = vmatpush1.msra.mxu0 %v272
    %1621 = vmatprep.subr.mxu0 0.0
    %1622 = vmatpush1.msra.mxu0 %v273
    %1623 = vmatprep.subr.mxu0 0.0
    %1624 = vmatpush1.msra.mxu0 %v274
    %1625 = vmatprep.subr.mxu0 0.0
    %1626 = vmatpush1.msra.mxu0 %v275
    %1627 = vmatprep.subr.mxu0 0.0
    %1628 = vmatpush1.msra.mxu0 0.0
    %1629 = vmatprep.subr.mxu0 0.0
    %1630 = vmatpush1.msra.mxu0 0.0
    %1631 = vmatprep.subr.mxu0 0.0
    %1632 = vmatpush1.msra.mxu0 0.0
    %1633 = vmatprep.subr.mxu0 0.0
    %1634 = vmatpush1.msra.mxu0 0.0
    %1635 = vmatprep.subr.mxu0 0.0
    %1636 = vmatpush1.msra.mxu0 0.0
    %1637 = vmatprep.subr.mxu0 0.0
    %1638 = vmatpush1.msra.mxu0 0.0
    %1639 = vmatprep.subr.mxu0 0.0
    %1640 = vmatpush1.msra.mxu0 0.0
    %1641 = vmatprep.subr.mxu0 0.0
    %1642 = vmatpush1.msra.mxu0 0.0
    %1643 = vmatprep.subr.mxu0 0.0
    %1644 = vmatpush1.msra.mxu0 0.0
    %1645 = vmatprep.subr.mxu0 0.0
    %1646 = vmatpush1.msra.mxu0 0.0
    %1647 = vmatprep.subr.mxu0 0.0
    %1648 = vmatpush1.msra.mxu0 0.0
    %1649 = vmatprep.subr.mxu0 0.0
    %1650 = vmatpush1.msra.mxu0 0.0
    %1651 = vmatprep.subr.mxu0 0.0
    %1652 = vmatpush1.msra.mxu0 0.0
    %1653 = vmatprep.subr.mxu0 0.0
    %1654 = vmatpush1.msra.mxu0 0.0
    %1655 = vmatprep.subr.mxu0 0.0
    %1656 = vmatpush1.msra.mxu0 0.0
    %1657 = vmatprep.subr.mxu0 0.0
    %1658 = vmatpush1.msra.mxu0 0.0
    %1659 = vmatprep.subr.mxu0 0.0
    %1660 = vmatpush1.msra.mxu0 0.0
    %1661 = vmatprep.subr.mxu0 0.0
    %1662 = vmatpush1.msra.mxu0 0.0
    %1663 = vmatprep.subr.mxu0 0.0
    %1664 = vmatpush1.msra.mxu0 0.0
    %1665 = vmatprep.subr.mxu0 0.0
    %1666 = vmatpush1.msra.mxu0 0.0
    %1667 = vmatprep.subr.mxu0 0.0
    %1668 = vmatpush1.msra.mxu0 0.0
    %1669 = vmatprep.subr.mxu0 0.0
    %1670 = vmatpush1.msra.mxu0 0.0
    %1671 = vmatprep.subr.mxu0 0.0
    %1672 = vmatpush1.msra.mxu0 0.0
    %1673 = vmatprep.subr.mxu0 0.0
    %1674 = vmatpush1.msra.mxu0 0.0
    %1675 = vmatprep.subr.mxu0 0.0
    %1676 = vmatpush1.msra.mxu0 0.0
    %1677 = vmatprep.subr.mxu0 0.0
    %1678 = vmatpush1.msra.mxu0 0.0
    %1679 = vmatprep.subr.mxu0 0.0
    %1680 = vmatpush1.msra.mxu0 0.0
    %1681 = vmatprep.subr.mxu0 0.0
    %1682 = vmatpush1.msra.mxu0 0.0
    %1683 = vmatprep.mubr.f32.mxu0 0.0
    %1684 = vmatmul.mubr.f32.gmra.mrb[0].mxu0 %v1617
    %v1685 = vpop.f32.mrb[0].mxu0
    %v1686 = vadd.f32 0.0, %v1685
    %v1687 = vpop.f32.mrb[0].mxu0
    %1688 = vdwg.mxu0
    %v1689 = vadd.f32 %v1616, %v1686
    %v1690 = vxor.u32 %v1689, 2147483648
    %v1691 = vmul.f32 %v1690, 1.442695
    %v1692 = vpow.pop %v1691
    %v1693 = vadd.f32 %v1692, 1.0
    %v1694 = vrcp.pop %v1693
    %v1695 = vmul.f32 1.0, %v1694
    %v1696 = vtanh.pop %v1689
    %v1697 = vmul.f32 %v1695, %v1501
    %1699 = vrot.lane.b32.xlu0 %v1696, 64
    %v1700 = vpop.permute.xlu0 %1699
    %v1702 = vmul.f32 %v1695, %v1700
    %1704 = vrot.lane.b32.xlu0 %v1702, 32
    %v1705 = vpop.permute.xlu0 %1704
    %v1707 = vadd.f32 %v1697, %v1705
    %v1708 = vtanh.pop %v1707
    %1710 = vrot.lane.b32.xlu0 %v1708, 64
    %v1711 = vpop.permute.xlu0 %1710
    %v1713 = vmul.f32 %v1695, %v1711
    %1715 = vrot.lane.b32.xlu0 %v1713, 32
    %v1716 = vpop.permute.xlu0 %1715
    %1718 = vst.msk [vmem:[#allocation5 + $0x12] sm:$0x3] %vm380, %v1716
    %v1719 = vld [vmem:[#allocation2 + $0xe] sm:$0x3]
    %v1720 = vsel %vm277, %v1613, 0
    %1722 = vmatprep.subr.mxu0 0.0
    %1723 = vmatpush1.msra.mxu0 %v268
    %1724 = vmatprep.subr.mxu0 0.0
    %1725 = vmatpush1.msra.mxu0 %v269
    %1726 = vmatprep.subr.mxu0 0.0
    %1727 = vmatpush1.msra.mxu0 %v270
    %1728 = vmatprep.subr.mxu0 0.0
    %1729 = vmatpush1.msra.mxu0 %v271
    %1730 = vmatprep.subr.mxu0 0.0
    %1731 = vmatpush1.msra.mxu0 0.0
    %1732 = vmatprep.subr.mxu0 0.0
    %1733 = vmatpush1.msra.mxu0 0.0
    %1734 = vmatprep.subr.mxu0 0.0
    %1735 = vmatpush1.msra.mxu0 0.0
    %1736 = vmatprep.subr.mxu0 0.0
    %1737 = vmatpush1.msra.mxu0 0.0
    %1738 = vmatprep.subr.mxu0 0.0
    %1739 = vmatpush1.msra.mxu0 0.0
    %1740 = vmatprep.subr.mxu0 0.0
    %1741 = vmatpush1.msra.mxu0 0.0
    %1742 = vmatprep.subr.mxu0 0.0
    %1743 = vmatpush1.msra.mxu0 0.0
    %1744 = vmatprep.subr.mxu0 0.0
    %1745 = vmatpush1.msra.mxu0 0.0
    %1746 = vmatprep.subr.mxu0 0.0
    %1747 = vmatpush1.msra.mxu0 0.0
    %1748 = vmatprep.subr.mxu0 0.0
    %1749 = vmatpush1.msra.mxu0 0.0
    %1750 = vmatprep.subr.mxu0 0.0
    %1751 = vmatpush1.msra.mxu0 0.0
    %1752 = vmatprep.subr.mxu0 0.0
    %1753 = vmatpush1.msra.mxu0 0.0
    %1754 = vmatprep.subr.mxu0 0.0
    %1755 = vmatpush1.msra.mxu0 0.0
    %1756 = vmatprep.subr.mxu0 0.0
    %1757 = vmatpush1.msra.mxu0 0.0
    %1758 = vmatprep.subr.mxu0 0.0
    %1759 = vmatpush1.msra.mxu0 0.0
    %1760 = vmatprep.subr.mxu0 0.0
    %1761 = vmatpush1.msra.mxu0 0.0
    %1762 = vmatprep.subr.mxu0 0.0
    %1763 = vmatpush1.msra.mxu0 0.0
    %1764 = vmatprep.subr.mxu0 0.0
    %1765 = vmatpush1.msra.mxu0 0.0
    %1766 = vmatprep.subr.mxu0 0.0
    %1767 = vmatpush1.msra.mxu0 0.0
    %1768 = vmatprep.subr.mxu0 0.0
    %1769 = vmatpush1.msra.mxu0 0.0
    %1770 = vmatprep.subr.mxu0 0.0
    %1771 = vmatpush1.msra.mxu0 0.0
    %1772 = vmatprep.subr.mxu0 0.0
    %1773 = vmatpush1.msra.mxu0 0.0
    %1774 = vmatprep.subr.mxu0 0.0
    %1775 = vmatpush1.msra.mxu0 0.0
    %1776 = vmatprep.subr.mxu0 0.0
    %1777 = vmatpush1.msra.mxu0 0.0
    %1778 = vmatprep.subr.mxu0 0.0
    %1779 = vmatpush1.msra.mxu0 0.0
    %1780 = vmatprep.subr.mxu0 0.0
    %1781 = vmatpush1.msra.mxu0 0.0
    %1782 = vmatprep.subr.mxu0 0.0
    %1783 = vmatpush1.msra.mxu0 0.0
    %1784 = vmatprep.subr.mxu0 0.0
    %1785 = vmatpush1.msra.mxu0 0.0
    %1786 = vmatprep.mubr.f32.mxu0 0.0
    %1787 = vmatmul.mubr.f32.gmra.mrb[0].mxu0 %v1720
    %v1788 = vpop.f32.mrb[0].mxu0
    %v1789 = vadd.f32 0.0, %v1788
    %v1790 = vpop.f32.mrb[0].mxu0
    %1791 = vdwg.mxu0
    %v1792 = vadd.f32 %v1719, %v1789
    %v1793 = vxor.u32 %v1792, 2147483648
    %v1794 = vmul.f32 %v1793, 1.442695
    %v1795 = vpow.pop %v1794
    %v1796 = vadd.f32 %v1795, 1.0
    %v1797 = vrcp.pop %v1796
    %v1798 = vmul.f32 1.0, %v1797
    %v1799 = vtanh.pop %v1792
    %v1800 = vmul.f32 %v1798, %v1604
    %1802 = vrot.lane.b32.xlu0 %v1799, 64
    %v1803 = vpop.permute.xlu0 %1802
    %v1805 = vmul.f32 %v1798, %v1803
    %1807 = vrot.lane.b32.xlu0 %v1805, 32
    %v1808 = vpop.permute.xlu0 %1807
    %v1810 = vadd.f32 %v1800, %v1808
    %v1811 = vtanh.pop %v1810
    %1813 = vrot.lane.b32.xlu0 %v1811, 64
    %v1814 = vpop.permute.xlu0 %1813
    %v1816 = vmul.f32 %v1798, %v1814
    %1818 = vrot.lane.b32.xlu0 %v1816, 32
    %v1819 = vpop.permute.xlu0 %1818
    %1821 = vst.msk [vmem:[#allocation4 + $0xe] sm:$0x3] %vm380, %v1819
    %v1822 = vld [vmem:[#allocation3 + $0x10] sm:$0x3]
    %v1823 = vsel %vm277, %v1716, 0
    %1825 = vmatprep.subr.mxu0 0.0
    %1826 = vmatpush1.msra.mxu0 %v272
    %1827 = vmatprep.subr.mxu0 0.0
    %1828 = vmatpush1.msra.mxu0 %v273
    %1829 = vmatprep.subr.mxu0 0.0
    %1830 = vmatpush1.msra.mxu0 %v274
    %1831 = vmatprep.subr.mxu0 0.0
    %1832 = vmatpush1.msra.mxu0 %v275
    %1833 = vmatprep.subr.mxu0 0.0
    %1834 = vmatpush1.msra.mxu0 0.0
    %1835 = vmatprep.subr.mxu0 0.0
    %1836 = vmatpush1.msra.mxu0 0.0
    %1837 = vmatprep.subr.mxu0 0.0
    %1838 = vmatpush1.msra.mxu0 0.0
    %1839 = vmatprep.subr.mxu0 0.0
    %1840 = vmatpush1.msra.mxu0 0.0
    %1841 = vmatprep.subr.mxu0 0.0
    %1842 = vmatpush1.msra.mxu0 0.0
    %1843 = vmatprep.subr.mxu0 0.0
    %1844 = vmatpush1.msra.mxu0 0.0
    %1845 = vmatprep.subr.mxu0 0.0
    %1846 = vmatpush1.msra.mxu0 0.0
    %1847 = vmatprep.subr.mxu0 0.0
    %1848 = vmatpush1.msra.mxu0 0.0
    %1849 = vmatprep.subr.mxu0 0.0
    %1850 = vmatpush1.msra.mxu0 0.0
    %1851 = vmatprep.subr.mxu0 0.0
    %1852 = vmatpush1.msra.mxu0 0.0
    %1853 = vmatprep.subr.mxu0 0.0
    %1854 = vmatpush1.msra.mxu0 0.0
    %1855 = vmatprep.subr.mxu0 0.0
    %1856 = vmatpush1.msra.mxu0 0.0
    %1857 = vmatprep.subr.mxu0 0.0
    %1858 = vmatpush1.msra.mxu0 0.0
    %1859 = vmatprep.subr.mxu0 0.0
    %1860 = vmatpush1.msra.mxu0 0.0
    %1861 = vmatprep.subr.mxu0 0.0
    %1862 = vmatpush1.msra.mxu0 0.0
    %1863 = vmatprep.subr.mxu0 0.0
    %1864 = vmatpush1.msra.mxu0 0.0
    %1865 = vmatprep.subr.mxu0 0.0
    %1866 = vmatpush1.msra.mxu0 0.0
    %1867 = vmatprep.subr.mxu0 0.0
    %1868 = vmatpush1.msra.mxu0 0.0
    %1869 = vmatprep.subr.mxu0 0.0
    %1870 = vmatpush1.msra.mxu0 0.0
    %1871 = vmatprep.subr.mxu0 0.0
    %1872 = vmatpush1.msra.mxu0 0.0
    %1873 = vmatprep.subr.mxu0 0.0
    %1874 = vmatpush1.msra.mxu0 0.0
    %1875 = vmatprep.subr.mxu0 0.0
    %1876 = vmatpush1.msra.mxu0 0.0
    %1877 = vmatprep.subr.mxu0 0.0
    %1878 = vmatpush1.msra.mxu0 0.0
    %1879 = vmatprep.subr.mxu0 0.0
    %1880 = vmatpush1.msra.mxu0 0.0
    %1881 = vmatprep.subr.mxu0 0.0
    %1882 = vmatpush1.msra.mxu0 0.0
    %1883 = vmatprep.subr.mxu0 0.0
    %1884 = vmatpush1.msra.mxu0 0.0
    %1885 = vmatprep.subr.mxu0 0.0
    %1886 = vmatpush1.msra.mxu0 0.0
    %1887 = vmatprep.subr.mxu0 0.0
    %1888 = vmatpush1.msra.mxu0 0.0
    %1889 = vmatprep.mubr.f32.mxu0 0.0
    %1890 = vmatmul.mubr.f32.gmra.mrb[0].mxu0 %v1823
    %v1891 = vpop.f32.mrb[0].mxu0
    %v1892 = vadd.f32 0.0, %v1891
    %v1893 = vpop.f32.mrb[0].mxu0
    %1894 = vdwg.mxu0
    %v1895 = vadd.f32 %v1822, %v1892
    %v1896 = vxor.u32 %v1895, 2147483648
    %v1897 = vmul.f32 %v1896, 1.442695
    %v1898 = vpow.pop %v1897
    %v1899 = vadd.f32 %v1898, 1.0
    %v1900 = vrcp.pop %v1899
    %v1901 = vmul.f32 1.0, %v1900
    %v1902 = vtanh.pop %v1895
    %v1903 = vmul.f32 %v1901, %v1707
    %1905 = vrot.lane.b32.xlu0 %v1902, 64
    %v1906 = vpop.permute.xlu0 %1905
    %v1908 = vmul.f32 %v1901, %v1906
    %1910 = vrot.lane.b32.xlu0 %v1908, 32
    %v1911 = vpop.permute.xlu0 %1910
    %v1913 = vadd.f32 %v1903, %v1911
    %v1914 = vtanh.pop %v1913
    %1916 = vrot.lane.b32.xlu0 %v1914, 64
    %v1917 = vpop.permute.xlu0 %1916
    %v1919 = vmul.f32 %v1901, %v1917
    %1921 = vrot.lane.b32.xlu0 %v1919, 32
    %v1922 = vpop.permute.xlu0 %1921
    %1924 = vst.msk [vmem:[#allocation5 + $0x10] sm:$0x3] %vm380, %v1922
    %v1925 = vld [vmem:[#allocation2 + $0x10] sm:$0x3]
    %v1926 = vsel %vm277, %v1819, 0
    %1928 = vmatprep.subr.mxu0 0.0
    %1929 = vmatpush1.msra.mxu0 %v268
    %1930 = vmatprep.subr.mxu0 0.0
    %1931 = vmatpush1.msra.mxu0 %v269
    %1932 = vmatprep.subr.mxu0 0.0
    %1933 = vmatpush1.msra.mxu0 %v270
    %1934 = vmatprep.subr.mxu0 0.0
    %1935 = vmatpush1.msra.mxu0 %v271
    %1936 = vmatprep.subr.mxu0 0.0
    %1937 = vmatpush1.msra.mxu0 0.0
    %1938 = vmatprep.subr.mxu0 0.0
    %1939 = vmatpush1.msra.mxu0 0.0
    %1940 = vmatprep.subr.mxu0 0.0
    %1941 = vmatpush1.msra.mxu0 0.0
    %1942 = vmatprep.subr.mxu0 0.0
    %1943 = vmatpush1.msra.mxu0 0.0
    %1944 = vmatprep.subr.mxu0 0.0
    %1945 = vmatpush1.msra.mxu0 0.0
    %1946 = vmatprep.subr.mxu0 0.0
    %1947 = vmatpush1.msra.mxu0 0.0
    %1948 = vmatprep.subr.mxu0 0.0
    %1949 = vmatpush1.msra.mxu0 0.0
    %1950 = vmatprep.subr.mxu0 0.0
    %1951 = vmatpush1.msra.mxu0 0.0
    %1952 = vmatprep.subr.mxu0 0.0
    %1953 = vmatpush1.msra.mxu0 0.0
    %1954 = vmatprep.subr.mxu0 0.0
    %1955 = vmatpush1.msra.mxu0 0.0
    %1956 = vmatprep.subr.mxu0 0.0
    %1957 = vmatpush1.msra.mxu0 0.0
    %1958 = vmatprep.subr.mxu0 0.0
    %1959 = vmatpush1.msra.mxu0 0.0
    %1960 = vmatprep.subr.mxu0 0.0
    %1961 = vmatpush1.msra.mxu0 0.0
    %1962 = vmatprep.subr.mxu0 0.0
    %1963 = vmatpush1.msra.mxu0 0.0
    %1964 = vmatprep.subr.mxu0 0.0
    %1965 = vmatpush1.msra.mxu0 0.0
    %1966 = vmatprep.subr.mxu0 0.0
    %1967 = vmatpush1.msra.mxu0 0.0
    %1968 = vmatprep.subr.mxu0 0.0
    %1969 = vmatpush1.msra.mxu0 0.0
    %1970 = vmatprep.subr.mxu0 0.0
    %1971 = vmatpush1.msra.mxu0 0.0
    %1972 = vmatprep.subr.mxu0 0.0
    %1973 = vmatpush1.msra.mxu0 0.0
    %1974 = vmatprep.subr.mxu0 0.0
    %1975 = vmatpush1.msra.mxu0 0.0
    %1976 = vmatprep.subr.mxu0 0.0
    %1977 = vmatpush1.msra.mxu0 0.0
    %1978 = vmatprep.subr.mxu0 0.0
    %1979 = vmatpush1.msra.mxu0 0.0
    %1980 = vmatprep.subr.mxu0 0.0
    %1981 = vmatpush1.msra.mxu0 0.0
    %1982 = vmatprep.subr.mxu0 0.0
    %1983 = vmatpush1.msra.mxu0 0.0
    %1984 = vmatprep.subr.mxu0 0.0
    %1985 = vmatpush1.msra.mxu0 0.0
    %1986 = vmatprep.subr.mxu0 0.0
    %1987 = vmatpush1.msra.mxu0 0.0
    %1988 = vmatprep.subr.mxu0 0.0
    %1989 = vmatpush1.msra.mxu0 0.0
    %1990 = vmatprep.subr.mxu0 0.0
    %1991 = vmatpush1.msra.mxu0 0.0
    %1992 = vmatprep.mubr.f32.mxu0 0.0
    %1993 = vmatmul.mubr.f32.gmra.mrb[0].mxu0 %v1926
    %v1994 = vpop.f32.mrb[0].mxu0
    %v1995 = vadd.f32 0.0, %v1994
    %v1996 = vpop.f32.mrb[0].mxu0
    %1997 = vdwg.mxu0
    %v1998 = vadd.f32 %v1925, %v1995
    %v1999 = vxor.u32 %v1998, 2147483648
    %v2000 = vmul.f32 %v1999, 1.442695
    %v2001 = vpow.pop %v2000
    %v2002 = vadd.f32 %v2001, 1.0
    %v2003 = vrcp.pop %v2002
    %v2004 = vmul.f32 1.0, %v2003
    %v2005 = vtanh.pop %v1998
    %v2006 = vmul.f32 %v2004, %v1810
    %2008 = vrot.lane.b32.xlu0 %v2005, 64
    %v2009 = vpop.permute.xlu0 %2008
    %v2011 = vmul.f32 %v2004, %v2009
    %2013 = vrot.lane.b32.xlu0 %v2011, 32
    %v2014 = vpop.permute.xlu0 %2013
    %v2016 = vadd.f32 %v2006, %v2014
    %v2017 = vtanh.pop %v2016
    %2019 = vrot.lane.b32.xlu0 %v2017, 64
    %v2020 = vpop.permute.xlu0 %2019
    %v2022 = vmul.f32 %v2004, %v2020
    %2024 = vrot.lane.b32.xlu0 %v2022, 32
    %v2025 = vpop.permute.xlu0 %2024
    %2027 = vst.msk [vmem:[#allocation4 + $0x10] sm:$0x3] %vm380, %v2025
    %v2028 = vld [vmem:[#allocation3 + $0xe] sm:$0x3]
    %v2029 = vsel %vm277, %v1922, 0
    %2031 = vmatprep.subr.mxu0 0.0
    %2032 = vmatpush1.msra.mxu0 %v272
    %2033 = vmatprep.subr.mxu0 0.0
    %2034 = vmatpush1.msra.mxu0 %v273
    %2035 = vmatprep.subr.mxu0 0.0
    %2036 = vmatpush1.msra.mxu0 %v274
    %2037 = vmatprep.subr.mxu0 0.0
    %2038 = vmatpush1.msra.mxu0 %v275
    %2039 = vmatprep.subr.mxu0 0.0
    %2040 = vmatpush1.msra.mxu0 0.0
    %2041 = vmatprep.subr.mxu0 0.0
    %2042 = vmatpush1.msra.mxu0 0.0
    %2043 = vmatprep.subr.mxu0 0.0
    %2044 = vmatpush1.msra.mxu0 0.0
    %2045 = vmatprep.subr.mxu0 0.0
    %2046 = vmatpush1.msra.mxu0 0.0
    %2047 = vmatprep.subr.mxu0 0.0
    %2048 = vmatpush1.msra.mxu0 0.0
    %2049 = vmatprep.subr.mxu0 0.0
    %2050 = vmatpush1.msra.mxu0 0.0
    %2051 = vmatprep.subr.mxu0 0.0
    %2052 = vmatpush1.msra.mxu0 0.0
    %2053 = vmatprep.subr.mxu0 0.0
    %2054 = vmatpush1.msra.mxu0 0.0
    %2055 = vmatprep.subr.mxu0 0.0
    %2056 = vmatpush1.msra.mxu0 0.0
    %2057 = vmatprep.subr.mxu0 0.0
    %2058 = vmatpush1.msra.mxu0 0.0
    %2059 = vmatprep.subr.mxu0 0.0
    %2060 = vmatpush1.msra.mxu0 0.0
    %2061 = vmatprep.subr.mxu0 0.0
    %2062 = vmatpush1.msra.mxu0 0.0
    %2063 = vmatprep.subr.mxu0 0.0
    %2064 = vmatpush1.msra.mxu0 0.0
    %2065 = vmatprep.subr.mxu0 0.0
    %2066 = vmatpush1.msra.mxu0 0.0
    %2067 = vmatprep.subr.mxu0 0.0
    %2068 = vmatpush1.msra.mxu0 0.0
    %2069 = vmatprep.subr.mxu0 0.0
    %2070 = vmatpush1.msra.mxu0 0.0
    %2071 = vmatprep.subr.mxu0 0.0
    %2072 = vmatpush1.msra.mxu0 0.0
    %2073 = vmatprep.subr.mxu0 0.0
    %2074 = vmatpush1.msra.mxu0 0.0
    %2075 = vmatprep.subr.mxu0 0.0
    %2076 = vmatpush1.msra.mxu0 0.0
    %2077 = vmatprep.subr.mxu0 0.0
    %2078 = vmatpush1.msra.mxu0 0.0
    %2079 = vmatprep.subr.mxu0 0.0
    %2080 = vmatpush1.msra.mxu0 0.0
    %2081 = vmatprep.subr.mxu0 0.0
    %2082 = vmatpush1.msra.mxu0 0.0
    %2083 = vmatprep.subr.mxu0 0.0
    %2084 = vmatpush1.msra.mxu0 0.0
    %2085 = vmatprep.subr.mxu0 0.0
    %2086 = vmatpush1.msra.mxu0 0.0
    %2087 = vmatprep.subr.mxu0 0.0
    %2088 = vmatpush1.msra.mxu0 0.0
    %2089 = vmatprep.subr.mxu0 0.0
    %2090 = vmatpush1.msra.mxu0 0.0
    %2091 = vmatprep.subr.mxu0 0.0
    %2092 = vmatpush1.msra.mxu0 0.0
    %2093 = vmatprep.subr.mxu0 0.0
    %2094 = vmatpush1.msra.mxu0 0.0
    %2095 = vmatprep.mubr.f32.mxu0 0.0
    %2096 = vmatmul.mubr.f32.gmra.mrb[0].mxu0 %v2029
    %v2097 = vpop.f32.mrb[0].mxu0
    %v2098 = vadd.f32 0.0, %v2097
    %v2099 = vpop.f32.mrb[0].mxu0
    %2100 = vdwg.mxu0
    %v2101 = vadd.f32 %v2028, %v2098
    %v2102 = vxor.u32 %v2101, 2147483648
    %v2103 = vmul.f32 %v2102, 1.442695
    %v2104 = vpow.pop %v2103
    %v2105 = vadd.f32 %v2104, 1.0
    %v2106 = vrcp.pop %v2105
    %v2107 = vmul.f32 1.0, %v2106
    %v2108 = vtanh.pop %v2101
    %v2109 = vmul.f32 %v2107, %v1913
    %2111 = vrot.lane.b32.xlu0 %v2108, 64
    %v2112 = vpop.permute.xlu0 %2111
    %v2114 = vmul.f32 %v2107, %v2112
    %2116 = vrot.lane.b32.xlu0 %v2114, 32
    %v2117 = vpop.permute.xlu0 %2116
    %v2119 = vadd.f32 %v2109, %v2117
    %v2120 = vtanh.pop %v2119
    %2122 = vrot.lane.b32.xlu0 %v2120, 64
    %v2123 = vpop.permute.xlu0 %2122
    %v2125 = vmul.f32 %v2107, %v2123
    %2127 = vrot.lane.b32.xlu0 %v2125, 32
    %v2128 = vpop.permute.xlu0 %2127
    %2130 = vst.msk [vmem:[#allocation5 + $0xe] sm:$0x3] %vm380, %v2128
    %v2131 = vld [vmem:[#allocation2 + $0x12] sm:$0x3]
    %v2132 = vsel %vm277, %v2025, 0
    %2134 = vmatprep.subr.mxu0 0.0
    %2135 = vmatpush1.msra.mxu0 %v268
    %2136 = vmatprep.subr.mxu0 0.0
    %2137 = vmatpush1.msra.mxu0 %v269
    %2138 = vmatprep.subr.mxu0 0.0
    %2139 = vmatpush1.msra.mxu0 %v270
    %2140 = vmatprep.subr.mxu0 0.0
    %2141 = vmatpush1.msra.mxu0 %v271
    %2142 = vmatprep.subr.mxu0 0.0
    %2143 = vmatpush1.msra.mxu0 0.0
    %2144 = vmatprep.subr.mxu0 0.0
    %2145 = vmatpush1.msra.mxu0 0.0
    %2146 = vmatprep.subr.mxu0 0.0
    %2147 = vmatpush1.msra.mxu0 0.0
    %2148 = vmatprep.subr.mxu0 0.0
    %2149 = vmatpush1.msra.mxu0 0.0
    %2150 = vmatprep.subr.mxu0 0.0
    %2151 = vmatpush1.msra.mxu0 0.0
    %2152 = vmatprep.subr.mxu0 0.0
    %2153 = vmatpush1.msra.mxu0 0.0
    %2154 = vmatprep.subr.mxu0 0.0
    %2155 = vmatpush1.msra.mxu0 0.0
    %2156 = vmatprep.subr.mxu0 0.0
    %2157 = vmatpush1.msra.mxu0 0.0
    %2158 = vmatprep.subr.mxu0 0.0
    %2159 = vmatpush1.msra.mxu0 0.0
    %2160 = vmatprep.subr.mxu0 0.0
    %2161 = vmatpush1.msra.mxu0 0.0
    %2162 = vmatprep.subr.mxu0 0.0
    %2163 = vmatpush1.msra.mxu0 0.0
    %2164 = vmatprep.subr.mxu0 0.0
    %2165 = vmatpush1.msra.mxu0 0.0
    %2166 = vmatprep.subr.mxu0 0.0
    %2167 = vmatpush1.msra.mxu0 0.0
    %2168 = vmatprep.subr.mxu0 0.0
    %2169 = vmatpush1.msra.mxu0 0.0
    %2170 = vmatprep.subr.mxu0 0.0
    %2171 = vmatpush1.msra.mxu0 0.0
    %2172 = vmatprep.subr.mxu0 0.0
    %2173 = vmatpush1.msra.mxu0 0.0
    %2174 = vmatprep.subr.mxu0 0.0
    %2175 = vmatpush1.msra.mxu0 0.0
    %2176 = vmatprep.subr.mxu0 0.0
    %2177 = vmatpush1.msra.mxu0 0.0
    %2178 = vmatprep.subr.mxu0 0.0
    %2179 = vmatpush1.msra.mxu0 0.0
    %2180 = vmatprep.subr.mxu0 0.0
    %2181 = vmatpush1.msra.mxu0 0.0
    %2182 = vmatprep.subr.mxu0 0.0
    %2183 = vmatpush1.msra.mxu0 0.0
    %2184 = vmatprep.subr.mxu0 0.0
    %2185 = vmatpush1.msra.mxu0 0.0
    %2186 = vmatprep.subr.mxu0 0.0
    %2187 = vmatpush1.msra.mxu0 0.0
    %2188 = vmatprep.subr.mxu0 0.0
    %2189 = vmatpush1.msra.mxu0 0.0
    %2190 = vmatprep.subr.mxu0 0.0
    %2191 = vmatpush1.msra.mxu0 0.0
    %2192 = vmatprep.subr.mxu0 0.0
    %2193 = vmatpush1.msra.mxu0 0.0
    %2194 = vmatprep.subr.mxu0 0.0
    %2195 = vmatpush1.msra.mxu0 0.0
    %2196 = vmatprep.subr.mxu0 0.0
    %2197 = vmatpush1.msra.mxu0 0.0
    %2198 = vmatprep.mubr.f32.mxu0 0.0
    %2199 = vmatmul.mubr.f32.gmra.mrb[0].mxu0 %v2132
    %v2200 = vpop.f32.mrb[0].mxu0
    %v2201 = vadd.f32 0.0, %v2200
    %v2202 = vpop.f32.mrb[0].mxu0
    %2203 = vdwg.mxu0
    %v2204 = vadd.f32 %v2131, %v2201
    %v2205 = vxor.u32 %v2204, 2147483648
    %v2206 = vmul.f32 %v2205, 1.442695
    %v2207 = vpow.pop %v2206
    %v2208 = vadd.f32 %v2207, 1.0
    %v2209 = vrcp.pop %v2208
    %v2210 = vmul.f32 1.0, %v2209
    %v2211 = vtanh.pop %v2204
    %v2212 = vmul.f32 %v2210, %v2016
    %2214 = vrot.lane.b32.xlu0 %v2211, 64
    %v2215 = vpop.permute.xlu0 %2214
    %v2217 = vmul.f32 %v2210, %v2215
    %2219 = vrot.lane.b32.xlu0 %v2217, 32
    %v2220 = vpop.permute.xlu0 %2219
    %v2222 = vadd.f32 %v2212, %v2220
    %v2223 = vtanh.pop %v2222
    %2225 = vrot.lane.b32.xlu0 %v2223, 64
    %v2226 = vpop.permute.xlu0 %2225
    %v2228 = vmul.f32 %v2210, %v2226
    %2230 = vrot.lane.b32.xlu0 %v2228, 32
    %v2231 = vpop.permute.xlu0 %2230
    %2233 = vst.msk [vmem:[#allocation4 + $0x12] sm:$0x3] %vm380, %v2231
    %v2234 = vld [vmem:[#allocation3 + $0xc] sm:$0x3]
    %v2235 = vsel %vm277, %v2128, 0
    %2237 = vmatprep.subr.mxu0 0.0
    %2238 = vmatpush1.msra.mxu0 %v272
    %2239 = vmatprep.subr.mxu0 0.0
    %2240 = vmatpush1.msra.mxu0 %v273
    %2241 = vmatprep.subr.mxu0 0.0
    %2242 = vmatpush1.msra.mxu0 %v274
    %2243 = vmatprep.subr.mxu0 0.0
    %2244 = vmatpush1.msra.mxu0 %v275
    %2245 = vmatprep.subr.mxu0 0.0
    %2246 = vmatpush1.msra.mxu0 0.0
    %2247 = vmatprep.subr.mxu0 0.0
    %2248 = vmatpush1.msra.mxu0 0.0
    %2249 = vmatprep.subr.mxu0 0.0
    %2250 = vmatpush1.msra.mxu0 0.0
    %2251 = vmatprep.subr.mxu0 0.0
    %2252 = vmatpush1.msra.mxu0 0.0
    %2253 = vmatprep.subr.mxu0 0.0
    %2254 = vmatpush1.msra.mxu0 0.0
    %2255 = vmatprep.subr.mxu0 0.0
    %2256 = vmatpush1.msra.mxu0 0.0
    %2257 = vmatprep.subr.mxu0 0.0
    %2258 = vmatpush1.msra.mxu0 0.0
    %2259 = vmatprep.subr.mxu0 0.0
    %2260 = vmatpush1.msra.mxu0 0.0
    %2261 = vmatprep.subr.mxu0 0.0
    %2262 = vmatpush1.msra.mxu0 0.0
    %2263 = vmatprep.subr.mxu0 0.0
    %2264 = vmatpush1.msra.mxu0 0.0
    %2265 = vmatprep.subr.mxu0 0.0
    %2266 = vmatpush1.msra.mxu0 0.0
    %2267 = vmatprep.subr.mxu0 0.0
    %2268 = vmatpush1.msra.mxu0 0.0
    %2269 = vmatprep.subr.mxu0 0.0
    %2270 = vmatpush1.msra.mxu0 0.0
    %2271 = vmatprep.subr.mxu0 0.0
    %2272 = vmatpush1.msra.mxu0 0.0
    %2273 = vmatprep.subr.mxu0 0.0
    %2274 = vmatpush1.msra.mxu0 0.0
    %2275 = vmatprep.subr.mxu0 0.0
    %2276 = vmatpush1.msra.mxu0 0.0
    %2277 = vmatprep.subr.mxu0 0.0
    %2278 = vmatpush1.msra.mxu0 0.0
    %2279 = vmatprep.subr.mxu0 0.0
    %2280 = vmatpush1.msra.mxu0 0.0
    %2281 = vmatprep.subr.mxu0 0.0
    %2282 = vmatpush1.msra.mxu0 0.0
    %2283 = vmatprep.subr.mxu0 0.0
    %2284 = vmatpush1.msra.mxu0 0.0
    %2285 = vmatprep.subr.mxu0 0.0
    %2286 = vmatpush1.msra.mxu0 0.0
    %2287 = vmatprep.subr.mxu0 0.0
    %2288 = vmatpush1.msra.mxu0 0.0
    %2289 = vmatprep.subr.mxu0 0.0
    %2290 = vmatpush1.msra.mxu0 0.0
    %2291 = vmatprep.subr.mxu0 0.0
    %2292 = vmatpush1.msra.mxu0 0.0
    %2293 = vmatprep.subr.mxu0 0.0
    %2294 = vmatpush1.msra.mxu0 0.0
    %2295 = vmatprep.subr.mxu0 0.0
    %2296 = vmatpush1.msra.mxu0 0.0
    %2297 = vmatprep.subr.mxu0 0.0
    %2298 = vmatpush1.msra.mxu0 0.0
    %2299 = vmatprep.subr.mxu0 0.0
    %2300 = vmatpush1.msra.mxu0 0.0
    %2301 = vmatprep.mubr.f32.mxu0 0.0
    %2302 = vmatmul.mubr.f32.gmra.mrb[0].mxu0 %v2235
    %v2303 = vpop.f32.mrb[0].mxu0
    %v2304 = vadd.f32 0.0, %v2303
    %v2305 = vpop.f32.mrb[0].mxu0
    %2306 = vdwg.mxu0
    %v2307 = vadd.f32 %v2234, %v2304
    %v2308 = vxor.u32 %v2307, 2147483648
    %v2309 = vmul.f32 %v2308, 1.442695
    %v2310 = vpow.pop %v2309
    %v2311 = vadd.f32 %v2310, 1.0
    %v2312 = vrcp.pop %v2311
    %v2313 = vmul.f32 1.0, %v2312
    %v2314 = vtanh.pop %v2307
    %v2315 = vmul.f32 %v2313, %v2119
    %2317 = vrot.lane.b32.xlu0 %v2314, 64
    %v2318 = vpop.permute.xlu0 %2317
    %v2320 = vmul.f32 %v2313, %v2318
    %2322 = vrot.lane.b32.xlu0 %v2320, 32
    %v2323 = vpop.permute.xlu0 %2322
    %v2325 = vadd.f32 %v2315, %v2323
    %v2326 = vtanh.pop %v2325
    %2328 = vrot.lane.b32.xlu0 %v2326, 64
    %v2329 = vpop.permute.xlu0 %2328
    %v2331 = vmul.f32 %v2313, %v2329
    %2333 = vrot.lane.b32.xlu0 %v2331, 32
    %v2334 = vpop.permute.xlu0 %2333
    %2336 = vst.msk [vmem:[#allocation5 + $0xc] sm:$0x3] %vm380, %v2334
    %v2337 = vld [vmem:[#allocation2 + $0x14] sm:$0x3]
    %v2338 = vsel %vm277, %v2231, 0
    %2340 = vmatprep.subr.mxu0 0.0
    %2341 = vmatpush1.msra.mxu0 %v268
    %2342 = vmatprep.subr.mxu0 0.0
    %2343 = vmatpush1.msra.mxu0 %v269
    %2344 = vmatprep.subr.mxu0 0.0
    %2345 = vmatpush1.msra.mxu0 %v270
    %2346 = vmatprep.subr.mxu0 0.0
    %2347 = vmatpush1.msra.mxu0 %v271
    %2348 = vmatprep.subr.mxu0 0.0
    %2349 = vmatpush1.msra.mxu0 0.0
    %2350 = vmatprep.subr.mxu0 0.0
    %2351 = vmatpush1.msra.mxu0 0.0
    %2352 = vmatprep.subr.mxu0 0.0
    %2353 = vmatpush1.msra.mxu0 0.0
    %2354 = vmatprep.subr.mxu0 0.0
    %2355 = vmatpush1.msra.mxu0 0.0
    %2356 = vmatprep.subr.mxu0 0.0
    %2357 = vmatpush1.msra.mxu0 0.0
    %2358 = vmatprep.subr.mxu0 0.0
    %2359 = vmatpush1.msra.mxu0 0.0
    %2360 = vmatprep.subr.mxu0 0.0
    %2361 = vmatpush1.msra.mxu0 0.0
    %2362 = vmatprep.subr.mxu0 0.0
    %2363 = vmatpush1.msra.mxu0 0.0
    %2364 = vmatprep.subr.mxu0 0.0
    %2365 = vmatpush1.msra.mxu0 0.0
    %2366 = vmatprep.subr.mxu0 0.0
    %2367 = vmatpush1.msra.mxu0 0.0
    %2368 = vmatprep.subr.mxu0 0.0
    %2369 = vmatpush1.msra.mxu0 0.0
    %2370 = vmatprep.subr.mxu0 0.0
    %2371 = vmatpush1.msra.mxu0 0.0
    %2372 = vmatprep.subr.mxu0 0.0
    %2373 = vmatpush1.msra.mxu0 0.0
    %2374 = vmatprep.subr.mxu0 0.0
    %2375 = vmatpush1.msra.mxu0 0.0
    %2376 = vmatprep.subr.mxu0 0.0
    %2377 = vmatpush1.msra.mxu0 0.0
    %2378 = vmatprep.subr.mxu0 0.0
    %2379 = vmatpush1.msra.mxu0 0.0
    %2380 = vmatprep.subr.mxu0 0.0
    %2381 = vmatpush1.msra.mxu0 0.0
    %2382 = vmatprep.subr.mxu0 0.0
    %2383 = vmatpush1.msra.mxu0 0.0
    %2384 = vmatprep.subr.mxu0 0.0
    %2385 = vmatpush1.msra.mxu0 0.0
    %2386 = vmatprep.subr.mxu0 0.0
    %2387 = vmatpush1.msra.mxu0 0.0
    %2388 = vmatprep.subr.mxu0 0.0
    %2389 = vmatpush1.msra.mxu0 0.0
    %2390 = vmatprep.subr.mxu0 0.0
    %2391 = vmatpush1.msra.mxu0 0.0
    %2392 = vmatprep.subr.mxu0 0.0
    %2393 = vmatpush1.msra.mxu0 0.0
    %2394 = vmatprep.subr.mxu0 0.0
    %2395 = vmatpush1.msra.mxu0 0.0
    %2396 = vmatprep.subr.mxu0 0.0
    %2397 = vmatpush1.msra.mxu0 0.0
    %2398 = vmatprep.subr.mxu0 0.0
    %2399 = vmatpush1.msra.mxu0 0.0
    %2400 = vmatprep.subr.mxu0 0.0
    %2401 = vmatpush1.msra.mxu0 0.0
    %2402 = vmatprep.subr.mxu0 0.0
    %2403 = vmatpush1.msra.mxu0 0.0
    %2404 = vmatprep.mubr.f32.mxu0 0.0
    %2405 = vmatmul.mubr.f32.gmra.mrb[0].mxu0 %v2338
    %v2406 = vpop.f32.mrb[0].mxu0
    %v2407 = vadd.f32 0.0, %v2406
    %v2408 = vpop.f32.mrb[0].mxu0
    %2409 = vdwg.mxu0
    %v2410 = vadd.f32 %v2337, %v2407
    %v2411 = vxor.u32 %v2410, 2147483648
    %v2412 = vmul.f32 %v2411, 1.442695
    %v2413 = vpow.pop %v2412
    %v2414 = vadd.f32 %v2413, 1.0
    %v2415 = vrcp.pop %v2414
    %v2416 = vmul.f32 1.0, %v2415
    %v2417 = vtanh.pop %v2410
    %v2418 = vmul.f32 %v2416, %v2222
    %2420 = vrot.lane.b32.xlu0 %v2417, 64
    %v2421 = vpop.permute.xlu0 %2420
    %v2423 = vmul.f32 %v2416, %v2421
    %2425 = vrot.lane.b32.xlu0 %v2423, 32
    %v2426 = vpop.permute.xlu0 %2425
    %v2428 = vadd.f32 %v2418, %v2426
    %v2429 = vtanh.pop %v2428
    %2431 = vrot.lane.b32.xlu0 %v2429, 64
    %v2432 = vpop.permute.xlu0 %2431
    %v2434 = vmul.f32 %v2416, %v2432
    %2436 = vrot.lane.b32.xlu0 %v2434, 32
    %v2437 = vpop.permute.xlu0 %2436
    %2439 = vst.msk [vmem:[#allocation4 + $0x14] sm:$0x3] %vm380, %v2437
    %v2440 = vld [vmem:[#allocation3 + $0xa] sm:$0x3]
    %v2441 = vsel %vm277, %v2334, 0
    %2443 = vmatprep.subr.mxu0 0.0
    %2444 = vmatpush1.msra.mxu0 %v272
    %2445 = vmatprep.subr.mxu0 0.0
    %2446 = vmatpush1.msra.mxu0 %v273
    %2447 = vmatprep.subr.mxu0 0.0
    %2448 = vmatpush1.msra.mxu0 %v274
    %2449 = vmatprep.subr.mxu0 0.0
    %2450 = vmatpush1.msra.mxu0 %v275
    %2451 = vmatprep.subr.mxu0 0.0
    %2452 = vmatpush1.msra.mxu0 0.0
    %2453 = vmatprep.subr.mxu0 0.0
    %2454 = vmatpush1.msra.mxu0 0.0
    %2455 = vmatprep.subr.mxu0 0.0
    %2456 = vmatpush1.msra.mxu0 0.0
    %2457 = vmatprep.subr.mxu0 0.0
    %2458 = vmatpush1.msra.mxu0 0.0
    %2459 = vmatprep.subr.mxu0 0.0
    %2460 = vmatpush1.msra.mxu0 0.0
    %2461 = vmatprep.subr.mxu0 0.0
    %2462 = vmatpush1.msra.mxu0 0.0
    %2463 = vmatprep.subr.mxu0 0.0
    %2464 = vmatpush1.msra.mxu0 0.0
    %2465 = vmatprep.subr.mxu0 0.0
    %2466 = vmatpush1.msra.mxu0 0.0
    %2467 = vmatprep.subr.mxu0 0.0
    %2468 = vmatpush1.msra.mxu0 0.0
    %2469 = vmatprep.subr.mxu0 0.0
    %2470 = vmatpush1.msra.mxu0 0.0
    %2471 = vmatprep.subr.mxu0 0.0
    %2472 = vmatpush1.msra.mxu0 0.0
    %2473 = vmatprep.subr.mxu0 0.0
    %2474 = vmatpush1.msra.mxu0 0.0
    %2475 = vmatprep.subr.mxu0 0.0
    %2476 = vmatpush1.msra.mxu0 0.0
    %2477 = vmatprep.subr.mxu0 0.0
    %2478 = vmatpush1.msra.mxu0 0.0
    %2479 = vmatprep.subr.mxu0 0.0
    %2480 = vmatpush1.msra.mxu0 0.0
    %2481 = vmatprep.subr.mxu0 0.0
    %2482 = vmatpush1.msra.mxu0 0.0
    %2483 = vmatprep.subr.mxu0 0.0
    %2484 = vmatpush1.msra.mxu0 0.0
    %2485 = vmatprep.subr.mxu0 0.0
    %2486 = vmatpush1.msra.mxu0 0.0
    %2487 = vmatprep.subr.mxu0 0.0
    %2488 = vmatpush1.msra.mxu0 0.0
    %2489 = vmatprep.subr.mxu0 0.0
    %2490 = vmatpush1.msra.mxu0 0.0
    %2491 = vmatprep.subr.mxu0 0.0
    %2492 = vmatpush1.msra.mxu0 0.0
    %2493 = vmatprep.subr.mxu0 0.0
    %2494 = vmatpush1.msra.mxu0 0.0
    %2495 = vmatprep.subr.mxu0 0.0
    %2496 = vmatpush1.msra.mxu0 0.0
    %2497 = vmatprep.subr.mxu0 0.0
    %2498 = vmatpush1.msra.mxu0 0.0
    %2499 = vmatprep.subr.mxu0 0.0
    %2500 = vmatpush1.msra.mxu0 0.0
    %2501 = vmatprep.subr.mxu0 0.0
    %2502 = vmatpush1.msra.mxu0 0.0
    %2503 = vmatprep.subr.mxu0 0.0
    %2504 = vmatpush1.msra.mxu0 0.0
    %2505 = vmatprep.subr.mxu0 0.0
    %2506 = vmatpush1.msra.mxu0 0.0
    %2507 = vmatprep.mubr.f32.mxu0 0.0
    %2508 = vmatmul.mubr.f32.gmra.mrb[0].mxu0 %v2441
    %v2509 = vpop.f32.mrb[0].mxu0
    %v2510 = vadd.f32 0.0, %v2509
    %v2511 = vpop.f32.mrb[0].mxu0
    %2512 = vdwg.mxu0
    %v2513 = vadd.f32 %v2440, %v2510
    %v2514 = vxor.u32 %v2513, 2147483648
    %v2515 = vmul.f32 %v2514, 1.442695
    %v2516 = vpow.pop %v2515
    %v2517 = vadd.f32 %v2516, 1.0
    %v2518 = vrcp.pop %v2517
    %v2519 = vmul.f32 1.0, %v2518
    %v2520 = vtanh.pop %v2513
    %v2521 = vmul.f32 %v2519, %v2325
    %2523 = vrot.lane.b32.xlu0 %v2520, 64
    %v2524 = vpop.permute.xlu0 %2523
    %v2526 = vmul.f32 %v2519, %v2524
    %2528 = vrot.lane.b32.xlu0 %v2526, 32
    %v2529 = vpop.permute.xlu0 %2528
    %v2531 = vadd.f32 %v2521, %v2529
    %v2532 = vtanh.pop %v2531
    %2534 = vrot.lane.b32.xlu0 %v2532, 64
    %v2535 = vpop.permute.xlu0 %2534
    %v2537 = vmul.f32 %v2519, %v2535
    %2539 = vrot.lane.b32.xlu0 %v2537, 32
    %v2540 = vpop.permute.xlu0 %2539
    %2542 = vst.msk [vmem:[#allocation5 + $0xa] sm:$0x3] %vm380, %v2540
    %v2543 = vld [vmem:[#allocation2 + $0x16] sm:$0x3]
    %v2544 = vsel %vm277, %v2437, 0
    %2546 = vmatprep.subr.mxu0 0.0
    %2547 = vmatpush1.msra.mxu0 %v268
    %2548 = vmatprep.subr.mxu0 0.0
    %2549 = vmatpush1.msra.mxu0 %v269
    %2550 = vmatprep.subr.mxu0 0.0
    %2551 = vmatpush1.msra.mxu0 %v270
    %2552 = vmatprep.subr.mxu0 0.0
    %2553 = vmatpush1.msra.mxu0 %v271
    %2554 = vmatprep.subr.mxu0 0.0
    %2555 = vmatpush1.msra.mxu0 0.0
    %2556 = vmatprep.subr.mxu0 0.0
    %2557 = vmatpush1.msra.mxu0 0.0
    %2558 = vmatprep.subr.mxu0 0.0
    %2559 = vmatpush1.msra.mxu0 0.0
    %2560 = vmatprep.subr.mxu0 0.0
    %2561 = vmatpush1.msra.mxu0 0.0
    %2562 = vmatprep.subr.mxu0 0.0
    %2563 = vmatpush1.msra.mxu0 0.0
    %2564 = vmatprep.subr.mxu0 0.0
    %2565 = vmatpush1.msra.mxu0 0.0
    %2566 = vmatprep.subr.mxu0 0.0
    %2567 = vmatpush1.msra.mxu0 0.0
    %2568 = vmatprep.subr.mxu0 0.0
    %2569 = vmatpush1.msra.mxu0 0.0
    %2570 = vmatprep.subr.mxu0 0.0
    %2571 = vmatpush1.msra.mxu0 0.0
    %2572 = vmatprep.subr.mxu0 0.0
    %2573 = vmatpush1.msra.mxu0 0.0
    %2574 = vmatprep.subr.mxu0 0.0
    %2575 = vmatpush1.msra.mxu0 0.0
    %2576 = vmatprep.subr.mxu0 0.0
    %2577 = vmatpush1.msra.mxu0 0.0
    %2578 = vmatprep.subr.mxu0 0.0
    %2579 = vmatpush1.msra.mxu0 0.0
    %2580 = vmatprep.subr.mxu0 0.0
    %2581 = vmatpush1.msra.mxu0 0.0
    %2582 = vmatprep.subr.mxu0 0.0
    %2583 = vmatpush1.msra.mxu0 0.0
    %2584 = vmatprep.subr.mxu0 0.0
    %2585 = vmatpush1.msra.mxu0 0.0
    %2586 = vmatprep.subr.mxu0 0.0
    %2587 = vmatpush1.msra.mxu0 0.0
    %2588 = vmatprep.subr.mxu0 0.0
    %2589 = vmatpush1.msra.mxu0 0.0
    %2590 = vmatprep.subr.mxu0 0.0
    %2591 = vmatpush1.msra.mxu0 0.0
    %2592 = vmatprep.subr.mxu0 0.0
    %2593 = vmatpush1.msra.mxu0 0.0
    %2594 = vmatprep.subr.mxu0 0.0
    %2595 = vmatpush1.msra.mxu0 0.0
    %2596 = vmatprep.subr.mxu0 0.0
    %2597 = vmatpush1.msra.mxu0 0.0
    %2598 = vmatprep.subr.mxu0 0.0
    %2599 = vmatpush1.msra.mxu0 0.0
    %2600 = vmatprep.subr.mxu0 0.0
    %2601 = vmatpush1.msra.mxu0 0.0
    %2602 = vmatprep.subr.mxu0 0.0
    %2603 = vmatpush1.msra.mxu0 0.0
    %2604 = vmatprep.subr.mxu0 0.0
    %2605 = vmatpush1.msra.mxu0 0.0
    %2606 = vmatprep.subr.mxu0 0.0
    %2607 = vmatpush1.msra.mxu0 0.0
    %2608 = vmatprep.subr.mxu0 0.0
    %2609 = vmatpush1.msra.mxu0 0.0
    %2610 = vmatprep.mubr.f32.mxu0 0.0
    %2611 = vmatmul.mubr.f32.gmra.mrb[0].mxu0 %v2544
    %v2612 = vpop.f32.mrb[0].mxu0
    %v2613 = vadd.f32 0.0, %v2612
    %v2614 = vpop.f32.mrb[0].mxu0
    %2615 = vdwg.mxu0
    %v2616 = vadd.f32 %v2543, %v2613
    %v2617 = vxor.u32 %v2616, 2147483648
    %v2618 = vmul.f32 %v2617, 1.442695
    %v2619 = vpow.pop %v2618
    %v2620 = vadd.f32 %v2619, 1.0
    %v2621 = vrcp.pop %v2620
    %v2622 = vmul.f32 1.0, %v2621
    %v2623 = vtanh.pop %v2616
    %v2624 = vmul.f32 %v2622, %v2428
    %2626 = vrot.lane.b32.xlu0 %v2623, 64
    %v2627 = vpop.permute.xlu0 %2626
    %v2629 = vmul.f32 %v2622, %v2627
    %2631 = vrot.lane.b32.xlu0 %v2629, 32
    %v2632 = vpop.permute.xlu0 %2631
    %v2634 = vadd.f32 %v2624, %v2632
    %v2635 = vtanh.pop %v2634
    %2637 = vrot.lane.b32.xlu0 %v2635, 64
    %v2638 = vpop.permute.xlu0 %2637
    %v2640 = vmul.f32 %v2622, %v2638
    %2642 = vrot.lane.b32.xlu0 %v2640, 32
    %v2643 = vpop.permute.xlu0 %2642
    %2645 = vst.msk [vmem:[#allocation4 + $0x16] sm:$0x3] %vm380, %v2643
    %v2646 = vld [vmem:[#allocation3 + $0x8] sm:$0x3]
    %v2647 = vsel %vm277, %v2540, 0
    %2649 = vmatprep.subr.mxu0 0.0
    %2650 = vmatpush1.msra.mxu0 %v272
    %2651 = vmatprep.subr.mxu0 0.0
    %2652 = vmatpush1.msra.mxu0 %v273
    %2653 = vmatprep.subr.mxu0 0.0
    %2654 = vmatpush1.msra.mxu0 %v274
    %2655 = vmatprep.subr.mxu0 0.0
    %2656 = vmatpush1.msra.mxu0 %v275
    %2657 = vmatprep.subr.mxu0 0.0
    %2658 = vmatpush1.msra.mxu0 0.0
    %2659 = vmatprep.subr.mxu0 0.0
    %2660 = vmatpush1.msra.mxu0 0.0
    %2661 = vmatprep.subr.mxu0 0.0
    %2662 = vmatpush1.msra.mxu0 0.0
    %2663 = vmatprep.subr.mxu0 0.0
    %2664 = vmatpush1.msra.mxu0 0.0
    %2665 = vmatprep.subr.mxu0 0.0
    %2666 = vmatpush1.msra.mxu0 0.0
    %2667 = vmatprep.subr.mxu0 0.0
    %2668 = vmatpush1.msra.mxu0 0.0
    %2669 = vmatprep.subr.mxu0 0.0
    %2670 = vmatpush1.msra.mxu0 0.0
    %2671 = vmatprep.subr.mxu0 0.0
    %2672 = vmatpush1.msra.mxu0 0.0
    %2673 = vmatprep.subr.mxu0 0.0
    %2674 = vmatpush1.msra.mxu0 0.0
    %2675 = vmatprep.subr.mxu0 0.0
    %2676 = vmatpush1.msra.mxu0 0.0
    %2677 = vmatprep.subr.mxu0 0.0
    %2678 = vmatpush1.msra.mxu0 0.0
    %2679 = vmatprep.subr.mxu0 0.0
    %2680 = vmatpush1.msra.mxu0 0.0
    %2681 = vmatprep.subr.mxu0 0.0
    %2682 = vmatpush1.msra.mxu0 0.0
    %2683 = vmatprep.subr.mxu0 0.0
    %2684 = vmatpush1.msra.mxu0 0.0
    %2685 = vmatprep.subr.mxu0 0.0
    %2686 = vmatpush1.msra.mxu0 0.0
    %2687 = vmatprep.subr.mxu0 0.0
    %2688 = vmatpush1.msra.mxu0 0.0
    %2689 = vmatprep.subr.mxu0 0.0
    %2690 = vmatpush1.msra.mxu0 0.0
    %2691 = vmatprep.subr.mxu0 0.0
    %2692 = vmatpush1.msra.mxu0 0.0
    %2693 = vmatprep.subr.mxu0 0.0
    %2694 = vmatpush1.msra.mxu0 0.0
    %2695 = vmatprep.subr.mxu0 0.0
    %2696 = vmatpush1.msra.mxu0 0.0
    %2697 = vmatprep.subr.mxu0 0.0
    %2698 = vmatpush1.msra.mxu0 0.0
    %2699 = vmatprep.subr.mxu0 0.0
    %2700 = vmatpush1.msra.mxu0 0.0
    %2701 = vmatprep.subr.mxu0 0.0
    %2702 = vmatpush1.msra.mxu0 0.0
    %2703 = vmatprep.subr.mxu0 0.0
    %2704 = vmatpush1.msra.mxu0 0.0
    %2705 = vmatprep.subr.mxu0 0.0
    %2706 = vmatpush1.msra.mxu0 0.0
    %2707 = vmatprep.subr.mxu0 0.0
    %2708 = vmatpush1.msra.mxu0 0.0
    %2709 = vmatprep.subr.mxu0 0.0
    %2710 = vmatpush1.msra.mxu0 0.0
    %2711 = vmatprep.subr.mxu0 0.0
    %2712 = vmatpush1.msra.mxu0 0.0
    %2713 = vmatprep.mubr.f32.mxu0 0.0
    %2714 = vmatmul.mubr.f32.gmra.mrb[0].mxu0 %v2647
    %v2715 = vpop.f32.mrb[0].mxu0
    %v2716 = vadd.f32 0.0, %v2715
    %v2717 = vpop.f32.mrb[0].mxu0
    %2718 = vdwg.mxu0
    %v2719 = vadd.f32 %v2646, %v2716
    %v2720 = vxor.u32 %v2719, 2147483648
    %v2721 = vmul.f32 %v2720, 1.442695
    %v2722 = vpow.pop %v2721
    %v2723 = vadd.f32 %v2722, 1.0
    %v2724 = vrcp.pop %v2723
    %v2725 = vmul.f32 1.0, %v2724
    %v2726 = vtanh.pop %v2719
    %v2727 = vmul.f32 %v2725, %v2531
    %2729 = vrot.lane.b32.xlu0 %v2726, 64
    %v2730 = vpop.permute.xlu0 %2729
    %v2732 = vmul.f32 %v2725, %v2730
    %2734 = vrot.lane.b32.xlu0 %v2732, 32
    %v2735 = vpop.permute.xlu0 %2734
    %v2737 = vadd.f32 %v2727, %v2735
    %v2738 = vtanh.pop %v2737
    %2740 = vrot.lane.b32.xlu0 %v2738, 64
    %v2741 = vpop.permute.xlu0 %2740
    %v2743 = vmul.f32 %v2725, %v2741
    %2745 = vrot.lane.b32.xlu0 %v2743, 32
    %v2746 = vpop.permute.xlu0 %2745
    %2748 = vst.msk [vmem:[#allocation5 + $0x8] sm:$0x3] %vm380, %v2746
    %v2749 = vld [vmem:[#allocation2 + $0x18] sm:$0x3]
    %v2750 = vsel %vm277, %v2643, 0
    %2752 = vmatprep.subr.mxu0 0.0
    %2753 = vmatpush1.msra.mxu0 %v268
    %2754 = vmatprep.subr.mxu0 0.0
    %2755 = vmatpush1.msra.mxu0 %v269
    %2756 = vmatprep.subr.mxu0 0.0
    %2757 = vmatpush1.msra.mxu0 %v270
    %2758 = vmatprep.subr.mxu0 0.0
    %2759 = vmatpush1.msra.mxu0 %v271
    %2760 = vmatprep.subr.mxu0 0.0
    %2761 = vmatpush1.msra.mxu0 0.0
    %2762 = vmatprep.subr.mxu0 0.0
    %2763 = vmatpush1.msra.mxu0 0.0
    %2764 = vmatprep.subr.mxu0 0.0
    %2765 = vmatpush1.msra.mxu0 0.0
    %2766 = vmatprep.subr.mxu0 0.0
    %2767 = vmatpush1.msra.mxu0 0.0
    %2768 = vmatprep.subr.mxu0 0.0
    %2769 = vmatpush1.msra.mxu0 0.0
    %2770 = vmatprep.subr.mxu0 0.0
    %2771 = vmatpush1.msra.mxu0 0.0
    %2772 = vmatprep.subr.mxu0 0.0
    %2773 = vmatpush1.msra.mxu0 0.0
    %2774 = vmatprep.subr.mxu0 0.0
    %2775 = vmatpush1.msra.mxu0 0.0
    %2776 = vmatprep.subr.mxu0 0.0
    %2777 = vmatpush1.msra.mxu0 0.0
    %2778 = vmatprep.subr.mxu0 0.0
    %2779 = vmatpush1.msra.mxu0 0.0
    %2780 = vmatprep.subr.mxu0 0.0
    %2781 = vmatpush1.msra.mxu0 0.0
    %2782 = vmatprep.subr.mxu0 0.0
    %2783 = vmatpush1.msra.mxu0 0.0
    %2784 = vmatprep.subr.mxu0 0.0
    %2785 = vmatpush1.msra.mxu0 0.0
    %2786 = vmatprep.subr.mxu0 0.0
    %2787 = vmatpush1.msra.mxu0 0.0
    %2788 = vmatprep.subr.mxu0 0.0
    %2789 = vmatpush1.msra.mxu0 0.0
    %2790 = vmatprep.subr.mxu0 0.0
    %2791 = vmatpush1.msra.mxu0 0.0
    %2792 = vmatprep.subr.mxu0 0.0
    %2793 = vmatpush1.msra.mxu0 0.0
    %2794 = vmatprep.subr.mxu0 0.0
    %2795 = vmatpush1.msra.mxu0 0.0
    %2796 = vmatprep.subr.mxu0 0.0
    %2797 = vmatpush1.msra.mxu0 0.0
    %2798 = vmatprep.subr.mxu0 0.0
    %2799 = vmatpush1.msra.mxu0 0.0
    %2800 = vmatprep.subr.mxu0 0.0
    %2801 = vmatpush1.msra.mxu0 0.0
    %2802 = vmatprep.subr.mxu0 0.0
    %2803 = vmatpush1.msra.mxu0 0.0
    %2804 = vmatprep.subr.mxu0 0.0
    %2805 = vmatpush1.msra.mxu0 0.0
    %2806 = vmatprep.subr.mxu0 0.0
    %2807 = vmatpush1.msra.mxu0 0.0
    %2808 = vmatprep.subr.mxu0 0.0
    %2809 = vmatpush1.msra.mxu0 0.0
    %2810 = vmatprep.subr.mxu0 0.0
    %2811 = vmatpush1.msra.mxu0 0.0
    %2812 = vmatprep.subr.mxu0 0.0
    %2813 = vmatpush1.msra.mxu0 0.0
    %2814 = vmatprep.subr.mxu0 0.0
    %2815 = vmatpush1.msra.mxu0 0.0
    %2816 = vmatprep.mubr.f32.mxu0 0.0
    %2817 = vmatmul.mubr.f32.gmra.mrb[0].mxu0 %v2750
    %v2818 = vpop.f32.mrb[0].mxu0
    %v2819 = vadd.f32 0.0, %v2818
    %v2820 = vpop.f32.mrb[0].mxu0
    %2821 = vdwg.mxu0
    %v2822 = vadd.f32 %v2749, %v2819
    %v2823 = vxor.u32 %v2822, 2147483648
    %v2824 = vmul.f32 %v2823, 1.442695
    %v2825 = vpow.pop %v2824
    %v2826 = vadd.f32 %v2825, 1.0
    %v2827 = vrcp.pop %v2826
    %v2828 = vmul.f32 1.0, %v2827
    %v2829 = vtanh.pop %v2822
    %v2830 = vmul.f32 %v2828, %v2634
    %2832 = vrot.lane.b32.xlu0 %v2829, 64
    %v2833 = vpop.permute.xlu0 %2832
    %v2835 = vmul.f32 %v2828, %v2833
    %2837 = vrot.lane.b32.xlu0 %v2835, 32
    %v2838 = vpop.permute.xlu0 %2837
    %v2840 = vadd.f32 %v2830, %v2838
    %v2841 = vtanh.pop %v2840
    %2843 = vrot.lane.b32.xlu0 %v2841, 64
    %v2844 = vpop.permute.xlu0 %2843
    %v2846 = vmul.f32 %v2828, %v2844
    %2848 = vrot.lane.b32.xlu0 %v2846, 32
    %v2849 = vpop.permute.xlu0 %2848
    %2851 = vst.msk [vmem:[#allocation4 + $0x18] sm:$0x3] %vm380, %v2849
    %v2852 = vld [vmem:[#allocation3 + $0x6] sm:$0x3]
    %v2853 = vsel %vm277, %v2746, 0
    %2855 = vmatprep.subr.mxu0 0.0
    %2856 = vmatpush1.msra.mxu0 %v272
    %2857 = vmatprep.subr.mxu0 0.0
    %2858 = vmatpush1.msra.mxu0 %v273
    %2859 = vmatprep.subr.mxu0 0.0
    %2860 = vmatpush1.msra.mxu0 %v274
    %2861 = vmatprep.subr.mxu0 0.0
    %2862 = vmatpush1.msra.mxu0 %v275
    %2863 = vmatprep.subr.mxu0 0.0
    %2864 = vmatpush1.msra.mxu0 0.0
    %2865 = vmatprep.subr.mxu0 0.0
    %2866 = vmatpush1.msra.mxu0 0.0
    %2867 = vmatprep.subr.mxu0 0.0
    %2868 = vmatpush1.msra.mxu0 0.0
    %2869 = vmatprep.subr.mxu0 0.0
    %2870 = vmatpush1.msra.mxu0 0.0
    %2871 = vmatprep.subr.mxu0 0.0
    %2872 = vmatpush1.msra.mxu0 0.0
    %2873 = vmatprep.subr.mxu0 0.0
    %2874 = vmatpush1.msra.mxu0 0.0
    %2875 = vmatprep.subr.mxu0 0.0
    %2876 = vmatpush1.msra.mxu0 0.0
    %2877 = vmatprep.subr.mxu0 0.0
    %2878 = vmatpush1.msra.mxu0 0.0
    %2879 = vmatprep.subr.mxu0 0.0
    %2880 = vmatpush1.msra.mxu0 0.0
    %2881 = vmatprep.subr.mxu0 0.0
    %2882 = vmatpush1.msra.mxu0 0.0
    %2883 = vmatprep.subr.mxu0 0.0
    %2884 = vmatpush1.msra.mxu0 0.0
    %2885 = vmatprep.subr.mxu0 0.0
    %2886 = vmatpush1.msra.mxu0 0.0
    %2887 = vmatprep.subr.mxu0 0.0
    %2888 = vmatpush1.msra.mxu0 0.0
    %2889 = vmatprep.subr.mxu0 0.0
    %2890 = vmatpush1.msra.mxu0 0.0
    %2891 = vmatprep.subr.mxu0 0.0
    %2892 = vmatpush1.msra.mxu0 0.0
    %2893 = vmatprep.subr.mxu0 0.0
    %2894 = vmatpush1.msra.mxu0 0.0
    %2895 = vmatprep.subr.mxu0 0.0
    %2896 = vmatpush1.msra.mxu0 0.0
    %2897 = vmatprep.subr.mxu0 0.0
    %2898 = vmatpush1.msra.mxu0 0.0
    %2899 = vmatprep.subr.mxu0 0.0
    %2900 = vmatpush1.msra.mxu0 0.0
    %2901 = vmatprep.subr.mxu0 0.0
    %2902 = vmatpush1.msra.mxu0 0.0
    %2903 = vmatprep.subr.mxu0 0.0
    %2904 = vmatpush1.msra.mxu0 0.0
    %2905 = vmatprep.subr.mxu0 0.0
    %2906 = vmatpush1.msra.mxu0 0.0
    %2907 = vmatprep.subr.mxu0 0.0
    %2908 = vmatpush1.msra.mxu0 0.0
    %2909 = vmatprep.subr.mxu0 0.0
    %2910 = vmatpush1.msra.mxu0 0.0
    %2911 = vmatprep.subr.mxu0 0.0
    %2912 = vmatpush1.msra.mxu0 0.0
    %2913 = vmatprep.subr.mxu0 0.0
    %2914 = vmatpush1.msra.mxu0 0.0
    %2915 = vmatprep.subr.mxu0 0.0
    %2916 = vmatpush1.msra.mxu0 0.0
    %2917 = vmatprep.subr.mxu0 0.0
    %2918 = vmatpush1.msra.mxu0 0.0
    %2919 = vmatprep.mubr.f32.mxu0 0.0
    %2920 = vmatmul.mubr.f32.gmra.mrb[0].mxu0 %v2853
    %v2921 = vpop.f32.mrb[0].mxu0
    %v2922 = vadd.f32 0.0, %v2921
    %v2923 = vpop.f32.mrb[0].mxu0
    %2924 = vdwg.mxu0
    %v2925 = vadd.f32 %v2852, %v2922
    %v2926 = vxor.u32 %v2925, 2147483648
    %v2927 = vmul.f32 %v2926, 1.442695
    %v2928 = vpow.pop %v2927
    %v2929 = vadd.f32 %v2928, 1.0
    %v2930 = vrcp.pop %v2929
    %v2931 = vmul.f32 1.0, %v2930
    %v2932 = vtanh.pop %v2925
    %v2933 = vmul.f32 %v2931, %v2737
    %2935 = vrot.lane.b32.xlu0 %v2932, 64
    %v2936 = vpop.permute.xlu0 %2935
    %v2938 = vmul.f32 %v2931, %v2936
    %2940 = vrot.lane.b32.xlu0 %v2938, 32
    %v2941 = vpop.permute.xlu0 %2940
    %v2943 = vadd.f32 %v2933, %v2941
    %v2944 = vtanh.pop %v2943
    %2946 = vrot.lane.b32.xlu0 %v2944, 64
    %v2947 = vpop.permute.xlu0 %2946
    %v2949 = vmul.f32 %v2931, %v2947
    %2951 = vrot.lane.b32.xlu0 %v2949, 32
    %v2952 = vpop.permute.xlu0 %2951
    %2954 = vst.msk [vmem:[#allocation5 + $0x6] sm:$0x3] %vm380, %v2952
    %v2955 = vld [vmem:[#allocation2 + $0x1a] sm:$0x3]
    %v2956 = vsel %vm277, %v2849, 0
    %2958 = vmatprep.subr.mxu0 0.0
    %2959 = vmatpush1.msra.mxu0 %v268
    %2960 = vmatprep.subr.mxu0 0.0
    %2961 = vmatpush1.msra.mxu0 %v269
    %2962 = vmatprep.subr.mxu0 0.0
    %2963 = vmatpush1.msra.mxu0 %v270
    %2964 = vmatprep.subr.mxu0 0.0
    %2965 = vmatpush1.msra.mxu0 %v271
    %2966 = vmatprep.subr.mxu0 0.0
    %2967 = vmatpush1.msra.mxu0 0.0
    %2968 = vmatprep.subr.mxu0 0.0
    %2969 = vmatpush1.msra.mxu0 0.0
    %2970 = vmatprep.subr.mxu0 0.0
    %2971 = vmatpush1.msra.mxu0 0.0
    %2972 = vmatprep.subr.mxu0 0.0
    %2973 = vmatpush1.msra.mxu0 0.0
    %2974 = vmatprep.subr.mxu0 0.0
    %2975 = vmatpush1.msra.mxu0 0.0
    %2976 = vmatprep.subr.mxu0 0.0
    %2977 = vmatpush1.msra.mxu0 0.0
    %2978 = vmatprep.subr.mxu0 0.0
    %2979 = vmatpush1.msra.mxu0 0.0
    %2980 = vmatprep.subr.mxu0 0.0
    %2981 = vmatpush1.msra.mxu0 0.0
    %2982 = vmatprep.subr.mxu0 0.0
    %2983 = vmatpush1.msra.mxu0 0.0
    %2984 = vmatprep.subr.mxu0 0.0
    %2985 = vmatpush1.msra.mxu0 0.0
    %2986 = vmatprep.subr.mxu0 0.0
    %2987 = vmatpush1.msra.mxu0 0.0
    %2988 = vmatprep.subr.mxu0 0.0
    %2989 = vmatpush1.msra.mxu0 0.0
    %2990 = vmatprep.subr.mxu0 0.0
    %2991 = vmatpush1.msra.mxu0 0.0
    %2992 = vmatprep.subr.mxu0 0.0
    %2993 = vmatpush1.msra.mxu0 0.0
    %2994 = vmatprep.subr.mxu0 0.0
    %2995 = vmatpush1.msra.mxu0 0.0
    %2996 = vmatprep.subr.mxu0 0.0
    %2997 = vmatpush1.msra.mxu0 0.0
    %2998 = vmatprep.subr.mxu0 0.0
    %2999 = vmatpush1.msra.mxu0 0.0
    %3000 = vmatprep.subr.mxu0 0.0
    %3001 = vmatpush1.msra.mxu0 0.0
    %3002 = vmatprep.subr.mxu0 0.0
    %3003 = vmatpush1.msra.mxu0 0.0
    %3004 = vmatprep.subr.mxu0 0.0
    %3005 = vmatpush1.msra.mxu0 0.0
    %3006 = vmatprep.subr.mxu0 0.0
    %3007 = vmatpush1.msra.mxu0 0.0
    %3008 = vmatprep.subr.mxu0 0.0
    %3009 = vmatpush1.msra.mxu0 0.0
    %3010 = vmatprep.subr.mxu0 0.0
    %3011 = vmatpush1.msra.mxu0 0.0
    %3012 = vmatprep.subr.mxu0 0.0
    %3013 = vmatpush1.msra.mxu0 0.0
    %3014 = vmatprep.subr.mxu0 0.0
    %3015 = vmatpush1.msra.mxu0 0.0
    %3016 = vmatprep.subr.mxu0 0.0
    %3017 = vmatpush1.msra.mxu0 0.0
    %3018 = vmatprep.subr.mxu0 0.0
    %3019 = vmatpush1.msra.mxu0 0.0
    %3020 = vmatprep.subr.mxu0 0.0
    %3021 = vmatpush1.msra.mxu0 0.0
    %3022 = vmatprep.mubr.f32.mxu0 0.0
    %3023 = vmatmul.mubr.f32.gmra.mrb[0].mxu0 %v2956
    %v3024 = vpop.f32.mrb[0].mxu0
    %v3025 = vadd.f32 0.0, %v3024
    %v3026 = vpop.f32.mrb[0].mxu0
    %3027 = vdwg.mxu0
    %v3028 = vadd.f32 %v2955, %v3025
    %v3029 = vxor.u32 %v3028, 2147483648
    %v3030 = vmul.f32 %v3029, 1.442695
    %v3031 = vpow.pop %v3030
    %v3032 = vadd.f32 %v3031, 1.0
    %v3033 = vrcp.pop %v3032
    %v3034 = vmul.f32 1.0, %v3033
    %v3035 = vtanh.pop %v3028
    %v3036 = vmul.f32 %v3034, %v2840
    %3038 = vrot.lane.b32.xlu0 %v3035, 64
    %v3039 = vpop.permute.xlu0 %3038
    %v3041 = vmul.f32 %v3034, %v3039
    %3043 = vrot.lane.b32.xlu0 %v3041, 32
    %v3044 = vpop.permute.xlu0 %3043
    %v3046 = vadd.f32 %v3036, %v3044
    %v3047 = vtanh.pop %v3046
    %3049 = vrot.lane.b32.xlu0 %v3047, 64
    %v3050 = vpop.permute.xlu0 %3049
    %v3052 = vmul.f32 %v3034, %v3050
    %3054 = vrot.lane.b32.xlu0 %v3052, 32
    %v3055 = vpop.permute.xlu0 %3054
    %3057 = vst.msk [vmem:[#allocation4 + $0x1a] sm:$0x3] %vm380, %v3055
    %v3058 = vld [vmem:[#allocation3 + $0x4] sm:$0x3]
    %v3059 = vsel %vm277, %v2952, 0
    %3061 = vmatprep.subr.mxu0 0.0
    %3062 = vmatpush1.msra.mxu0 %v272
    %3063 = vmatprep.subr.mxu0 0.0
    %3064 = vmatpush1.msra.mxu0 %v273
    %3065 = vmatprep.subr.mxu0 0.0
    %3066 = vmatpush1.msra.mxu0 %v274
    %3067 = vmatprep.subr.mxu0 0.0
    %3068 = vmatpush1.msra.mxu0 %v275
    %3069 = vmatprep.subr.mxu0 0.0
    %3070 = vmatpush1.msra.mxu0 0.0
    %3071 = vmatprep.subr.mxu0 0.0
    %3072 = vmatpush1.msra.mxu0 0.0
    %3073 = vmatprep.subr.mxu0 0.0
    %3074 = vmatpush1.msra.mxu0 0.0
    %3075 = vmatprep.subr.mxu0 0.0
    %3076 = vmatpush1.msra.mxu0 0.0
    %3077 = vmatprep.subr.mxu0 0.0
    %3078 = vmatpush1.msra.mxu0 0.0
    %3079 = vmatprep.subr.mxu0 0.0
    %3080 = vmatpush1.msra.mxu0 0.0
    %3081 = vmatprep.subr.mxu0 0.0
    %3082 = vmatpush1.msra.mxu0 0.0
    %3083 = vmatprep.subr.mxu0 0.0
    %3084 = vmatpush1.msra.mxu0 0.0
    %3085 = vmatprep.subr.mxu0 0.0
    %3086 = vmatpush1.msra.mxu0 0.0
    %3087 = vmatprep.subr.mxu0 0.0
    %3088 = vmatpush1.msra.mxu0 0.0
    %3089 = vmatprep.subr.mxu0 0.0
    %3090 = vmatpush1.msra.mxu0 0.0
    %3091 = vmatprep.subr.mxu0 0.0
    %3092 = vmatpush1.msra.mxu0 0.0
    %3093 = vmatprep.subr.mxu0 0.0
    %3094 = vmatpush1.msra.mxu0 0.0
    %3095 = vmatprep.subr.mxu0 0.0
    %3096 = vmatpush1.msra.mxu0 0.0
    %3097 = vmatprep.subr.mxu0 0.0
    %3098 = vmatpush1.msra.mxu0 0.0
    %3099 = vmatprep.subr.mxu0 0.0
    %3100 = vmatpush1.msra.mxu0 0.0
    %3101 = vmatprep.subr.mxu0 0.0
    %3102 = vmatpush1.msra.mxu0 0.0
    %3103 = vmatprep.subr.mxu0 0.0
    %3104 = vmatpush1.msra.mxu0 0.0
    %3105 = vmatprep.subr.mxu0 0.0
    %3106 = vmatpush1.msra.mxu0 0.0
    %3107 = vmatprep.subr.mxu0 0.0
    %3108 = vmatpush1.msra.mxu0 0.0
    %3109 = vmatprep.subr.mxu0 0.0
    %3110 = vmatpush1.msra.mxu0 0.0
    %3111 = vmatprep.subr.mxu0 0.0
    %3112 = vmatpush1.msra.mxu0 0.0
    %3113 = vmatprep.subr.mxu0 0.0
    %3114 = vmatpush1.msra.mxu0 0.0
    %3115 = vmatprep.subr.mxu0 0.0
    %3116 = vmatpush1.msra.mxu0 0.0
    %3117 = vmatprep.subr.mxu0 0.0
    %3118 = vmatpush1.msra.mxu0 0.0
    %3119 = vmatprep.subr.mxu0 0.0
    %3120 = vmatpush1.msra.mxu0 0.0
    %3121 = vmatprep.subr.mxu0 0.0
    %3122 = vmatpush1.msra.mxu0 0.0
    %3123 = vmatprep.subr.mxu0 0.0
    %3124 = vmatpush1.msra.mxu0 0.0
    %3125 = vmatprep.mubr.f32.mxu0 0.0
    %3126 = vmatmul.mubr.f32.gmra.mrb[0].mxu0 %v3059
    %v3127 = vpop.f32.mrb[0].mxu0
    %v3128 = vadd.f32 0.0, %v3127
    %v3129 = vpop.f32.mrb[0].mxu0
    %3130 = vdwg.mxu0
    %v3131 = vadd.f32 %v3058, %v3128
    %v3132 = vxor.u32 %v3131, 2147483648
    %v3133 = vmul.f32 %v3132, 1.442695
    %v3134 = vpow.pop %v3133
    %v3135 = vadd.f32 %v3134, 1.0
    %v3136 = vrcp.pop %v3135
    %v3137 = vmul.f32 1.0, %v3136
    %v3138 = vtanh.pop %v3131
    %v3139 = vmul.f32 %v3137, %v2943
    %3141 = vrot.lane.b32.xlu0 %v3138, 64
    %v3142 = vpop.permute.xlu0 %3141
    %v3144 = vmul.f32 %v3137, %v3142
    %3146 = vrot.lane.b32.xlu0 %v3144, 32
    %v3147 = vpop.permute.xlu0 %3146
    %v3149 = vadd.f32 %v3139, %v3147
    %v3150 = vtanh.pop %v3149
    %3152 = vrot.lane.b32.xlu0 %v3150, 64
    %v3153 = vpop.permute.xlu0 %3152
    %v3155 = vmul.f32 %v3137, %v3153
    %3157 = vrot.lane.b32.xlu0 %v3155, 32
    %v3158 = vpop.permute.xlu0 %3157
    %3160 = vst.msk [vmem:[#allocation5 + $0x4] sm:$0x3] %vm380, %v3158
    %v3161 = vld [vmem:[#allocation2 + $0x1c] sm:$0x3]
    %v3162 = vsel %vm277, %v3055, 0
    %3164 = vmatprep.subr.mxu0 0.0
    %3165 = vmatpush1.msra.mxu0 %v268
    %3166 = vmatprep.subr.mxu0 0.0
    %3167 = vmatpush1.msra.mxu0 %v269
    %3168 = vmatprep.subr.mxu0 0.0
    %3169 = vmatpush1.msra.mxu0 %v270
    %3170 = vmatprep.subr.mxu0 0.0
    %3171 = vmatpush1.msra.mxu0 %v271
    %3172 = vmatprep.subr.mxu0 0.0
    %3173 = vmatpush1.msra.mxu0 0.0
    %3174 = vmatprep.subr.mxu0 0.0
    %3175 = vmatpush1.msra.mxu0 0.0
    %3176 = vmatprep.subr.mxu0 0.0
    %3177 = vmatpush1.msra.mxu0 0.0
    %3178 = vmatprep.subr.mxu0 0.0
    %3179 = vmatpush1.msra.mxu0 0.0
    %3180 = vmatprep.subr.mxu0 0.0
    %3181 = vmatpush1.msra.mxu0 0.0
    %3182 = vmatprep.subr.mxu0 0.0
    %3183 = vmatpush1.msra.mxu0 0.0
    %3184 = vmatprep.subr.mxu0 0.0
    %3185 = vmatpush1.msra.mxu0 0.0
    %3186 = vmatprep.subr.mxu0 0.0
    %3187 = vmatpush1.msra.mxu0 0.0
    %3188 = vmatprep.subr.mxu0 0.0
    %3189 = vmatpush1.msra.mxu0 0.0
    %3190 = vmatprep.subr.mxu0 0.0
    %3191 = vmatpush1.msra.mxu0 0.0
    %3192 = vmatprep.subr.mxu0 0.0
    %3193 = vmatpush1.msra.mxu0 0.0
    %3194 = vmatprep.subr.mxu0 0.0
    %3195 = vmatpush1.msra.mxu0 0.0
    %3196 = vmatprep.subr.mxu0 0.0
    %3197 = vmatpush1.msra.mxu0 0.0
    %3198 = vmatprep.subr.mxu0 0.0
    %3199 = vmatpush1.msra.mxu0 0.0
    %3200 = vmatprep.subr.mxu0 0.0
    %3201 = vmatpush1.msra.mxu0 0.0
    %3202 = vmatprep.subr.mxu0 0.0
    %3203 = vmatpush1.msra.mxu0 0.0
    %3204 = vmatprep.subr.mxu0 0.0
    %3205 = vmatpush1.msra.mxu0 0.0
    %3206 = vmatprep.subr.mxu0 0.0
    %3207 = vmatpush1.msra.mxu0 0.0
    %3208 = vmatprep.subr.mxu0 0.0
    %3209 = vmatpush1.msra.mxu0 0.0
    %3210 = vmatprep.subr.mxu0 0.0
    %3211 = vmatpush1.msra.mxu0 0.0
    %3212 = vmatprep.subr.mxu0 0.0
    %3213 = vmatpush1.msra.mxu0 0.0
    %3214 = vmatprep.subr.mxu0 0.0
    %3215 = vmatpush1.msra.mxu0 0.0
    %3216 = vmatprep.subr.mxu0 0.0
    %3217 = vmatpush1.msra.mxu0 0.0
    %3218 = vmatprep.subr.mxu0 0.0
    %3219 = vmatpush1.msra.mxu0 0.0
    %3220 = vmatprep.subr.mxu0 0.0
    %3221 = vmatpush1.msra.mxu0 0.0
    %3222 = vmatprep.subr.mxu0 0.0
    %3223 = vmatpush1.msra.mxu0 0.0
    %3224 = vmatprep.subr.mxu0 0.0
    %3225 = vmatpush1.msra.mxu0 0.0
    %3226 = vmatprep.subr.mxu0 0.0
    %3227 = vmatpush1.msra.mxu0 0.0
    %3228 = vmatprep.mubr.f32.mxu0 0.0
    %3229 = vmatmul.mubr.f32.gmra.mrb[0].mxu0 %v3162
    %v3230 = vpop.f32.mrb[0].mxu0
    %v3231 = vadd.f32 0.0, %v3230
    %v3232 = vpop.f32.mrb[0].mxu0
    %3233 = vdwg.mxu0
    %v3234 = vadd.f32 %v3161, %v3231
    %v3235 = vxor.u32 %v3234, 2147483648
    %v3236 = vmul.f32 %v3235, 1.442695
    %v3237 = vpow.pop %v3236
    %v3238 = vadd.f32 %v3237, 1.0
    %v3239 = vrcp.pop %v3238
    %v3240 = vmul.f32 1.0, %v3239
    %v3241 = vtanh.pop %v3234
    %v3242 = vmul.f32 %v3240, %v3046
    %3244 = vrot.lane.b32.xlu0 %v3241, 64
    %v3245 = vpop.permute.xlu0 %3244
    %v3247 = vmul.f32 %v3240, %v3245
    %3249 = vrot.lane.b32.xlu0 %v3247, 32
    %v3250 = vpop.permute.xlu0 %3249
    %v3252 = vadd.f32 %v3242, %v3250
    %v3253 = vtanh.pop %v3252
    %3255 = vrot.lane.b32.xlu0 %v3253, 64
    %v3256 = vpop.permute.xlu0 %3255
    %v3258 = vmul.f32 %v3240, %v3256
    %3260 = vrot.lane.b32.xlu0 %v3258, 32
    %v3261 = vpop.permute.xlu0 %3260
    %3263 = vst.msk [vmem:[#allocation4 + $0x1c] sm:$0x3] %vm380, %v3261
    %v3264 = vld [vmem:[#allocation3 + $0x2] sm:$0x3]
    %v3265 = vsel %vm277, %v3158, 0
    %3267 = vmatprep.subr.mxu0 0.0
    %3268 = vmatpush1.msra.mxu0 %v272
    %3269 = vmatprep.subr.mxu0 0.0
    %3270 = vmatpush1.msra.mxu0 %v273
    %3271 = vmatprep.subr.mxu0 0.0
    %3272 = vmatpush1.msra.mxu0 %v274
    %3273 = vmatprep.subr.mxu0 0.0
    %3274 = vmatpush1.msra.mxu0 %v275
    %3275 = vmatprep.subr.mxu0 0.0
    %3276 = vmatpush1.msra.mxu0 0.0
    %3277 = vmatprep.subr.mxu0 0.0
    %3278 = vmatpush1.msra.mxu0 0.0
    %3279 = vmatprep.subr.mxu0 0.0
    %3280 = vmatpush1.msra.mxu0 0.0
    %3281 = vmatprep.subr.mxu0 0.0
    %3282 = vmatpush1.msra.mxu0 0.0
    %3283 = vmatprep.subr.mxu0 0.0
    %3284 = vmatpush1.msra.mxu0 0.0
    %3285 = vmatprep.subr.mxu0 0.0
    %3286 = vmatpush1.msra.mxu0 0.0
    %3287 = vmatprep.subr.mxu0 0.0
    %3288 = vmatpush1.msra.mxu0 0.0
    %3289 = vmatprep.subr.mxu0 0.0
    %3290 = vmatpush1.msra.mxu0 0.0
    %3291 = vmatprep.subr.mxu0 0.0
    %3292 = vmatpush1.msra.mxu0 0.0
    %3293 = vmatprep.subr.mxu0 0.0
    %3294 = vmatpush1.msra.mxu0 0.0
    %3295 = vmatprep.subr.mxu0 0.0
    %3296 = vmatpush1.msra.mxu0 0.0
    %3297 = vmatprep.subr.mxu0 0.0
    %3298 = vmatpush1.msra.mxu0 0.0
    %3299 = vmatprep.subr.mxu0 0.0
    %3300 = vmatpush1.msra.mxu0 0.0
    %3301 = vmatprep.subr.mxu0 0.0
    %3302 = vmatpush1.msra.mxu0 0.0
    %3303 = vmatprep.subr.mxu0 0.0
    %3304 = vmatpush1.msra.mxu0 0.0
    %3305 = vmatprep.subr.mxu0 0.0
    %3306 = vmatpush1.msra.mxu0 0.0
    %3307 = vmatprep.subr.mxu0 0.0
    %3308 = vmatpush1.msra.mxu0 0.0
    %3309 = vmatprep.subr.mxu0 0.0
    %3310 = vmatpush1.msra.mxu0 0.0
    %3311 = vmatprep.subr.mxu0 0.0
    %3312 = vmatpush1.msra.mxu0 0.0
    %3313 = vmatprep.subr.mxu0 0.0
    %3314 = vmatpush1.msra.mxu0 0.0
    %3315 = vmatprep.subr.mxu0 0.0
    %3316 = vmatpush1.msra.mxu0 0.0
    %3317 = vmatprep.subr.mxu0 0.0
    %3318 = vmatpush1.msra.mxu0 0.0
    %3319 = vmatprep.subr.mxu0 0.0
    %3320 = vmatpush1.msra.mxu0 0.0
    %3321 = vmatprep.subr.mxu0 0.0
    %3322 = vmatpush1.msra.mxu0 0.0
    %3323 = vmatprep.subr.mxu0 0.0
    %3324 = vmatpush1.msra.mxu0 0.0
    %3325 = vmatprep.subr.mxu0 0.0
    %3326 = vmatpush1.msra.mxu0 0.0
    %3327 = vmatprep.subr.mxu0 0.0
    %3328 = vmatpush1.msra.mxu0 0.0
    %3329 = vmatprep.subr.mxu0 0.0
    %3330 = vmatpush1.msra.mxu0 0.0
    %3331 = vmatprep.mubr.f32.mxu0 0.0
    %3332 = vmatmul.mubr.f32.gmra.mrb[0].mxu0 %v3265
    %v3333 = vpop.f32.mrb[0].mxu0
    %v3334 = vadd.f32 0.0, %v3333
    %v3335 = vpop.f32.mrb[0].mxu0
    %3336 = vdwg.mxu0
    %v3337 = vadd.f32 %v3264, %v3334
    %v3338 = vxor.u32 %v3337, 2147483648
    %v3339 = vmul.f32 %v3338, 1.442695
    %v3340 = vpow.pop %v3339
    %v3341 = vadd.f32 %v3340, 1.0
    %v3342 = vrcp.pop %v3341
    %v3343 = vmul.f32 1.0, %v3342
    %v3344 = vtanh.pop %v3337
    %v3345 = vmul.f32 %v3343, %v3149
    %3347 = vrot.lane.b32.xlu0 %v3344, 64
    %v3348 = vpop.permute.xlu0 %3347
    %v3350 = vmul.f32 %v3343, %v3348
    %3352 = vrot.lane.b32.xlu0 %v3350, 32
    %v3353 = vpop.permute.xlu0 %3352
    %v3355 = vadd.f32 %v3345, %v3353
    %v3356 = vtanh.pop %v3355
    %3358 = vrot.lane.b32.xlu0 %v3356, 64
    %v3359 = vpop.permute.xlu0 %3358
    %v3361 = vmul.f32 %v3343, %v3359
    %3363 = vrot.lane.b32.xlu0 %v3361, 32
    %v3364 = vpop.permute.xlu0 %3363
    %3366 = vst.msk [vmem:[#allocation5 + $0x2] sm:$0x3] %vm380, %v3364
    %v3367 = vld [vmem:[#allocation2 + $0x1e] sm:$0x3]
    %v3368 = vsel %vm277, %v3261, 0
    %3370 = vmatprep.subr.mxu0 0.0
    %3371 = vmatpush1.msra.mxu0 %v268
    %3372 = vmatprep.subr.mxu0 0.0
    %3373 = vmatpush1.msra.mxu0 %v269
    %3374 = vmatprep.subr.mxu0 0.0
    %3375 = vmatpush1.msra.mxu0 %v270
    %3376 = vmatprep.subr.mxu0 0.0
    %3377 = vmatpush1.msra.mxu0 %v271
    %3378 = vmatprep.subr.mxu0 0.0
    %3379 = vmatpush1.msra.mxu0 0.0
    %3380 = vmatprep.subr.mxu0 0.0
    %3381 = vmatpush1.msra.mxu0 0.0
    %3382 = vmatprep.subr.mxu0 0.0
    %3383 = vmatpush1.msra.mxu0 0.0
    %3384 = vmatprep.subr.mxu0 0.0
    %3385 = vmatpush1.msra.mxu0 0.0
    %3386 = vmatprep.subr.mxu0 0.0
    %3387 = vmatpush1.msra.mxu0 0.0
    %3388 = vmatprep.subr.mxu0 0.0
    %3389 = vmatpush1.msra.mxu0 0.0
    %3390 = vmatprep.subr.mxu0 0.0
    %3391 = vmatpush1.msra.mxu0 0.0
    %3392 = vmatprep.subr.mxu0 0.0
    %3393 = vmatpush1.msra.mxu0 0.0
    %3394 = vmatprep.subr.mxu0 0.0
    %3395 = vmatpush1.msra.mxu0 0.0
    %3396 = vmatprep.subr.mxu0 0.0
    %3397 = vmatpush1.msra.mxu0 0.0
    %3398 = vmatprep.subr.mxu0 0.0
    %3399 = vmatpush1.msra.mxu0 0.0
    %3400 = vmatprep.subr.mxu0 0.0
    %3401 = vmatpush1.msra.mxu0 0.0
    %3402 = vmatprep.subr.mxu0 0.0
    %3403 = vmatpush1.msra.mxu0 0.0
    %3404 = vmatprep.subr.mxu0 0.0
    %3405 = vmatpush1.msra.mxu0 0.0
    %3406 = vmatprep.subr.mxu0 0.0
    %3407 = vmatpush1.msra.mxu0 0.0
    %3408 = vmatprep.subr.mxu0 0.0
    %3409 = vmatpush1.msra.mxu0 0.0
    %3410 = vmatprep.subr.mxu0 0.0
    %3411 = vmatpush1.msra.mxu0 0.0
    %3412 = vmatprep.subr.mxu0 0.0
    %3413 = vmatpush1.msra.mxu0 0.0
    %3414 = vmatprep.subr.mxu0 0.0
    %3415 = vmatpush1.msra.mxu0 0.0
    %3416 = vmatprep.subr.mxu0 0.0
    %3417 = vmatpush1.msra.mxu0 0.0
    %3418 = vmatprep.subr.mxu0 0.0
    %3419 = vmatpush1.msra.mxu0 0.0
    %3420 = vmatprep.subr.mxu0 0.0
    %3421 = vmatpush1.msra.mxu0 0.0
    %3422 = vmatprep.subr.mxu0 0.0
    %3423 = vmatpush1.msra.mxu0 0.0
    %3424 = vmatprep.subr.mxu0 0.0
    %3425 = vmatpush1.msra.mxu0 0.0
    %3426 = vmatprep.subr.mxu0 0.0
    %3427 = vmatpush1.msra.mxu0 0.0
    %3428 = vmatprep.subr.mxu0 0.0
    %3429 = vmatpush1.msra.mxu0 0.0
    %3430 = vmatprep.subr.mxu0 0.0
    %3431 = vmatpush1.msra.mxu0 0.0
    %3432 = vmatprep.subr.mxu0 0.0
    %3433 = vmatpush1.msra.mxu0 0.0
    %3434 = vmatprep.mubr.f32.mxu0 0.0
    %3435 = vmatmul.mubr.f32.gmra.mrb[0].mxu0 %v3368
    %v3436 = vpop.f32.mrb[0].mxu0
    %v3437 = vadd.f32 0.0, %v3436
    %v3438 = vpop.f32.mrb[0].mxu0
    %3439 = vdwg.mxu0
    %v3440 = vadd.f32 %v3367, %v3437
    %v3441 = vxor.u32 %v3440, 2147483648
    %v3442 = vmul.f32 %v3441, 1.442695
    %v3443 = vpow.pop %v3442
    %v3444 = vadd.f32 %v3443, 1.0
    %v3445 = vrcp.pop %v3444
    %v3446 = vmul.f32 1.0, %v3445
    %v3447 = vtanh.pop %v3440
    %v3448 = vmul.f32 %v3446, %v3252
    %3450 = vrot.lane.b32.xlu0 %v3447, 64
    %v3451 = vpop.permute.xlu0 %3450
    %v3453 = vmul.f32 %v3446, %v3451
    %3455 = vrot.lane.b32.xlu0 %v3453, 32
    %v3456 = vpop.permute.xlu0 %3455
    %v3458 = vadd.f32 %v3448, %v3456
    %v3459 = vtanh.pop %v3458
    %3461 = vrot.lane.b32.xlu0 %v3459, 64
    %v3462 = vpop.permute.xlu0 %3461
    %v3464 = vmul.f32 %v3446, %v3462
    %3466 = vrot.lane.b32.xlu0 %v3464, 32
    %v3467 = vpop.permute.xlu0 %3466
    %3469 = vst.msk [vmem:[#allocation4 + $0x1e] sm:$0x3] %vm380, %v3467
    %v3470 = vld [vmem:[#allocation3] sm:$0x3]
    %v3471 = vsel %vm277, %v3364, 0
    %3473 = vmatprep.subr.mxu0 0.0
    %3474 = vmatpush1.msra.mxu0 %v272
    %3475 = vmatprep.subr.mxu0 0.0
    %3476 = vmatpush1.msra.mxu0 %v273
    %3477 = vmatprep.subr.mxu0 0.0
    %3478 = vmatpush1.msra.mxu0 %v274
    %3479 = vmatprep.subr.mxu0 0.0
    %3480 = vmatpush1.msra.mxu0 %v275
    %3481 = vmatprep.subr.mxu0 0.0
    %3482 = vmatpush1.msra.mxu0 0.0
    %3483 = vmatprep.subr.mxu0 0.0
    %3484 = vmatpush1.msra.mxu0 0.0
    %3485 = vmatprep.subr.mxu0 0.0
    %3486 = vmatpush1.msra.mxu0 0.0
    %3487 = vmatprep.subr.mxu0 0.0
    %3488 = vmatpush1.msra.mxu0 0.0
    %3489 = vmatprep.subr.mxu0 0.0
    %3490 = vmatpush1.msra.mxu0 0.0
    %3491 = vmatprep.subr.mxu0 0.0
    %3492 = vmatpush1.msra.mxu0 0.0
    %3493 = vmatprep.subr.mxu0 0.0
    %3494 = vmatpush1.msra.mxu0 0.0
    %3495 = vmatprep.subr.mxu0 0.0
    %3496 = vmatpush1.msra.mxu0 0.0
    %3497 = vmatprep.subr.mxu0 0.0
    %3498 = vmatpush1.msra.mxu0 0.0
    %3499 = vmatprep.subr.mxu0 0.0
    %3500 = vmatpush1.msra.mxu0 0.0
    %3501 = vmatprep.subr.mxu0 0.0
    %3502 = vmatpush1.msra.mxu0 0.0
    %3503 = vmatprep.subr.mxu0 0.0
    %3504 = vmatpush1.msra.mxu0 0.0
    %3505 = vmatprep.subr.mxu0 0.0
    %3506 = vmatpush1.msra.mxu0 0.0
    %3507 = vmatprep.subr.mxu0 0.0
    %3508 = vmatpush1.msra.mxu0 0.0
    %3509 = vmatprep.subr.mxu0 0.0
    %3510 = vmatpush1.msra.mxu0 0.0
    %3511 = vmatprep.subr.mxu0 0.0
    %3512 = vmatpush1.msra.mxu0 0.0
    %3513 = vmatprep.subr.mxu0 0.0
    %3514 = vmatpush1.msra.mxu0 0.0
    %3515 = vmatprep.subr.mxu0 0.0
    %3516 = vmatpush1.msra.mxu0 0.0
    %3517 = vmatprep.subr.mxu0 0.0
    %3518 = vmatpush1.msra.mxu0 0.0
    %3519 = vmatprep.subr.mxu0 0.0
    %3520 = vmatpush1.msra.mxu0 0.0
    %3521 = vmatprep.subr.mxu0 0.0
    %3522 = vmatpush1.msra.mxu0 0.0
    %3523 = vmatprep.subr.mxu0 0.0
    %3524 = vmatpush1.msra.mxu0 0.0
    %3525 = vmatprep.subr.mxu0 0.0
    %3526 = vmatpush1.msra.mxu0 0.0
    %3527 = vmatprep.subr.mxu0 0.0
    %3528 = vmatpush1.msra.mxu0 0.0
    %3529 = vmatprep.subr.mxu0 0.0
    %3530 = vmatpush1.msra.mxu0 0.0
    %3531 = vmatprep.subr.mxu0 0.0
    %3532 = vmatpush1.msra.mxu0 0.0
    %3533 = vmatprep.subr.mxu0 0.0
    %3534 = vmatpush1.msra.mxu0 0.0
    %3535 = vmatprep.subr.mxu0 0.0
    %3536 = vmatpush1.msra.mxu0 0.0
    %3537 = vmatprep.mubr.f32.mxu0 0.0
    %3538 = vmatmul.mubr.f32.gmra.mrb[0].mxu0 %v3471
    %v3539 = vpop.f32.mrb[0].mxu0
    %v3540 = vadd.f32 0.0, %v3539
    %v3541 = vpop.f32.mrb[0].mxu0
    %3542 = vdwg.mxu0
    %v3543 = vadd.f32 %v3470, %v3540
    %v3544 = vxor.u32 %v3543, 2147483648
    %v3545 = vmul.f32 %v3544, 1.442695
    %v3546 = vpow.pop %v3545
    %v3547 = vadd.f32 %v3546, 1.0
    %v3548 = vrcp.pop %v3547
    %v3549 = vmul.f32 1.0, %v3548
    %v3550 = vtanh.pop %v3543
    %v3551 = vmul.f32 %v3549, %v3355
    %3553 = vrot.lane.b32.xlu0 %v3550, 64
    %v3554 = vpop.permute.xlu0 %3553
    %v3556 = vmul.f32 %v3549, %v3554
    %3558 = vrot.lane.b32.xlu0 %v3556, 32
    %v3559 = vpop.permute.xlu0 %3558
    %v3561 = vadd.f32 %v3551, %v3559
    %v3562 = vtanh.pop %v3561
    %3564 = vrot.lane.b32.xlu0 %v3562, 64
    %v3565 = vpop.permute.xlu0 %3564
    %v3567 = vmul.f32 %v3549, %v3565
    %3569 = vrot.lane.b32.xlu0 %v3567, 32
    %v3570 = vpop.permute.xlu0 %3569
    %3572 = vst.msk [vmem:[#allocation5] sm:$0x3] %vm380, %v3570
    %v3573 = vld [vmem:[#allocation4] sm:$0xff]
    %v3574 = vld [vmem:[#allocation4 + $0x8] sm:$0xff]
    %v3575 = vld [vmem:[#allocation4 + $0x10] sm:$0xff]
    %v3576 = vld [vmem:[#allocation4 + $0x18] sm:$0xff]
    %v3577 = vld [vmem:[#allocation5] sm:$0xff]
    %v3578 = vld [vmem:[#allocation5 + $0x8] sm:$0xff]
    %v3579 = vld [vmem:[#allocation5 + $0x10] sm:$0xff]
    %v3580 = vld [vmem:[#allocation5 + $0x18] sm:$0xff]
    %3585 = vrot.lane.b32.xlu0 %v3577, 32
    %v3586 = vpop.permute.xlu0 %3585
    %3587 = vrot.lane.b32.xlu0 %v3578, 32
    %v3588 = vpop.permute.xlu0 %3587
    %3589 = vrot.lane.b32.xlu0 %v3579, 32
    %v3590 = vpop.permute.xlu0 %3589
    %3591 = vrot.lane.b32.xlu0 %v3580, 32
    %v3592 = vpop.permute.xlu0 %3591
    %v3597 = vsel %vm277, %v3573, %v3586
    %v3598 = vsel %vm277, %v3574, %v3588
    %v3599 = vsel %vm277, %v3575, %v3590
    %v3600 = vsel %vm277, %v3576, %v3592
    %vm3601 = vcmask 523264
    %3602 = vst.msk [vmem:[#allocation11] sm:$0xff] %vm3601, %v3597
    %3603 = vst.msk [vmem:[#allocation11 + $0x8] sm:$0xff] %vm3601, %v3598
    %3604 = vst.msk [vmem:[#allocation11 + $0x10] sm:$0xff] %vm3601, %v3599
    %3605 = vst.msk [vmem:[#allocation11 + $0x18] sm:$0xff] %vm3601, %v3600
    // Predicated region
    $region38: #{tpu_custom_call.1} parent=1 // pred_check
      _
    $region39: #{tpu_custom_call.1} parent=1 // pred_check_branch
      %3607 = sbr.rel (0) target = $region41
    $region40: #{tpu_custom_call.1} parent=1 // pred_region
      %s3609 = ssub.s32 512, 512
      %3610 = vsyncadd [#allocation8], %s3609
      %s3611 = sshll.u32 [#allocation11], 4
      %s3612 = int_to_ptr.vmem [resolvable:$true] %s3611
      %3617 = dma.vmem_to_hbm [thread:$0]  %s3612, 512, %s7, [#allocation8], 128, 128, 8
    $region41: #{tpu_custom_call.1} parent=1 // pred_fallthru
      _
    // Predicated region
    $region42: #{tpu_custom_call.1} parent=1 // pred_check
      _
    $region43: #{tpu_custom_call.1} parent=1 // pred_check_branch
      %3619 = sbr.rel (0) target = $region45
    $region44: #{tpu_custom_call.1} parent=1 // pred_region
      %3620 = dma.done [#allocation8], 512
    $region45: #{tpu_custom_call.1} parent=1 // pred_fallthru
      _
    %3621 = vsyncpa [#allocation7], 1
    %3622 = vsyncpa [#allocation10], 1
    %3623 = vsyncpa [#allocation8], 1

</llo_original>
